<compile_context>
chip_gen: v6e
topology: v6e:2x2x1
jax: 0.10.0
libtpu: 0.0.40
codegen_flags: <defaults>
</compile_context>

<pallas_src>
import functools

import jax
import jax.numpy as jnp
from jax.experimental import pallas as pl
from jax.experimental.pallas import tpu as pltpu

O_PAD = 128  # lane-dense padded width of the FC-head output


# ----------------------------------------------------------------------------
# Fused kernel: GRU layer 0 -> GRU layer 1 -> Linear -> Sigmoid
# ----------------------------------------------------------------------------
def _fused_gru_head_kernel(x_ref,
                           wih0_ref, whh0_ref, bgi0_ref, bhn0_ref,
                           wih1_ref, whh1_ref, bgi1_ref, bhn1_ref,
                           wfc_ref, bfc_ref,
                           out_ref,
                           h0_seq_ref,
                           *, T, B, H):
    G = 3 * H
    D = x_ref.shape[2]

    def gru_cell(gi_t, h_prev, whh, bhn):
        # gi_t already contains b_ih (+ folded r/z parts of b_hh); gh carries no bias.
        gh = jnp.dot(h_prev, whh, preferred_element_type=jnp.float32)
        r = jax.nn.sigmoid(gi_t[:, 0:H] + gh[:, 0:H])
        z = jax.nn.sigmoid(gi_t[:, H:2 * H] + gh[:, H:2 * H])
        n = jnp.tanh(gi_t[:, 2 * H:G] + r * (gh[:, 2 * H:G] + bhn))
        return n + z * (h_prev - n)          # == (1 - z) * n + z * h_prev

    # ---------------- layer 0 ----------------
    # Hoisted input projection: one (B*T, D) x (D, 3H) matmul for all timesteps.
    x = x_ref[...]                                             # (B, T, D) batch_first
    gi0 = jnp.dot(x.reshape(B * T, D), wih0_ref[...],
                  preferred_element_type=jnp.float32) + bgi0_ref[...]
    gi0 = gi0.reshape(B, T, G)                                 # batch-major (same order as x)

    whh0 = whh0_ref[...]
    bhn0 = bhn0_ref[...]
    h = jnp.zeros((B, H), jnp.float32)                         # PyTorch default h0 = 0
    for t in range(T):                                         # static unroll (T is small)
        h = gru_cell(gi0[:, t, :], h, whh0, bhn0)
        h0_seq_ref[pl.ds(t * B, B), :] = h                     # store time-major (T*B, H)

    # ---------------- layer 1 ----------------
    # Hoisted input projection over the (VMEM-resident) layer-0 outputs.
    gi1 = jnp.dot(h0_seq_ref[...], wih1_ref[...],
                  preferred_element_type=jnp.float32) + bgi1_ref[...]   # (T*B, 3H)

    whh1 = whh1_ref[...]
    bhn1 = bhn1_ref[...]
    h = jnp.zeros((B, H), jnp.float32)
    for t in range(T):
        h = gru_cell(gi1[t * B:(t + 1) * B, :], h, whh1, bhn1)

    # ---------------- FC + sigmoid head (lane-dense padded output) ----------------
    y = jnp.dot(h, wfc_ref[...], preferred_element_type=jnp.float32) + bfc_ref[...]
    out_ref[...] = jax.nn.sigmoid(y)


# ----------------------------------------------------------------------------
# Wrapper
# ----------------------------------------------------------------------------
def depression_classifier_forward(x_btd, prep):
    """x_btd: (B, T, input_size) batch_first (PyTorch convention)."""
    B, T, D = x_btd.shape
    assert len(prep["layers"]) == 2, "kernel is specialized for num_layers == 2"
    l0, l1 = prep["layers"]
    H = l0["w_hh_t"].shape[0]
    G = 3 * H

    kernel = functools.partial(_fused_gru_head_kernel, T=T, B=B, H=H)

    out_pad = pl.pallas_call(
        kernel,
        out_shape=jax.ShapeDtypeStruct((B, O_PAD), jnp.float32),
        in_specs=[
            pl.BlockSpec((B, T, D), lambda: (0, 0, 0)),        # x, read batch_first directly
            pl.BlockSpec((D, G), lambda: (0, 0)),              # W_ih0^T  (VMEM-resident)
            pl.BlockSpec((H, G), lambda: (0, 0)),              # W_hh0^T
            pl.BlockSpec((1, G), lambda: (0, 0)),              # folded bias, layer 0
            pl.BlockSpec((1, H), lambda: (0, 0)),              # b_hn, layer 0
            pl.BlockSpec((H, G), lambda: (0, 0)),              # W_ih1^T
            pl.BlockSpec((H, G), lambda: (0, 0)),              # W_hh1^T
            pl.BlockSpec((1, G), lambda: (0, 0)),              # folded bias, layer 1
            pl.BlockSpec((1, H), lambda: (0, 0)),              # b_hn, layer 1
            pl.BlockSpec((H, O_PAD), lambda: (0, 0)),          # W_fc^T, lane-padded
            pl.BlockSpec((1, O_PAD), lambda: (0, 0)),          # b_fc, lane-padded
        ],
        out_specs=pl.BlockSpec((B, O_PAD), lambda: (0, 0)),
        scratch_shapes=[pltpu.VMEM((T * B, H), jnp.float32)],  # layer-0 outputs, resident
        # Total resident VMEM is < 1 MiB here — far under the 64 MiB v7x (128 MiB
        # v5e/v6e) ceiling; set vmem_limit_bytes via pltpu.CompilerParams if H/T grow.
    )(x_btd,
      l0["w_ih_t"], l0["w_hh_t"], l0["b_gi"], l0["b_hn"],
      l1["w_ih_t"], l1["w_hh_t"], l1["b_gi"], l1["b_hn"],
      prep["w_fc_pad"], prep["b_fc_pad"])

    return out_pad[:, :prep["output_size"]]


# ----------------------------------------------------------------------------
# Parameter construction (PyTorch-shaped) and kernel-layout preparation
# ----------------------------------------------------------------------------
def init_torch_params(key, input_size, hidden_size, num_layers, output_size):
    """Deterministic init with PyTorch nn.GRU / nn.Linear shapes: U(-1/sqrt(H), 1/sqrt(H))."""
    H = hidden_size
    bound = 1.0 / float(H) ** 0.5
    layers = []
    for l in range(num_layers):
        in_sz = input_size if l == 0 else H
        key, k1, k2, k3, k4 = jax.random.split(key, 5)
        layers.append(dict(
            weight_ih=jax.random.uniform(k1, (3 * H, in_sz), jnp.float32, -bound, bound),
            weight_hh=jax.random.uniform(k2, (3 * H, H), jnp.float32, -bound, bound),
            bias_ih=jax.random.uniform(k3, (3 * H,), jnp.float32, -bound, bound),
            bias_hh=jax.random.uniform(k4, (3 * H,), jnp.float32, -bound, bound),
        ))
    key, k5, k6 = jax.random.split(key, 3)
    fc_w = jax.random.uniform(k5, (output_size, H), jnp.float32, -bound, bound)
    fc_b = jax.random.uniform(k6, (output_size,), jnp.float32, -bound, bound)
    return dict(gru_layers=layers, fc_w=fc_w, fc_b=fc_b)


def prepare_params(raw, hidden_size, output_size):
    """PyTorch layout -> kernel layout: transpose weights, fold r/z biases, pad FC head."""
    H = hidden_size
    layers = []
    for lyr in raw["gru_layers"]:
        b_ih, b_hh = lyr["bias_ih"], lyr["bias_hh"]
        # r/z parts of b_hh fold into the hoisted input-projection bias; the n part
        # must stay separate (it sits inside r * (W_hn h + b_hn)).
        b_gi = b_ih + jnp.concatenate([b_hh[:2 * H], jnp.zeros((H,), b_hh.dtype)])
        layers.append(dict(
            w_ih_t=lyr["weight_ih"].T,            # (in, 3H)
            w_hh_t=lyr["weight_hh"].T,            # (H, 3H)
            b_gi=b_gi.reshape(1, 3 * H),
            b_hn=b_hh[2 * H:].reshape(1, H),
        ))
    w_fc_pad = jnp.zeros((H, O_PAD), jnp.float32).at[:, :output_size].set(raw["fc_w"].T)
    b_fc_pad = jnp.zeros((1, O_PAD), jnp.float32).at[:, :output_size].set(
        raw["fc_b"].reshape(1, output_size))
    return dict(layers=layers, w_fc_pad=w_fc_pad, b_fc_pad=b_fc_pad,
                output_size=output_size)


# ----------------------------------------------------------------------------
# Pure-JAX reference (mirrors torch.nn.GRU + Linear + Sigmoid) for a sanity check
# ----------------------------------------------------------------------------
def reference_forward(x_btd, raw):
    x = x_btd
    B = x.shape[0]
    for lyr in raw["gru_layers"]:
        H = lyr["weight_hh"].shape[1]
        wih, whh = lyr["weight_ih"], lyr["weight_hh"]
        bih, bhh = lyr["bias_ih"], lyr["bias_hh"]

        def step(h, x_t, wih=wih, whh=whh, bih=bih, bhh=bhh, H=H):
            gi = x_t @ wih.T + bih
            gh = h @ whh.T + bhh
            r = jax.nn.sigmoid(gi[:, :H] + gh[:, :H])
            z = jax.nn.sigmoid(gi[:, H:2 * H] + gh[:, H:2 * H])
            n = jnp.tanh(gi[:, 2 * H:] + r * gh[:, 2 * H:])
            h = (1.0 - z) * n + z * h
            return h, h

        h0 = jnp.zeros((B, H), jnp.float32)
        _, hs = jax.lax.scan(step, h0, jnp.transpose(x, (1, 0, 2)))
        x = jnp.transpose(hs, (1, 0, 2))
    y = x[:, -1, :] @ raw["fc_w"].T + raw["fc_b"]
    return jax.nn.sigmoid(y)


if __name__ == "__main__":
    batch, seq, input_size = 2, 8, 32
    hidden_size, num_layers, output_size = 128, 2, 1

    key = jax.random.PRNGKey(0)
    key, xk = jax.random.split(key)
    x = jax.random.normal(xk, (batch, seq, input_size), jnp.float32)

    raw = init_torch_params(key, input_size, hidden_size, num_layers, output_size)
    prep = prepare_params(raw, hidden_size, output_size)

    out = depression_classifier_forward(x, prep)
    out = jax.block_until_ready(out)
    assert out.shape == (batch, output_size)

    ref = jax.block_until_ready(reference_forward(x, raw))
    assert jnp.allclose(out, ref, atol=1e-3, rtol=1e-3), (out, ref)

    print("KERNEL_OK")
</pallas_src>

<mosaic_0001>
module attributes {stable_mosaic.version = 11 : i64} {
  func.func @_fused_gru_head_kernel(%arg0: memref<2x8x32xf32, #tpu.memory_space<vmem>>, %arg1: memref<32x384xf32, #tpu.memory_space<vmem>>, %arg2: memref<128x384xf32, #tpu.memory_space<vmem>>, %arg3: memref<1x384xf32, #tpu.memory_space<vmem>>, %arg4: memref<1x128xf32, #tpu.memory_space<vmem>>, %arg5: memref<128x384xf32, #tpu.memory_space<vmem>>, %arg6: memref<128x384xf32, #tpu.memory_space<vmem>>, %arg7: memref<1x384xf32, #tpu.memory_space<vmem>>, %arg8: memref<1x128xf32, #tpu.memory_space<vmem>>, %arg9: memref<128x128xf32, #tpu.memory_space<vmem>>, %arg10: memref<1x128xf32, #tpu.memory_space<vmem>>, %arg11: memref<2x128xf32, #tpu.memory_space<vmem>>, %arg12: memref<16x128xf32, #tpu.memory_space<vmem>>) attributes {dimension_semantics = [], scalar_prefetch = 0 : i64, scratch_operands = 1 : i64, tpu.core_type = #tpu.core_type<tc>} {
    %c0 = arith.constant 0 : index
    %c0_0 = arith.constant 0 : index
    %c0_1 = arith.constant 0 : index
    %0 = vector.load %arg0[%c0, %c0_0, %c0_1] : memref<2x8x32xf32, #tpu.memory_space<vmem>>, vector<2x8x32xf32>
    %1 = vector.shape_cast %0 : vector<2x8x32xf32> to vector<16x32xf32>
    %c0_2 = arith.constant 0 : index
    %c0_3 = arith.constant 0 : index
    %2 = vector.load %arg1[%c0_2, %c0_3] : memref<32x384xf32, #tpu.memory_space<vmem>>, vector<32x384xf32>
    %cst = arith.constant dense<0.000000e+00> : vector<16x384xf32>
    %3 = tpu.matmul %1, %2, %cst {dimension_numbers = #tpu.dot_dimension_numbers<[1], [0], [0], [1], [0, 0, 1, 1], [], []>} : vector<16x32xf32>, vector<32x384xf32>, vector<16x384xf32> -> vector<16x384xf32>
    %c0_4 = arith.constant 0 : index
    %c0_5 = arith.constant 0 : index
    %4 = vector.load %arg3[%c0_4, %c0_5] : memref<1x384xf32, #tpu.memory_space<vmem>>, vector<1x384xf32>
    %5 = vector.broadcast %4 : vector<1x384xf32> to vector<16x384xf32>
    %6 = arith.addf %3, %5 : vector<16x384xf32>
    %7 = vector.shape_cast %6 : vector<16x384xf32> to vector<2x8x384xf32>
    %c0_6 = arith.constant 0 : index
    %c0_7 = arith.constant 0 : index
    %8 = vector.load %arg2[%c0_6, %c0_7] : memref<128x384xf32, #tpu.memory_space<vmem>>, vector<128x384xf32>
    %c0_8 = arith.constant 0 : index
    %c0_9 = arith.constant 0 : index
    %9 = vector.load %arg4[%c0_8, %c0_9] : memref<1x128xf32, #tpu.memory_space<vmem>>, vector<1x128xf32>
    %cst_10 = arith.constant 0.000000e+00 : f32
    %10 = vector.broadcast %cst_10 : f32 to vector<2x128xf32>
    %11 = vector.extract_strided_slice %7 {offsets = [0, 0, 0], sizes = [2, 1, 384], strides = [1, 1, 1]} : vector<2x8x384xf32> to vector<2x1x384xf32>
    %12 = vector.shape_cast %11 : vector<2x1x384xf32> to vector<2x384xf32>
    %cst_11 = arith.constant dense<0.000000e+00> : vector<2x384xf32>
    %13 = tpu.matmul %10, %8, %cst_11 {dimension_numbers = #tpu.dot_dimension_numbers<[1], [0], [0], [1], [0, 0, 1, 1], [], []>} : vector<2x128xf32>, vector<128x384xf32>, vector<2x384xf32> -> vector<2x384xf32>
    %14 = vector.extract_strided_slice %12 {offsets = [0, 0], sizes = [2, 128], strides = [1, 1]} : vector<2x384xf32> to vector<2x128xf32>
    %15 = vector.extract_strided_slice %13 {offsets = [0, 0], sizes = [2, 128], strides = [1, 1]} : vector<2x384xf32> to vector<2x128xf32>
    %16 = arith.addf %14, %15 : vector<2x128xf32>
    %17 = arith.negf %16 : vector<2x128xf32>
    %18 = math.exp %17 : vector<2x128xf32>
    %cst_12 = arith.constant 1.000000e+00 : f32
    %19 = vector.broadcast %cst_12 : f32 to vector<2x128xf32>
    %20 = arith.addf %19, %18 : vector<2x128xf32>
    %21 = arith.divf %19, %20 : vector<2x128xf32>
    %22 = vector.extract_strided_slice %12 {offsets = [0, 128], sizes = [2, 128], strides = [1, 1]} : vector<2x384xf32> to vector<2x128xf32>
    %23 = vector.extract_strided_slice %13 {offsets = [0, 128], sizes = [2, 128], strides = [1, 1]} : vector<2x384xf32> to vector<2x128xf32>
    %24 = arith.addf %22, %23 : vector<2x128xf32>
    %25 = arith.negf %24 : vector<2x128xf32>
    %26 = math.exp %25 : vector<2x128xf32>
    %cst_13 = arith.constant 1.000000e+00 : f32
    %27 = vector.broadcast %cst_13 : f32 to vector<2x128xf32>
    %28 = arith.addf %27, %26 : vector<2x128xf32>
    %29 = arith.divf %27, %28 : vector<2x128xf32>
    %30 = vector.extract_strided_slice %12 {offsets = [0, 256], sizes = [2, 128], strides = [1, 1]} : vector<2x384xf32> to vector<2x128xf32>
    %31 = vector.extract_strided_slice %13 {offsets = [0, 256], sizes = [2, 128], strides = [1, 1]} : vector<2x384xf32> to vector<2x128xf32>
    %32 = vector.broadcast %9 : vector<1x128xf32> to vector<2x128xf32>
    %33 = arith.addf %31, %32 : vector<2x128xf32>
    %34 = arith.mulf %21, %33 : vector<2x128xf32>
    %35 = arith.addf %30, %34 : vector<2x128xf32>
    %36 = math.tanh %35 : vector<2x128xf32>
    %37 = arith.subf %10, %36 : vector<2x128xf32>
    %38 = arith.mulf %29, %37 : vector<2x128xf32>
    %39 = arith.addf %36, %38 : vector<2x128xf32>
    %c0_14 = arith.constant 0 : index
    %c0_15 = arith.constant 0 : index
    %40 = vector.load %arg12[%c0_14, %c0_15] : memref<16x128xf32, #tpu.memory_space<vmem>>, vector<2x128xf32>
    tpu.vector_store %arg12[%c0_14, %c0_15], %39 {strides = array<i32>} : memref<16x128xf32, #tpu.memory_space<vmem>>, vector<2x128xf32>,
    %41 = vector.extract_strided_slice %7 {offsets = [0, 1, 0], sizes = [2, 1, 384], strides = [1, 1, 1]} : vector<2x8x384xf32> to vector<2x1x384xf32>
    %42 = vector.shape_cast %41 : vector<2x1x384xf32> to vector<2x384xf32>
    %cst_16 = arith.constant dense<0.000000e+00> : vector<2x384xf32>
    %43 = tpu.matmul %39, %8, %cst_16 {dimension_numbers = #tpu.dot_dimension_numbers<[1], [0], [0], [1], [0, 0, 1, 1], [], []>} : vector<2x128xf32>, vector<128x384xf32>, vector<2x384xf32> -> vector<2x384xf32>
    %44 = vector.extract_strided_slice %42 {offsets = [0, 0], sizes = [2, 128], strides = [1, 1]} : vector<2x384xf32> to vector<2x128xf32>
    %45 = vector.extract_strided_slice %43 {offsets = [0, 0], sizes = [2, 128], strides = [1, 1]} : vector<2x384xf32> to vector<2x128xf32>
    %46 = arith.addf %44, %45 : vector<2x128xf32>
    %47 = arith.negf %46 : vector<2x128xf32>
    %48 = math.exp %47 : vector<2x128xf32>
    %cst_17 = arith.constant 1.000000e+00 : f32
    %49 = vector.broadcast %cst_17 : f32 to vector<2x128xf32>
    %50 = arith.addf %49, %48 : vector<2x128xf32>
    %51 = arith.divf %49, %50 : vector<2x128xf32>
    %52 = vector.extract_strided_slice %42 {offsets = [0, 128], sizes = [2, 128], strides = [1, 1]} : vector<2x384xf32> to vector<2x128xf32>
    %53 = vector.extract_strided_slice %43 {offsets = [0, 128], sizes = [2, 128], strides = [1, 1]} : vector<2x384xf32> to vector<2x128xf32>
    %54 = arith.addf %52, %53 : vector<2x128xf32>
    %55 = arith.negf %54 : vector<2x128xf32>
    %56 = math.exp %55 : vector<2x128xf32>
    %cst_18 = arith.constant 1.000000e+00 : f32
    %57 = vector.broadcast %cst_18 : f32 to vector<2x128xf32>
    %58 = arith.addf %57, %56 : vector<2x128xf32>
    %59 = arith.divf %57, %58 : vector<2x128xf32>
    %60 = vector.extract_strided_slice %42 {offsets = [0, 256], sizes = [2, 128], strides = [1, 1]} : vector<2x384xf32> to vector<2x128xf32>
    %61 = vector.extract_strided_slice %43 {offsets = [0, 256], sizes = [2, 128], strides = [1, 1]} : vector<2x384xf32> to vector<2x128xf32>
    %62 = vector.broadcast %9 : vector<1x128xf32> to vector<2x128xf32>
    %63 = arith.addf %61, %62 : vector<2x128xf32>
    %64 = arith.mulf %51, %63 : vector<2x128xf32>
    %65 = arith.addf %60, %64 : vector<2x128xf32>
    %66 = math.tanh %65 : vector<2x128xf32>
    %67 = arith.subf %39, %66 : vector<2x128xf32>
    %68 = arith.mulf %59, %67 : vector<2x128xf32>
    %69 = arith.addf %66, %68 : vector<2x128xf32>
    %c2 = arith.constant 2 : index
    %c0_19 = arith.constant 0 : index
    %70 = vector.load %arg12[%c2, %c0_19] : memref<16x128xf32, #tpu.memory_space<vmem>>, vector<2x128xf32>
    tpu.vector_store %arg12[%c2, %c0_19], %69 {strides = array<i32>} : memref<16x128xf32, #tpu.memory_space<vmem>>, vector<2x128xf32>,
    %71 = vector.extract_strided_slice %7 {offsets = [0, 2, 0], sizes = [2, 1, 384], strides = [1, 1, 1]} : vector<2x8x384xf32> to vector<2x1x384xf32>
    %72 = vector.shape_cast %71 : vector<2x1x384xf32> to vector<2x384xf32>
    %cst_20 = arith.constant dense<0.000000e+00> : vector<2x384xf32>
    %73 = tpu.matmul %69, %8, %cst_20 {dimension_numbers = #tpu.dot_dimension_numbers<[1], [0], [0], [1], [0, 0, 1, 1], [], []>} : vector<2x128xf32>, vector<128x384xf32>, vector<2x384xf32> -> vector<2x384xf32>
    %74 = vector.extract_strided_slice %72 {offsets = [0, 0], sizes = [2, 128], strides = [1, 1]} : vector<2x384xf32> to vector<2x128xf32>
    %75 = vector.extract_strided_slice %73 {offsets = [0, 0], sizes = [2, 128], strides = [1, 1]} : vector<2x384xf32> to vector<2x128xf32>
    %76 = arith.addf %74, %75 : vector<2x128xf32>
    %77 = arith.negf %76 : vector<2x128xf32>
    %78 = math.exp %77 : vector<2x128xf32>
    %cst_21 = arith.constant 1.000000e+00 : f32
    %79 = vector.broadcast %cst_21 : f32 to vector<2x128xf32>
    %80 = arith.addf %79, %78 : vector<2x128xf32>
    %81 = arith.divf %79, %80 : vector<2x128xf32>
    %82 = vector.extract_strided_slice %72 {offsets = [0, 128], sizes = [2, 128], strides = [1, 1]} : vector<2x384xf32> to vector<2x128xf32>
    %83 = vector.extract_strided_slice %73 {offsets = [0, 128], sizes = [2, 128], strides = [1, 1]} : vector<2x384xf32> to vector<2x128xf32>
    %84 = arith.addf %82, %83 : vector<2x128xf32>
    %85 = arith.negf %84 : vector<2x128xf32>
    %86 = math.exp %85 : vector<2x128xf32>
    %cst_22 = arith.constant 1.000000e+00 : f32
    %87 = vector.broadcast %cst_22 : f32 to vector<2x128xf32>
    %88 = arith.addf %87, %86 : vector<2x128xf32>
    %89 = arith.divf %87, %88 : vector<2x128xf32>
    %90 = vector.extract_strided_slice %72 {offsets = [0, 256], sizes = [2, 128], strides = [1, 1]} : vector<2x384xf32> to vector<2x128xf32>
    %91 = vector.extract_strided_slice %73 {offsets = [0, 256], sizes = [2, 128], strides = [1, 1]} : vector<2x384xf32> to vector<2x128xf32>
    %92 = vector.broadcast %9 : vector<1x128xf32> to vector<2x128xf32>
    %93 = arith.addf %91, %92 : vector<2x128xf32>
    %94 = arith.mulf %81, %93 : vector<2x128xf32>
    %95 = arith.addf %90, %94 : vector<2x128xf32>
    %96 = math.tanh %95 : vector<2x128xf32>
    %97 = arith.subf %69, %96 : vector<2x128xf32>
    %98 = arith.mulf %89, %97 : vector<2x128xf32>
    %99 = arith.addf %96, %98 : vector<2x128xf32>
    %c4 = arith.constant 4 : index
    %c0_23 = arith.constant 0 : index
    %100 = vector.load %arg12[%c4, %c0_23] : memref<16x128xf32, #tpu.memory_space<vmem>>, vector<2x128xf32>
    tpu.vector_store %arg12[%c4, %c0_23], %99 {strides = array<i32>} : memref<16x128xf32, #tpu.memory_space<vmem>>, vector<2x128xf32>,
    %101 = vector.extract_strided_slice %7 {offsets = [0, 3, 0], sizes = [2, 1, 384], strides = [1, 1, 1]} : vector<2x8x384xf32> to vector<2x1x384xf32>
    %102 = vector.shape_cast %101 : vector<2x1x384xf32> to vector<2x384xf32>
    %cst_24 = arith.constant dense<0.000000e+00> : vector<2x384xf32>
    %103 = tpu.matmul %99, %8, %cst_24 {dimension_numbers = #tpu.dot_dimension_numbers<[1], [0], [0], [1], [0, 0, 1, 1], [], []>} : vector<2x128xf32>, vector<128x384xf32>, vector<2x384xf32> -> vector<2x384xf32>
    %104 = vector.extract_strided_slice %102 {offsets = [0, 0], sizes = [2, 128], strides = [1, 1]} : vector<2x384xf32> to vector<2x128xf32>
    %105 = vector.extract_strided_slice %103 {offsets = [0, 0], sizes = [2, 128], strides = [1, 1]} : vector<2x384xf32> to vector<2x128xf32>
    %106 = arith.addf %104, %105 : vector<2x128xf32>
    %107 = arith.negf %106 : vector<2x128xf32>
    %108 = math.exp %107 : vector<2x128xf32>
    %cst_25 = arith.constant 1.000000e+00 : f32
    %109 = vector.broadcast %cst_25 : f32 to vector<2x128xf32>
    %110 = arith.addf %109, %108 : vector<2x128xf32>
    %111 = arith.divf %109, %110 : vector<2x128xf32>
    %112 = vector.extract_strided_slice %102 {offsets = [0, 128], sizes = [2, 128], strides = [1, 1]} : vector<2x384xf32> to vector<2x128xf32>
    %113 = vector.extract_strided_slice %103 {offsets = [0, 128], sizes = [2, 128], strides = [1, 1]} : vector<2x384xf32> to vector<2x128xf32>
    %114 = arith.addf %112, %113 : vector<2x128xf32>
    %115 = arith.negf %114 : vector<2x128xf32>
    %116 = math.exp %115 : vector<2x128xf32>
    %cst_26 = arith.constant 1.000000e+00 : f32
    %117 = vector.broadcast %cst_26 : f32 to vector<2x128xf32>
    %118 = arith.addf %117, %116 : vector<2x128xf32>
    %119 = arith.divf %117, %118 : vector<2x128xf32>
    %120 = vector.extract_strided_slice %102 {offsets = [0, 256], sizes = [2, 128], strides = [1, 1]} : vector<2x384xf32> to vector<2x128xf32>
    %121 = vector.extract_strided_slice %103 {offsets = [0, 256], sizes = [2, 128], strides = [1, 1]} : vector<2x384xf32> to vector<2x128xf32>
    %122 = vector.broadcast %9 : vector<1x128xf32> to vector<2x128xf32>
    %123 = arith.addf %121, %122 : vector<2x128xf32>
    %124 = arith.mulf %111, %123 : vector<2x128xf32>
    %125 = arith.addf %120, %124 : vector<2x128xf32>
    %126 = math.tanh %125 : vector<2x128xf32>
    %127 = arith.subf %99, %126 : vector<2x128xf32>
    %128 = arith.mulf %119, %127 : vector<2x128xf32>
    %129 = arith.addf %126, %128 : vector<2x128xf32>
    %c6 = arith.constant 6 : index
    %c0_27 = arith.constant 0 : index
    %130 = vector.load %arg12[%c6, %c0_27] : memref<16x128xf32, #tpu.memory_space<vmem>>, vector<2x128xf32>
    tpu.vector_store %arg12[%c6, %c0_27], %129 {strides = array<i32>} : memref<16x128xf32, #tpu.memory_space<vmem>>, vector<2x128xf32>,
    %131 = vector.extract_strided_slice %7 {offsets = [0, 4, 0], sizes = [2, 1, 384], strides = [1, 1, 1]} : vector<2x8x384xf32> to vector<2x1x384xf32>
    %132 = vector.shape_cast %131 : vector<2x1x384xf32> to vector<2x384xf32>
    %cst_28 = arith.constant dense<0.000000e+00> : vector<2x384xf32>
    %133 = tpu.matmul %129, %8, %cst_28 {dimension_numbers = #tpu.dot_dimension_numbers<[1], [0], [0], [1], [0, 0, 1, 1], [], []>} : vector<2x128xf32>, vector<128x384xf32>, vector<2x384xf32> -> vector<2x384xf32>
    %134 = vector.extract_strided_slice %132 {offsets = [0, 0], sizes = [2, 128], strides = [1, 1]} : vector<2x384xf32> to vector<2x128xf32>
    %135 = vector.extract_strided_slice %133 {offsets = [0, 0], sizes = [2, 128], strides = [1, 1]} : vector<2x384xf32> to vector<2x128xf32>
    %136 = arith.addf %134, %135 : vector<2x128xf32>
    %137 = arith.negf %136 : vector<2x128xf32>
    %138 = math.exp %137 : vector<2x128xf32>
    %cst_29 = arith.constant 1.000000e+00 : f32
    %139 = vector.broadcast %cst_29 : f32 to vector<2x128xf32>
    %140 = arith.addf %139, %138 : vector<2x128xf32>
    %141 = arith.divf %139, %140 : vector<2x128xf32>
    %142 = vector.extract_strided_slice %132 {offsets = [0, 128], sizes = [2, 128], strides = [1, 1]} : vector<2x384xf32> to vector<2x128xf32>
    %143 = vector.extract_strided_slice %133 {offsets = [0, 128], sizes = [2, 128], strides = [1, 1]} : vector<2x384xf32> to vector<2x128xf32>
    %144 = arith.addf %142, %143 : vector<2x128xf32>
    %145 = arith.negf %144 : vector<2x128xf32>
    %146 = math.exp %145 : vector<2x128xf32>
    %cst_30 = arith.constant 1.000000e+00 : f32
    %147 = vector.broadcast %cst_30 : f32 to vector<2x128xf32>
    %148 = arith.addf %147, %146 : vector<2x128xf32>
    %149 = arith.divf %147, %148 : vector<2x128xf32>
    %150 = vector.extract_strided_slice %132 {offsets = [0, 256], sizes = [2, 128], strides = [1, 1]} : vector<2x384xf32> to vector<2x128xf32>
    %151 = vector.extract_strided_slice %133 {offsets = [0, 256], sizes = [2, 128], strides = [1, 1]} : vector<2x384xf32> to vector<2x128xf32>
    %152 = vector.broadcast %9 : vector<1x128xf32> to vector<2x128xf32>
    %153 = arith.addf %151, %152 : vector<2x128xf32>
    %154 = arith.mulf %141, %153 : vector<2x128xf32>
    %155 = arith.addf %150, %154 : vector<2x128xf32>
    %156 = math.tanh %155 : vector<2x128xf32>
    %157 = arith.subf %129, %156 : vector<2x128xf32>
    %158 = arith.mulf %149, %157 : vector<2x128xf32>
    %159 = arith.addf %156, %158 : vector<2x128xf32>
    %c8 = arith.constant 8 : index
    %c0_31 = arith.constant 0 : index
    %160 = vector.load %arg12[%c8, %c0_31] : memref<16x128xf32, #tpu.memory_space<vmem>>, vector<2x128xf32>
    tpu.vector_store %arg12[%c8, %c0_31], %159 {strides = array<i32>} : memref<16x128xf32, #tpu.memory_space<vmem>>, vector<2x128xf32>,
    %161 = vector.extract_strided_slice %7 {offsets = [0, 5, 0], sizes = [2, 1, 384], strides = [1, 1, 1]} : vector<2x8x384xf32> to vector<2x1x384xf32>
    %162 = vector.shape_cast %161 : vector<2x1x384xf32> to vector<2x384xf32>
    %cst_32 = arith.constant dense<0.000000e+00> : vector<2x384xf32>
    %163 = tpu.matmul %159, %8, %cst_32 {dimension_numbers = #tpu.dot_dimension_numbers<[1], [0], [0], [1], [0, 0, 1, 1], [], []>} : vector<2x128xf32>, vector<128x384xf32>, vector<2x384xf32> -> vector<2x384xf32>
    %164 = vector.extract_strided_slice %162 {offsets = [0, 0], sizes = [2, 128], strides = [1, 1]} : vector<2x384xf32> to vector<2x128xf32>
    %165 = vector.extract_strided_slice %163 {offsets = [0, 0], sizes = [2, 128], strides = [1, 1]} : vector<2x384xf32> to vector<2x128xf32>
    %166 = arith.addf %164, %165 : vector<2x128xf32>
    %167 = arith.negf %166 : vector<2x128xf32>
    %168 = math.exp %167 : vector<2x128xf32>
    %cst_33 = arith.constant 1.000000e+00 : f32
    %169 = vector.broadcast %cst_33 : f32 to vector<2x128xf32>
    %170 = arith.addf %169, %168 : vector<2x128xf32>
    %171 = arith.divf %169, %170 : vector<2x128xf32>
    %172 = vector.extract_strided_slice %162 {offsets = [0, 128], sizes = [2, 128], strides = [1, 1]} : vector<2x384xf32> to vector<2x128xf32>
    %173 = vector.extract_strided_slice %163 {offsets = [0, 128], sizes = [2, 128], strides = [1, 1]} : vector<2x384xf32> to vector<2x128xf32>
    %174 = arith.addf %172, %173 : vector<2x128xf32>
    %175 = arith.negf %174 : vector<2x128xf32>
    %176 = math.exp %175 : vector<2x128xf32>
    %cst_34 = arith.constant 1.000000e+00 : f32
    %177 = vector.broadcast %cst_34 : f32 to vector<2x128xf32>
    %178 = arith.addf %177, %176 : vector<2x128xf32>
    %179 = arith.divf %177, %178 : vector<2x128xf32>
    %180 = vector.extract_strided_slice %162 {offsets = [0, 256], sizes = [2, 128], strides = [1, 1]} : vector<2x384xf32> to vector<2x128xf32>
    %181 = vector.extract_strided_slice %163 {offsets = [0, 256], sizes = [2, 128], strides = [1, 1]} : vector<2x384xf32> to vector<2x128xf32>
    %182 = vector.broadcast %9 : vector<1x128xf32> to vector<2x128xf32>
    %183 = arith.addf %181, %182 : vector<2x128xf32>
    %184 = arith.mulf %171, %183 : vector<2x128xf32>
    %185 = arith.addf %180, %184 : vector<2x128xf32>
    %186 = math.tanh %185 : vector<2x128xf32>
    %187 = arith.subf %159, %186 : vector<2x128xf32>
    %188 = arith.mulf %179, %187 : vector<2x128xf32>
    %189 = arith.addf %186, %188 : vector<2x128xf32>
    %c10 = arith.constant 10 : index
    %c0_35 = arith.constant 0 : index
    %190 = vector.load %arg12[%c10, %c0_35] : memref<16x128xf32, #tpu.memory_space<vmem>>, vector<2x128xf32>
    tpu.vector_store %arg12[%c10, %c0_35], %189 {strides = array<i32>} : memref<16x128xf32, #tpu.memory_space<vmem>>, vector<2x128xf32>,
    %191 = vector.extract_strided_slice %7 {offsets = [0, 6, 0], sizes = [2, 1, 384], strides = [1, 1, 1]} : vector<2x8x384xf32> to vector<2x1x384xf32>
    %192 = vector.shape_cast %191 : vector<2x1x384xf32> to vector<2x384xf32>
    %cst_36 = arith.constant dense<0.000000e+00> : vector<2x384xf32>
    %193 = tpu.matmul %189, %8, %cst_36 {dimension_numbers = #tpu.dot_dimension_numbers<[1], [0], [0], [1], [0, 0, 1, 1], [], []>} : vector<2x128xf32>, vector<128x384xf32>, vector<2x384xf32> -> vector<2x384xf32>
    %194 = vector.extract_strided_slice %192 {offsets = [0, 0], sizes = [2, 128], strides = [1, 1]} : vector<2x384xf32> to vector<2x128xf32>
    %195 = vector.extract_strided_slice %193 {offsets = [0, 0], sizes = [2, 128], strides = [1, 1]} : vector<2x384xf32> to vector<2x128xf32>
    %196 = arith.addf %194, %195 : vector<2x128xf32>
    %197 = arith.negf %196 : vector<2x128xf32>
    %198 = math.exp %197 : vector<2x128xf32>
    %cst_37 = arith.constant 1.000000e+00 : f32
    %199 = vector.broadcast %cst_37 : f32 to vector<2x128xf32>
    %200 = arith.addf %199, %198 : vector<2x128xf32>
    %201 = arith.divf %199, %200 : vector<2x128xf32>
    %202 = vector.extract_strided_slice %192 {offsets = [0, 128], sizes = [2, 128], strides = [1, 1]} : vector<2x384xf32> to vector<2x128xf32>
    %203 = vector.extract_strided_slice %193 {offsets = [0, 128], sizes = [2, 128], strides = [1, 1]} : vector<2x384xf32> to vector<2x128xf32>
    %204 = arith.addf %202, %203 : vector<2x128xf32>
    %205 = arith.negf %204 : vector<2x128xf32>
    %206 = math.exp %205 : vector<2x128xf32>
    %cst_38 = arith.constant 1.000000e+00 : f32
    %207 = vector.broadcast %cst_38 : f32 to vector<2x128xf32>
    %208 = arith.addf %207, %206 : vector<2x128xf32>
    %209 = arith.divf %207, %208 : vector<2x128xf32>
    %210 = vector.extract_strided_slice %192 {offsets = [0, 256], sizes = [2, 128], strides = [1, 1]} : vector<2x384xf32> to vector<2x128xf32>
    %211 = vector.extract_strided_slice %193 {offsets = [0, 256], sizes = [2, 128], strides = [1, 1]} : vector<2x384xf32> to vector<2x128xf32>
    %212 = vector.broadcast %9 : vector<1x128xf32> to vector<2x128xf32>
    %213 = arith.addf %211, %212 : vector<2x128xf32>
    %214 = arith.mulf %201, %213 : vector<2x128xf32>
    %215 = arith.addf %210, %214 : vector<2x128xf32>
    %216 = math.tanh %215 : vector<2x128xf32>
    %217 = arith.subf %189, %216 : vector<2x128xf32>
    %218 = arith.mulf %209, %217 : vector<2x128xf32>
    %219 = arith.addf %216, %218 : vector<2x128xf32>
    %c12 = arith.constant 12 : index
    %c0_39 = arith.constant 0 : index
    %220 = vector.load %arg12[%c12, %c0_39] : memref<16x128xf32, #tpu.memory_space<vmem>>, vector<2x128xf32>
    tpu.vector_store %arg12[%c12, %c0_39], %219 {strides = array<i32>} : memref<16x128xf32, #tpu.memory_space<vmem>>, vector<2x128xf32>,
    %221 = vector.extract_strided_slice %7 {offsets = [0, 7, 0], sizes = [2, 1, 384], strides = [1, 1, 1]} : vector<2x8x384xf32> to vector<2x1x384xf32>
    %222 = vector.shape_cast %221 : vector<2x1x384xf32> to vector<2x384xf32>
    %cst_40 = arith.constant dense<0.000000e+00> : vector<2x384xf32>
    %223 = tpu.matmul %219, %8, %cst_40 {dimension_numbers = #tpu.dot_dimension_numbers<[1], [0], [0], [1], [0, 0, 1, 1], [], []>} : vector<2x128xf32>, vector<128x384xf32>, vector<2x384xf32> -> vector<2x384xf32>
    %224 = vector.extract_strided_slice %222 {offsets = [0, 0], sizes = [2, 128], strides = [1, 1]} : vector<2x384xf32> to vector<2x128xf32>
    %225 = vector.extract_strided_slice %223 {offsets = [0, 0], sizes = [2, 128], strides = [1, 1]} : vector<2x384xf32> to vector<2x128xf32>
    %226 = arith.addf %224, %225 : vector<2x128xf32>
    %227 = arith.negf %226 : vector<2x128xf32>
    %228 = math.exp %227 : vector<2x128xf32>
    %cst_41 = arith.constant 1.000000e+00 : f32
    %229 = vector.broadcast %cst_41 : f32 to vector<2x128xf32>
    %230 = arith.addf %229, %228 : vector<2x128xf32>
    %231 = arith.divf %229, %230 : vector<2x128xf32>
    %232 = vector.extract_strided_slice %222 {offsets = [0, 128], sizes = [2, 128], strides = [1, 1]} : vector<2x384xf32> to vector<2x128xf32>
    %233 = vector.extract_strided_slice %223 {offsets = [0, 128], sizes = [2, 128], strides = [1, 1]} : vector<2x384xf32> to vector<2x128xf32>
    %234 = arith.addf %232, %233 : vector<2x128xf32>
    %235 = arith.negf %234 : vector<2x128xf32>
    %236 = math.exp %235 : vector<2x128xf32>
    %cst_42 = arith.constant 1.000000e+00 : f32
    %237 = vector.broadcast %cst_42 : f32 to vector<2x128xf32>
    %238 = arith.addf %237, %236 : vector<2x128xf32>
    %239 = arith.divf %237, %238 : vector<2x128xf32>
    %240 = vector.extract_strided_slice %222 {offsets = [0, 256], sizes = [2, 128], strides = [1, 1]} : vector<2x384xf32> to vector<2x128xf32>
    %241 = vector.extract_strided_slice %223 {offsets = [0, 256], sizes = [2, 128], strides = [1, 1]} : vector<2x384xf32> to vector<2x128xf32>
    %242 = vector.broadcast %9 : vector<1x128xf32> to vector<2x128xf32>
    %243 = arith.addf %241, %242 : vector<2x128xf32>
    %244 = arith.mulf %231, %243 : vector<2x128xf32>
    %245 = arith.addf %240, %244 : vector<2x128xf32>
    %246 = math.tanh %245 : vector<2x128xf32>
    %247 = arith.subf %219, %246 : vector<2x128xf32>
    %248 = arith.mulf %239, %247 : vector<2x128xf32>
    %249 = arith.addf %246, %248 : vector<2x128xf32>
    %c14 = arith.constant 14 : index
    %c0_43 = arith.constant 0 : index
    %250 = vector.load %arg12[%c14, %c0_43] : memref<16x128xf32, #tpu.memory_space<vmem>>, vector<2x128xf32>
    tpu.vector_store %arg12[%c14, %c0_43], %249 {strides = array<i32>} : memref<16x128xf32, #tpu.memory_space<vmem>>, vector<2x128xf32>,
    %c0_44 = arith.constant 0 : index
    %c0_45 = arith.constant 0 : index
    %251 = vector.load %arg12[%c0_44, %c0_45] : memref<16x128xf32, #tpu.memory_space<vmem>>, vector<16x128xf32>
    %c0_46 = arith.constant 0 : index
    %c0_47 = arith.constant 0 : index
    %252 = vector.load %arg5[%c0_46, %c0_47] : memref<128x384xf32, #tpu.memory_space<vmem>>, vector<128x384xf32>
    %cst_48 = arith.constant dense<0.000000e+00> : vector<16x384xf32>
    %253 = tpu.matmul %251, %252, %cst_48 {dimension_numbers = #tpu.dot_dimension_numbers<[1], [0], [0], [1], [0, 0, 1, 1], [], []>} : vector<16x128xf32>, vector<128x384xf32>, vector<16x384xf32> -> vector<16x384xf32>
    %c0_49 = arith.constant 0 : index
    %c0_50 = arith.constant 0 : index
    %254 = vector.load %arg7[%c0_49, %c0_50] : memref<1x384xf32, #tpu.memory_space<vmem>>, vector<1x384xf32>
    %255 = vector.broadcast %254 : vector<1x384xf32> to vector<16x384xf32>
    %256 = arith.addf %253, %255 : vector<16x384xf32>
    %c0_51 = arith.constant 0 : index
    %c0_52 = arith.constant 0 : index
    %257 = vector.load %arg6[%c0_51, %c0_52] : memref<128x384xf32, #tpu.memory_space<vmem>>, vector<128x384xf32>
    %c0_53 = arith.constant 0 : index
    %c0_54 = arith.constant 0 : index
    %258 = vector.load %arg8[%c0_53, %c0_54] : memref<1x128xf32, #tpu.memory_space<vmem>>, vector<1x128xf32>
    %cst_55 = arith.constant 0.000000e+00 : f32
    %259 = vector.broadcast %cst_55 : f32 to vector<2x128xf32>
    %260 = vector.extract_strided_slice %256 {offsets = [0, 0], sizes = [2, 384], strides = [1, 1]} : vector<16x384xf32> to vector<2x384xf32>
    %cst_56 = arith.constant dense<0.000000e+00> : vector<2x384xf32>
    %261 = tpu.matmul %259, %257, %cst_56 {dimension_numbers = #tpu.dot_dimension_numbers<[1], [0], [0], [1], [0, 0, 1, 1], [], []>} : vector<2x128xf32>, vector<128x384xf32>, vector<2x384xf32> -> vector<2x384xf32>
    %262 = vector.extract_strided_slice %260 {offsets = [0, 0], sizes = [2, 128], strides = [1, 1]} : vector<2x384xf32> to vector<2x128xf32>
    %263 = vector.extract_strided_slice %261 {offsets = [0, 0], sizes = [2, 128], strides = [1, 1]} : vector<2x384xf32> to vector<2x128xf32>
    %264 = arith.addf %262, %263 : vector<2x128xf32>
    %265 = arith.negf %264 : vector<2x128xf32>
    %266 = math.exp %265 : vector<2x128xf32>
    %cst_57 = arith.constant 1.000000e+00 : f32
    %267 = vector.broadcast %cst_57 : f32 to vector<2x128xf32>
    %268 = arith.addf %267, %266 : vector<2x128xf32>
    %269 = arith.divf %267, %268 : vector<2x128xf32>
    %270 = vector.extract_strided_slice %260 {offsets = [0, 128], sizes = [2, 128], strides = [1, 1]} : vector<2x384xf32> to vector<2x128xf32>
    %271 = vector.extract_strided_slice %261 {offsets = [0, 128], sizes = [2, 128], strides = [1, 1]} : vector<2x384xf32> to vector<2x128xf32>
    %272 = arith.addf %270, %271 : vector<2x128xf32>
    %273 = arith.negf %272 : vector<2x128xf32>
    %274 = math.exp %273 : vector<2x128xf32>
    %cst_58 = arith.constant 1.000000e+00 : f32
    %275 = vector.broadcast %cst_58 : f32 to vector<2x128xf32>
    %276 = arith.addf %275, %274 : vector<2x128xf32>
    %277 = arith.divf %275, %276 : vector<2x128xf32>
    %278 = vector.extract_strided_slice %260 {offsets = [0, 256], sizes = [2, 128], strides = [1, 1]} : vector<2x384xf32> to vector<2x128xf32>
    %279 = vector.extract_strided_slice %261 {offsets = [0, 256], sizes = [2, 128], strides = [1, 1]} : vector<2x384xf32> to vector<2x128xf32>
    %280 = vector.broadcast %258 : vector<1x128xf32> to vector<2x128xf32>
    %281 = arith.addf %279, %280 : vector<2x128xf32>
    %282 = arith.mulf %269, %281 : vector<2x128xf32>
    %283 = arith.addf %278, %282 : vector<2x128xf32>
    %284 = math.tanh %283 : vector<2x128xf32>
    %285 = arith.subf %259, %284 : vector<2x128xf32>
    %286 = arith.mulf %277, %285 : vector<2x128xf32>
    %287 = arith.addf %284, %286 : vector<2x128xf32>
    %288 = vector.extract_strided_slice %256 {offsets = [2, 0], sizes = [2, 384], strides = [1, 1]} : vector<16x384xf32> to vector<2x384xf32>
    %cst_59 = arith.constant dense<0.000000e+00> : vector<2x384xf32>
    %289 = tpu.matmul %287, %257, %cst_59 {dimension_numbers = #tpu.dot_dimension_numbers<[1], [0], [0], [1], [0, 0, 1, 1], [], []>} : vector<2x128xf32>, vector<128x384xf32>, vector<2x384xf32> -> vector<2x384xf32>
    %290 = vector.extract_strided_slice %288 {offsets = [0, 0], sizes = [2, 128], strides = [1, 1]} : vector<2x384xf32> to vector<2x128xf32>
    %291 = vector.extract_strided_slice %289 {offsets = [0, 0], sizes = [2, 128], strides = [1, 1]} : vector<2x384xf32> to vector<2x128xf32>
    %292 = arith.addf %290, %291 : vector<2x128xf32>
    %293 = arith.negf %292 : vector<2x128xf32>
    %294 = math.exp %293 : vector<2x128xf32>
    %cst_60 = arith.constant 1.000000e+00 : f32
    %295 = vector.broadcast %cst_60 : f32 to vector<2x128xf32>
    %296 = arith.addf %295, %294 : vector<2x128xf32>
    %297 = arith.divf %295, %296 : vector<2x128xf32>
    %298 = vector.extract_strided_slice %288 {offsets = [0, 128], sizes = [2, 128], strides = [1, 1]} : vector<2x384xf32> to vector<2x128xf32>
    %299 = vector.extract_strided_slice %289 {offsets = [0, 128], sizes = [2, 128], strides = [1, 1]} : vector<2x384xf32> to vector<2x128xf32>
    %300 = arith.addf %298, %299 : vector<2x128xf32>
    %301 = arith.negf %300 : vector<2x128xf32>
    %302 = math.exp %301 : vector<2x128xf32>
    %cst_61 = arith.constant 1.000000e+00 : f32
    %303 = vector.broadcast %cst_61 : f32 to vector<2x128xf32>
    %304 = arith.addf %303, %302 : vector<2x128xf32>
    %305 = arith.divf %303, %304 : vector<2x128xf32>
    %306 = vector.extract_strided_slice %288 {offsets = [0, 256], sizes = [2, 128], strides = [1, 1]} : vector<2x384xf32> to vector<2x128xf32>
    %307 = vector.extract_strided_slice %289 {offsets = [0, 256], sizes = [2, 128], strides = [1, 1]} : vector<2x384xf32> to vector<2x128xf32>
    %308 = vector.broadcast %258 : vector<1x128xf32> to vector<2x128xf32>
    %309 = arith.addf %307, %308 : vector<2x128xf32>
    %310 = arith.mulf %297, %309 : vector<2x128xf32>
    %311 = arith.addf %306, %310 : vector<2x128xf32>
    %312 = math.tanh %311 : vector<2x128xf32>
    %313 = arith.subf %287, %312 : vector<2x128xf32>
    %314 = arith.mulf %305, %313 : vector<2x128xf32>
    %315 = arith.addf %312, %314 : vector<2x128xf32>
    %316 = vector.extract_strided_slice %256 {offsets = [4, 0], sizes = [2, 384], strides = [1, 1]} : vector<16x384xf32> to vector<2x384xf32>
    %cst_62 = arith.constant dense<0.000000e+00> : vector<2x384xf32>
    %317 = tpu.matmul %315, %257, %cst_62 {dimension_numbers = #tpu.dot_dimension_numbers<[1], [0], [0], [1], [0, 0, 1, 1], [], []>} : vector<2x128xf32>, vector<128x384xf32>, vector<2x384xf32> -> vector<2x384xf32>
    %318 = vector.extract_strided_slice %316 {offsets = [0, 0], sizes = [2, 128], strides = [1, 1]} : vector<2x384xf32> to vector<2x128xf32>
    %319 = vector.extract_strided_slice %317 {offsets = [0, 0], sizes = [2, 128], strides = [1, 1]} : vector<2x384xf32> to vector<2x128xf32>
    %320 = arith.addf %318, %319 : vector<2x128xf32>
    %321 = arith.negf %320 : vector<2x128xf32>
    %322 = math.exp %321 : vector<2x128xf32>
    %cst_63 = arith.constant 1.000000e+00 : f32
    %323 = vector.broadcast %cst_63 : f32 to vector<2x128xf32>
    %324 = arith.addf %323, %322 : vector<2x128xf32>
    %325 = arith.divf %323, %324 : vector<2x128xf32>
    %326 = vector.extract_strided_slice %316 {offsets = [0, 128], sizes = [2, 128], strides = [1, 1]} : vector<2x384xf32> to vector<2x128xf32>
    %327 = vector.extract_strided_slice %317 {offsets = [0, 128], sizes = [2, 128], strides = [1, 1]} : vector<2x384xf32> to vector<2x128xf32>
    %328 = arith.addf %326, %327 : vector<2x128xf32>
    %329 = arith.negf %328 : vector<2x128xf32>
    %330 = math.exp %329 : vector<2x128xf32>
    %cst_64 = arith.constant 1.000000e+00 : f32
    %331 = vector.broadcast %cst_64 : f32 to vector<2x128xf32>
    %332 = arith.addf %331, %330 : vector<2x128xf32>
    %333 = arith.divf %331, %332 : vector<2x128xf32>
    %334 = vector.extract_strided_slice %316 {offsets = [0, 256], sizes = [2, 128], strides = [1, 1]} : vector<2x384xf32> to vector<2x128xf32>
    %335 = vector.extract_strided_slice %317 {offsets = [0, 256], sizes = [2, 128], strides = [1, 1]} : vector<2x384xf32> to vector<2x128xf32>
    %336 = vector.broadcast %258 : vector<1x128xf32> to vector<2x128xf32>
    %337 = arith.addf %335, %336 : vector<2x128xf32>
    %338 = arith.mulf %325, %337 : vector<2x128xf32>
    %339 = arith.addf %334, %338 : vector<2x128xf32>
    %340 = math.tanh %339 : vector<2x128xf32>
    %341 = arith.subf %315, %340 : vector<2x128xf32>
    %342 = arith.mulf %333, %341 : vector<2x128xf32>
    %343 = arith.addf %340, %342 : vector<2x128xf32>
    %344 = vector.extract_strided_slice %256 {offsets = [6, 0], sizes = [2, 384], strides = [1, 1]} : vector<16x384xf32> to vector<2x384xf32>
    %cst_65 = arith.constant dense<0.000000e+00> : vector<2x384xf32>
    %345 = tpu.matmul %343, %257, %cst_65 {dimension_numbers = #tpu.dot_dimension_numbers<[1], [0], [0], [1], [0, 0, 1, 1], [], []>} : vector<2x128xf32>, vector<128x384xf32>, vector<2x384xf32> -> vector<2x384xf32>
    %346 = vector.extract_strided_slice %344 {offsets = [0, 0], sizes = [2, 128], strides = [1, 1]} : vector<2x384xf32> to vector<2x128xf32>
    %347 = vector.extract_strided_slice %345 {offsets = [0, 0], sizes = [2, 128], strides = [1, 1]} : vector<2x384xf32> to vector<2x128xf32>
    %348 = arith.addf %346, %347 : vector<2x128xf32>
    %349 = arith.negf %348 : vector<2x128xf32>
    %350 = math.exp %349 : vector<2x128xf32>
    %cst_66 = arith.constant 1.000000e+00 : f32
    %351 = vector.broadcast %cst_66 : f32 to vector<2x128xf32>
    %352 = arith.addf %351, %350 : vector<2x128xf32>
    %353 = arith.divf %351, %352 : vector<2x128xf32>
    %354 = vector.extract_strided_slice %344 {offsets = [0, 128], sizes = [2, 128], strides = [1, 1]} : vector<2x384xf32> to vector<2x128xf32>
    %355 = vector.extract_strided_slice %345 {offsets = [0, 128], sizes = [2, 128], strides = [1, 1]} : vector<2x384xf32> to vector<2x128xf32>
    %356 = arith.addf %354, %355 : vector<2x128xf32>
    %357 = arith.negf %356 : vector<2x128xf32>
    %358 = math.exp %357 : vector<2x128xf32>
    %cst_67 = arith.constant 1.000000e+00 : f32
    %359 = vector.broadcast %cst_67 : f32 to vector<2x128xf32>
    %360 = arith.addf %359, %358 : vector<2x128xf32>
    %361 = arith.divf %359, %360 : vector<2x128xf32>
    %362 = vector.extract_strided_slice %344 {offsets = [0, 256], sizes = [2, 128], strides = [1, 1]} : vector<2x384xf32> to vector<2x128xf32>
    %363 = vector.extract_strided_slice %345 {offsets = [0, 256], sizes = [2, 128], strides = [1, 1]} : vector<2x384xf32> to vector<2x128xf32>
    %364 = vector.broadcast %258 : vector<1x128xf32> to vector<2x128xf32>
    %365 = arith.addf %363, %364 : vector<2x128xf32>
    %366 = arith.mulf %353, %365 : vector<2x128xf32>
    %367 = arith.addf %362, %366 : vector<2x128xf32>
    %368 = math.tanh %367 : vector<2x128xf32>
    %369 = arith.subf %343, %368 : vector<2x128xf32>
    %370 = arith.mulf %361, %369 : vector<2x128xf32>
    %371 = arith.addf %368, %370 : vector<2x128xf32>
    %372 = vector.extract_strided_slice %256 {offsets = [8, 0], sizes = [2, 384], strides = [1, 1]} : vector<16x384xf32> to vector<2x384xf32>
    %cst_68 = arith.constant dense<0.000000e+00> : vector<2x384xf32>
    %373 = tpu.matmul %371, %257, %cst_68 {dimension_numbers = #tpu.dot_dimension_numbers<[1], [0], [0], [1], [0, 0, 1, 1], [], []>} : vector<2x128xf32>, vector<128x384xf32>, vector<2x384xf32> -> vector<2x384xf32>
    %374 = vector.extract_strided_slice %372 {offsets = [0, 0], sizes = [2, 128], strides = [1, 1]} : vector<2x384xf32> to vector<2x128xf32>
    %375 = vector.extract_strided_slice %373 {offsets = [0, 0], sizes = [2, 128], strides = [1, 1]} : vector<2x384xf32> to vector<2x128xf32>
    %376 = arith.addf %374, %375 : vector<2x128xf32>
    %377 = arith.negf %376 : vector<2x128xf32>
    %378 = math.exp %377 : vector<2x128xf32>
    %cst_69 = arith.constant 1.000000e+00 : f32
    %379 = vector.broadcast %cst_69 : f32 to vector<2x128xf32>
    %380 = arith.addf %379, %378 : vector<2x128xf32>
    %381 = arith.divf %379, %380 : vector<2x128xf32>
    %382 = vector.extract_strided_slice %372 {offsets = [0, 128], sizes = [2, 128], strides = [1, 1]} : vector<2x384xf32> to vector<2x128xf32>
    %383 = vector.extract_strided_slice %373 {offsets = [0, 128], sizes = [2, 128], strides = [1, 1]} : vector<2x384xf32> to vector<2x128xf32>
    %384 = arith.addf %382, %383 : vector<2x128xf32>
    %385 = arith.negf %384 : vector<2x128xf32>
    %386 = math.exp %385 : vector<2x128xf32>
    %cst_70 = arith.constant 1.000000e+00 : f32
    %387 = vector.broadcast %cst_70 : f32 to vector<2x128xf32>
    %388 = arith.addf %387, %386 : vector<2x128xf32>
    %389 = arith.divf %387, %388 : vector<2x128xf32>
    %390 = vector.extract_strided_slice %372 {offsets = [0, 256], sizes = [2, 128], strides = [1, 1]} : vector<2x384xf32> to vector<2x128xf32>
    %391 = vector.extract_strided_slice %373 {offsets = [0, 256], sizes = [2, 128], strides = [1, 1]} : vector<2x384xf32> to vector<2x128xf32>
    %392 = vector.broadcast %258 : vector<1x128xf32> to vector<2x128xf32>
    %393 = arith.addf %391, %392 : vector<2x128xf32>
    %394 = arith.mulf %381, %393 : vector<2x128xf32>
    %395 = arith.addf %390, %394 : vector<2x128xf32>
    %396 = math.tanh %395 : vector<2x128xf32>
    %397 = arith.subf %371, %396 : vector<2x128xf32>
    %398 = arith.mulf %389, %397 : vector<2x128xf32>
    %399 = arith.addf %396, %398 : vector<2x128xf32>
    %400 = vector.extract_strided_slice %256 {offsets = [10, 0], sizes = [2, 384], strides = [1, 1]} : vector<16x384xf32> to vector<2x384xf32>
    %cst_71 = arith.constant dense<0.000000e+00> : vector<2x384xf32>
    %401 = tpu.matmul %399, %257, %cst_71 {dimension_numbers = #tpu.dot_dimension_numbers<[1], [0], [0], [1], [0, 0, 1, 1], [], []>} : vector<2x128xf32>, vector<128x384xf32>, vector<2x384xf32> -> vector<2x384xf32>
    %402 = vector.extract_strided_slice %400 {offsets = [0, 0], sizes = [2, 128], strides = [1, 1]} : vector<2x384xf32> to vector<2x128xf32>
    %403 = vector.extract_strided_slice %401 {offsets = [0, 0], sizes = [2, 128], strides = [1, 1]} : vector<2x384xf32> to vector<2x128xf32>
    %404 = arith.addf %402, %403 : vector<2x128xf32>
    %405 = arith.negf %404 : vector<2x128xf32>
    %406 = math.exp %405 : vector<2x128xf32>
    %cst_72 = arith.constant 1.000000e+00 : f32
    %407 = vector.broadcast %cst_72 : f32 to vector<2x128xf32>
    %408 = arith.addf %407, %406 : vector<2x128xf32>
    %409 = arith.divf %407, %408 : vector<2x128xf32>
    %410 = vector.extract_strided_slice %400 {offsets = [0, 128], sizes = [2, 128], strides = [1, 1]} : vector<2x384xf32> to vector<2x128xf32>
    %411 = vector.extract_strided_slice %401 {offsets = [0, 128], sizes = [2, 128], strides = [1, 1]} : vector<2x384xf32> to vector<2x128xf32>
    %412 = arith.addf %410, %411 : vector<2x128xf32>
    %413 = arith.negf %412 : vector<2x128xf32>
    %414 = math.exp %413 : vector<2x128xf32>
    %cst_73 = arith.constant 1.000000e+00 : f32
    %415 = vector.broadcast %cst_73 : f32 to vector<2x128xf32>
    %416 = arith.addf %415, %414 : vector<2x128xf32>
    %417 = arith.divf %415, %416 : vector<2x128xf32>
    %418 = vector.extract_strided_slice %400 {offsets = [0, 256], sizes = [2, 128], strides = [1, 1]} : vector<2x384xf32> to vector<2x128xf32>
    %419 = vector.extract_strided_slice %401 {offsets = [0, 256], sizes = [2, 128], strides = [1, 1]} : vector<2x384xf32> to vector<2x128xf32>
    %420 = vector.broadcast %258 : vector<1x128xf32> to vector<2x128xf32>
    %421 = arith.addf %419, %420 : vector<2x128xf32>
    %422 = arith.mulf %409, %421 : vector<2x128xf32>
    %423 = arith.addf %418, %422 : vector<2x128xf32>
    %424 = math.tanh %423 : vector<2x128xf32>
    %425 = arith.subf %399, %424 : vector<2x128xf32>
    %426 = arith.mulf %417, %425 : vector<2x128xf32>
    %427 = arith.addf %424, %426 : vector<2x128xf32>
    %428 = vector.extract_strided_slice %256 {offsets = [12, 0], sizes = [2, 384], strides = [1, 1]} : vector<16x384xf32> to vector<2x384xf32>
    %cst_74 = arith.constant dense<0.000000e+00> : vector<2x384xf32>
    %429 = tpu.matmul %427, %257, %cst_74 {dimension_numbers = #tpu.dot_dimension_numbers<[1], [0], [0], [1], [0, 0, 1, 1], [], []>} : vector<2x128xf32>, vector<128x384xf32>, vector<2x384xf32> -> vector<2x384xf32>
    %430 = vector.extract_strided_slice %428 {offsets = [0, 0], sizes = [2, 128], strides = [1, 1]} : vector<2x384xf32> to vector<2x128xf32>
    %431 = vector.extract_strided_slice %429 {offsets = [0, 0], sizes = [2, 128], strides = [1, 1]} : vector<2x384xf32> to vector<2x128xf32>
    %432 = arith.addf %430, %431 : vector<2x128xf32>
    %433 = arith.negf %432 : vector<2x128xf32>
    %434 = math.exp %433 : vector<2x128xf32>
    %cst_75 = arith.constant 1.000000e+00 : f32
    %435 = vector.broadcast %cst_75 : f32 to vector<2x128xf32>
    %436 = arith.addf %435, %434 : vector<2x128xf32>
    %437 = arith.divf %435, %436 : vector<2x128xf32>
    %438 = vector.extract_strided_slice %428 {offsets = [0, 128], sizes = [2, 128], strides = [1, 1]} : vector<2x384xf32> to vector<2x128xf32>
    %439 = vector.extract_strided_slice %429 {offsets = [0, 128], sizes = [2, 128], strides = [1, 1]} : vector<2x384xf32> to vector<2x128xf32>
    %440 = arith.addf %438, %439 : vector<2x128xf32>
    %441 = arith.negf %440 : vector<2x128xf32>
    %442 = math.exp %441 : vector<2x128xf32>
    %cst_76 = arith.constant 1.000000e+00 : f32
    %443 = vector.broadcast %cst_76 : f32 to vector<2x128xf32>
    %444 = arith.addf %443, %442 : vector<2x128xf32>
    %445 = arith.divf %443, %444 : vector<2x128xf32>
    %446 = vector.extract_strided_slice %428 {offsets = [0, 256], sizes = [2, 128], strides = [1, 1]} : vector<2x384xf32> to vector<2x128xf32>
    %447 = vector.extract_strided_slice %429 {offsets = [0, 256], sizes = [2, 128], strides = [1, 1]} : vector<2x384xf32> to vector<2x128xf32>
    %448 = vector.broadcast %258 : vector<1x128xf32> to vector<2x128xf32>
    %449 = arith.addf %447, %448 : vector<2x128xf32>
    %450 = arith.mulf %437, %449 : vector<2x128xf32>
    %451 = arith.addf %446, %450 : vector<2x128xf32>
    %452 = math.tanh %451 : vector<2x128xf32>
    %453 = arith.subf %427, %452 : vector<2x128xf32>
    %454 = arith.mulf %445, %453 : vector<2x128xf32>
    %455 = arith.addf %452, %454 : vector<2x128xf32>
    %456 = vector.extract_strided_slice %256 {offsets = [14, 0], sizes = [2, 384], strides = [1, 1]} : vector<16x384xf32> to vector<2x384xf32>
    %cst_77 = arith.constant dense<0.000000e+00> : vector<2x384xf32>
    %457 = tpu.matmul %455, %257, %cst_77 {dimension_numbers = #tpu.dot_dimension_numbers<[1], [0], [0], [1], [0, 0, 1, 1], [], []>} : vector<2x128xf32>, vector<128x384xf32>, vector<2x384xf32> -> vector<2x384xf32>
    %458 = vector.extract_strided_slice %456 {offsets = [0, 0], sizes = [2, 128], strides = [1, 1]} : vector<2x384xf32> to vector<2x128xf32>
    %459 = vector.extract_strided_slice %457 {offsets = [0, 0], sizes = [2, 128], strides = [1, 1]} : vector<2x384xf32> to vector<2x128xf32>
    %460 = arith.addf %458, %459 : vector<2x128xf32>
    %461 = arith.negf %460 : vector<2x128xf32>
    %462 = math.exp %461 : vector<2x128xf32>
    %cst_78 = arith.constant 1.000000e+00 : f32
    %463 = vector.broadcast %cst_78 : f32 to vector<2x128xf32>
    %464 = arith.addf %463, %462 : vector<2x128xf32>
    %465 = arith.divf %463, %464 : vector<2x128xf32>
    %466 = vector.extract_strided_slice %456 {offsets = [0, 128], sizes = [2, 128], strides = [1, 1]} : vector<2x384xf32> to vector<2x128xf32>
    %467 = vector.extract_strided_slice %457 {offsets = [0, 128], sizes = [2, 128], strides = [1, 1]} : vector<2x384xf32> to vector<2x128xf32>
    %468 = arith.addf %466, %467 : vector<2x128xf32>
    %469 = arith.negf %468 : vector<2x128xf32>
    %470 = math.exp %469 : vector<2x128xf32>
    %cst_79 = arith.constant 1.000000e+00 : f32
    %471 = vector.broadcast %cst_79 : f32 to vector<2x128xf32>
    %472 = arith.addf %471, %470 : vector<2x128xf32>
    %473 = arith.divf %471, %472 : vector<2x128xf32>
    %474 = vector.extract_strided_slice %456 {offsets = [0, 256], sizes = [2, 128], strides = [1, 1]} : vector<2x384xf32> to vector<2x128xf32>
    %475 = vector.extract_strided_slice %457 {offsets = [0, 256], sizes = [2, 128], strides = [1, 1]} : vector<2x384xf32> to vector<2x128xf32>
    %476 = vector.broadcast %258 : vector<1x128xf32> to vector<2x128xf32>
    %477 = arith.addf %475, %476 : vector<2x128xf32>
    %478 = arith.mulf %465, %477 : vector<2x128xf32>
    %479 = arith.addf %474, %478 : vector<2x128xf32>
    %480 = math.tanh %479 : vector<2x128xf32>
    %481 = arith.subf %455, %480 : vector<2x128xf32>
    %482 = arith.mulf %473, %481 : vector<2x128xf32>
    %483 = arith.addf %480, %482 : vector<2x128xf32>
    %c0_80 = arith.constant 0 : index
    %c0_81 = arith.constant 0 : index
    %484 = vector.load %arg9[%c0_80, %c0_81] : memref<128x128xf32, #tpu.memory_space<vmem>>, vector<128x128xf32>
    %cst_82 = arith.constant dense<0.000000e+00> : vector<2x128xf32>
    %485 = tpu.matmul %483, %484, %cst_82 {dimension_numbers = #tpu.dot_dimension_numbers<[1], [0], [0], [1], [0, 0, 1, 1], [], []>} : vector<2x128xf32>, vector<128x128xf32>, vector<2x128xf32> -> vector<2x128xf32>
    %c0_83 = arith.constant 0 : index
    %c0_84 = arith.constant 0 : index
    %486 = vector.load %arg10[%c0_83, %c0_84] : memref<1x128xf32, #tpu.memory_space<vmem>>, vector<1x128xf32>
    %487 = vector.broadcast %486 : vector<1x128xf32> to vector<2x128xf32>
    %488 = arith.addf %485, %487 : vector<2x128xf32>
    %489 = arith.negf %488 : vector<2x128xf32>
    %490 = math.exp %489 : vector<2x128xf32>
    %cst_85 = arith.constant 1.000000e+00 : f32
    %491 = vector.broadcast %cst_85 : f32 to vector<2x128xf32>
    %492 = arith.addf %491, %490 : vector<2x128xf32>
    %493 = arith.divf %491, %492 : vector<2x128xf32>
    %c0_86 = arith.constant 0 : index
    %c0_87 = arith.constant 0 : index
    %494 = vector.load %arg11[%c0_86, %c0_87] : memref<2x128xf32, #tpu.memory_space<vmem>>, vector<2x128xf32>
    tpu.vector_store %arg11[%c0_86, %c0_87], %493 {strides = array<i32>} : memref<2x128xf32, #tpu.memory_space<vmem>>, vector<2x128xf32>,
    return
  }
}

</mosaic_0001>

<llo_original>
// kernel: tpu_custom_call.1
$region0: #{tpu_custom_call.1}
  #allocation0 [shape = 'u32[]', space=smem, size = 0x4, offset = 0x4, fixed_abs, tag = 'smem constant byte address 0x4 - core index']
  #allocation1 [shape = 'u32[144,128]{1,0:T(1,128)}', space=vmem, size = 0x12000, scoped, tag = 'internal scratch']
  #allocation2 [shape = 'f32[16,128]{1,0:T(8,128)}', space=vmem, size = 0x2000, scoped, tag = 'scratch operand']
  %s0 = inlined_call_operand.hbm [shape: f32[2,8,32], index: 0, kind: input, shape index: {}]
  %s1 = inlined_call_operand.hbm [shape: f32[32,384], index: 1, kind: input, shape index: {}]
  %s2 = inlined_call_operand.hbm [shape: f32[128,384], index: 2, kind: input, shape index: {}]
  %s3 = inlined_call_operand.vmem [shape: f32[1,384], index: 3, kind: input, shape index: {}]
  %s4 = inlined_call_operand.vmem [shape: f32[1,128], index: 4, kind: input, shape index: {}]
  %s5 = inlined_call_operand.hbm [shape: f32[128,384], index: 5, kind: input, shape index: {}]
  %s6 = inlined_call_operand.hbm [shape: f32[128,384], index: 6, kind: input, shape index: {}]
  %s7 = inlined_call_operand.vmem [shape: f32[1,384], index: 7, kind: input, shape index: {}]
  %s8 = inlined_call_operand.vmem [shape: f32[1,128], index: 8, kind: input, shape index: {}]
  %s9 = inlined_call_operand.hbm [shape: f32[128,128], index: 9, kind: input, shape index: {}]
  %s10 = inlined_call_operand.vmem [shape: f32[1,128], index: 10, kind: input, shape index: {}]
  %s11 = inlined_call_operand.hbm [shape: f32[2,128], index: 11, kind: output, shape index: {}]
  %s12 = sld [smem:[#allocation0]]
  $region78: #{tpu_custom_call.1} parent=0
    _
  %s14 = ssub.s32 1, %s12
  %s15 = scalar_select 0, %s14, %s12
  $region1: #{tpu_custom_call.1} parent=0
    #allocation3 [shape = 'u8[8192]{0}', space=vmem, size = 0x2000, scoped, tag = 'input window, operand 0, single buffered']
    #allocation4 [shape = 's32[1]{0}', space=sflag, size = 0x4, scoped, tag = 'scoped memory for tpu_custom_call.1']
    #allocation5 [shape = 's32[1]{0}', space=sflag, size = 0x4, scoped, tag = 'scoped memory for tpu_custom_call.1']
    #allocation6 [shape = 'u8[49152]{0}', space=vmem, size = 0xc000, scoped, tag = 'input window, operand 1, single buffered']
    #allocation7 [shape = 's32[1]{0}', space=sflag, size = 0x4, scoped, tag = 'scoped memory for tpu_custom_call.1']
    #allocation8 [shape = 'u8[196608]{0}', space=vmem, size = 0x30000, scoped, tag = 'input window, operand 2, single buffered']
    #allocation9 [shape = 'u8[196608]{0}', space=vmem, size = 0x30000, scoped, tag = 'input window, operand 5, single buffered']
    #allocation10 [shape = 's32[1]{0}', space=sflag, size = 0x4, scoped, tag = 'scoped memory for tpu_custom_call.1']
    #allocation11 [shape = 'u8[196608]{0}', space=vmem, size = 0x30000, scoped, tag = 'input window, operand 6, single buffered']
    #allocation12 [shape = 'u8[65536]{0}', space=vmem, size = 0x10000, scoped, tag = 'input window, operand 9, single buffered']
    #allocation13 [shape = 's32[1]{0}', space=sflag, size = 0x4, scoped, tag = 'scoped memory for tpu_custom_call.1']
    #allocation14 [shape = 'u8[1024]{0}', space=vmem, size = 0x400, scoped, tag = 'output window, operand 0, single buffered']
    %16 = vsyncpa [#allocation4], 0
    %17 = vsyncpa [#allocation7], 0
    %18 = vsyncpa [#allocation10], 0
    %19 = vsyncpa [#allocation13], 0
    %20 = vsyncpa [#allocation5], 0
    // Predicated region
    $region2: #{tpu_custom_call.1} parent=1 // pred_check
      _
    $region3: #{tpu_custom_call.1} parent=1 // pred_check_branch
      %22 = sbr.rel (0) target = $region5
    $region4: #{tpu_custom_call.1} parent=1 // pred_region
      %s24 = ssub.s32 256, 256
      %25 = vsyncadd [#allocation4], %s24
      %s26 = sshll.u32 [#allocation3], 4
      %s27 = int_to_ptr.vmem [resolvable:$true] %s26
      %32 = dma.hbm_to_vmem [thread:$0]  %s0, 256, %s27, [#allocation4], 128, 128, 8
    $region5: #{tpu_custom_call.1} parent=1 // pred_fallthru
      _
    // Predicated region
    $region6: #{tpu_custom_call.1} parent=1 // pred_check
      _
    $region7: #{tpu_custom_call.1} parent=1 // pred_check_branch
      %34 = sbr.rel (0) target = $region9
    $region8: #{tpu_custom_call.1} parent=1 // pred_region
      %s36 = ssub.s32 1536, 1536
      %37 = vsyncadd [#allocation7], %s36
      %s38 = sshll.u32 [#allocation6], 4
      %s39 = int_to_ptr.vmem [resolvable:$true] %s38
      %44 = dma.hbm_to_vmem [thread:$0]  %s1, 1536, %s39, [#allocation7], 384, 384, 24
    $region9: #{tpu_custom_call.1} parent=1 // pred_fallthru
      _
    // Predicated region
    $region10: #{tpu_custom_call.1} parent=1 // pred_check
      _
    $region11: #{tpu_custom_call.1} parent=1 // pred_check_branch
      %46 = sbr.rel (0) target = $region13
    $region12: #{tpu_custom_call.1} parent=1 // pred_region
      %s48 = ssub.s32 6144, 6144
      %49 = vsyncadd [#allocation7], %s48
      %s50 = sshll.u32 [#allocation8], 4
      %s51 = int_to_ptr.vmem [resolvable:$true] %s50
      %56 = dma.hbm_to_vmem [thread:$0]  %s2, 6144, %s51, [#allocation7], 384, 384, 24
    $region13: #{tpu_custom_call.1} parent=1 // pred_fallthru
      _
    // Predicated region
    $region14: #{tpu_custom_call.1} parent=1 // pred_check
      _
    $region15: #{tpu_custom_call.1} parent=1 // pred_check_branch
      %58 = sbr.rel (0) target = $region17
    $region16: #{tpu_custom_call.1} parent=1 // pred_region
      _
    $region17: #{tpu_custom_call.1} parent=1 // pred_fallthru
      _
    // Predicated region
    $region18: #{tpu_custom_call.1} parent=1 // pred_check
      _
    $region19: #{tpu_custom_call.1} parent=1 // pred_check_branch
      %60 = sbr.rel (0) target = $region21
    $region20: #{tpu_custom_call.1} parent=1 // pred_region
      _
    $region21: #{tpu_custom_call.1} parent=1 // pred_fallthru
      _
    // Predicated region
    $region22: #{tpu_custom_call.1} parent=1 // pred_check
      _
    $region23: #{tpu_custom_call.1} parent=1 // pred_check_branch
      %62 = sbr.rel (0) target = $region25
    $region24: #{tpu_custom_call.1} parent=1 // pred_region
      %s64 = ssub.s32 6144, 6144
      %65 = vsyncadd [#allocation10], %s64
      %s66 = sshll.u32 [#allocation9], 4
      %s67 = int_to_ptr.vmem [resolvable:$true] %s66
      %72 = dma.hbm_to_vmem [thread:$0]  %s5, 6144, %s67, [#allocation10], 384, 384, 24
    $region25: #{tpu_custom_call.1} parent=1 // pred_fallthru
      _
    // Predicated region
    $region26: #{tpu_custom_call.1} parent=1 // pred_check
      _
    $region27: #{tpu_custom_call.1} parent=1 // pred_check_branch
      %74 = sbr.rel (0) target = $region29
    $region28: #{tpu_custom_call.1} parent=1 // pred_region
      %s76 = ssub.s32 6144, 6144
      %77 = vsyncadd [#allocation10], %s76
      %s78 = sshll.u32 [#allocation11], 4
      %s79 = int_to_ptr.vmem [resolvable:$true] %s78
      %84 = dma.hbm_to_vmem [thread:$0]  %s6, 6144, %s79, [#allocation10], 384, 384, 24
    $region29: #{tpu_custom_call.1} parent=1 // pred_fallthru
      _
    // Predicated region
    $region30: #{tpu_custom_call.1} parent=1 // pred_check
      _
    $region31: #{tpu_custom_call.1} parent=1 // pred_check_branch
      %86 = sbr.rel (0) target = $region33
    $region32: #{tpu_custom_call.1} parent=1 // pred_region
      _
    $region33: #{tpu_custom_call.1} parent=1 // pred_fallthru
      _
    // Predicated region
    $region34: #{tpu_custom_call.1} parent=1 // pred_check
      _
    $region35: #{tpu_custom_call.1} parent=1 // pred_check_branch
      %88 = sbr.rel (0) target = $region37
    $region36: #{tpu_custom_call.1} parent=1 // pred_region
      _
    $region37: #{tpu_custom_call.1} parent=1 // pred_fallthru
      _
    // Predicated region
    $region38: #{tpu_custom_call.1} parent=1 // pred_check
      _
    $region39: #{tpu_custom_call.1} parent=1 // pred_check_branch
      %90 = sbr.rel (0) target = $region41
    $region40: #{tpu_custom_call.1} parent=1 // pred_region
      %s92 = ssub.s32 2048, 2048
      %93 = vsyncadd [#allocation13], %s92
      %s94 = sshll.u32 [#allocation12], 4
      %s95 = int_to_ptr.vmem [resolvable:$true] %s94
      %100 = dma.hbm_to_vmem [thread:$0]  %s9, 2048, %s95, [#allocation13], 128, 128, 8
    $region41: #{tpu_custom_call.1} parent=1 // pred_fallthru
      _
    // Predicated region
    $region42: #{tpu_custom_call.1} parent=1 // pred_check
      _
    $region43: #{tpu_custom_call.1} parent=1 // pred_check_branch
      %102 = sbr.rel (0) target = $region45
    $region44: #{tpu_custom_call.1} parent=1 // pred_region
      _
    $region45: #{tpu_custom_call.1} parent=1 // pred_fallthru
      _
    // Predicated region
    $region46: #{tpu_custom_call.1} parent=1 // pred_check
      _
    $region47: #{tpu_custom_call.1} parent=1 // pred_check_branch
      %104 = sbr.rel (0) target = $region49
    $region48: #{tpu_custom_call.1} parent=1 // pred_region
      %105 = dma.done [#allocation4], 256
    $region49: #{tpu_custom_call.1} parent=1 // pred_fallthru
      _
    // Predicated region
    $region50: #{tpu_custom_call.1} parent=1 // pred_check
      _
    $region51: #{tpu_custom_call.1} parent=1 // pred_check_branch
      %107 = sbr.rel (0) target = $region53
    $region52: #{tpu_custom_call.1} parent=1 // pred_region
      %108 = dma.done [#allocation7], 1536
    $region53: #{tpu_custom_call.1} parent=1 // pred_fallthru
      _
    // Predicated region
    $region54: #{tpu_custom_call.1} parent=1 // pred_check
      _
    $region55: #{tpu_custom_call.1} parent=1 // pred_check_branch
      %110 = sbr.rel (0) target = $region57
    $region56: #{tpu_custom_call.1} parent=1 // pred_region
      %111 = dma.done [#allocation7], 6144
    $region57: #{tpu_custom_call.1} parent=1 // pred_fallthru
      _
    // Predicated region
    $region58: #{tpu_custom_call.1} parent=1 // pred_check
      _
    $region59: #{tpu_custom_call.1} parent=1 // pred_check_branch
      %113 = sbr.rel (0) target = $region61
    $region60: #{tpu_custom_call.1} parent=1 // pred_region
      %114 = dma.done [#allocation10], 6144
    $region61: #{tpu_custom_call.1} parent=1 // pred_fallthru
      _
    // Predicated region
    $region62: #{tpu_custom_call.1} parent=1 // pred_check
      _
    $region63: #{tpu_custom_call.1} parent=1 // pred_check_branch
      %116 = sbr.rel (0) target = $region65
    $region64: #{tpu_custom_call.1} parent=1 // pred_region
      %117 = dma.done [#allocation10], 6144
    $region65: #{tpu_custom_call.1} parent=1 // pred_fallthru
      _
    // Predicated region
    $region66: #{tpu_custom_call.1} parent=1 // pred_check
      _
    $region67: #{tpu_custom_call.1} parent=1 // pred_check_branch
      %119 = sbr.rel (0) target = $region69
    $region68: #{tpu_custom_call.1} parent=1 // pred_region
      %120 = dma.done [#allocation13], 2048
    $region69: #{tpu_custom_call.1} parent=1 // pred_fallthru
      _
    %v121 = vld [vmem:[#allocation3] sm:$0xff]
    %v122 = vld [vmem:[#allocation3 + $0x8] sm:$0xff]
    %v123 = vld [vmem:[#allocation6] sm:$0xff]
    %v124 = vld [vmem:[#allocation6 + $0x8] sm:$0xff]
    %v125 = vld [vmem:[#allocation6 + $0x10] sm:$0xff]
    %v126 = vld [vmem:[#allocation6 + $0x18] sm:$0xff]
    %v127 = vld [vmem:[#allocation6 + $0x20] sm:$0xff]
    %v128 = vld [vmem:[#allocation6 + $0x28] sm:$0xff]
    %v129 = vld [vmem:[#allocation6 + $0x30] sm:$0xff]
    %v130 = vld [vmem:[#allocation6 + $0x38] sm:$0xff]
    %v131 = vld [vmem:[#allocation6 + $0x40] sm:$0xff]
    %v132 = vld [vmem:[#allocation6 + $0x48] sm:$0xff]
    %v133 = vld [vmem:[#allocation6 + $0x50] sm:$0xff]
    %v134 = vld [vmem:[#allocation6 + $0x58] sm:$0xff]
    %v135 = vld [vmem:[%s3] sm:$0x7]
    %v137 = vlaneseq
    %v138 = vshrl.u32 %v137, 7
    %v139 = vsub.s32 0, %v138
    %v140 = vrot.slane %v135, %v139
    %v141 = vlaneseq
    %v142 = vshrl.u32 %v141, 7
    %v143 = vsub.s32 1, %v142
    %v144 = vrot.slane %v135, %v143
    %v145 = vlaneseq
    %v146 = vshrl.u32 %v145, 7
    %v147 = vsub.s32 2, %v146
    %v148 = vrot.slane %v135, %v147
    %vm152 = vcmask 261120
    %v154 = vsel %vm152, %v121, 0
    %v157 = vsel %vm152, %v122, 0
    %159 = vmatprep.subr.mxu0 0.0
    %160 = vmatpush1.msra.mxu0 0.0
    %161 = vmatprep.subr.mxu0 0.0
    %162 = vmatpush1.msra.mxu0 0.0
    %163 = vmatprep.subr.mxu0 0.0
    %164 = vmatpush1.msra.mxu0 0.0
    %165 = vmatprep.subr.mxu0 0.0
    %166 = vmatpush1.msra.mxu0 0.0
    %167 = vmatprep.subr.mxu0 0.0
    %168 = vmatpush1.msra.mxu0 0.0
    %169 = vmatprep.subr.mxu0 0.0
    %170 = vmatpush1.msra.mxu0 0.0
    %171 = vmatprep.subr.mxu0 0.0
    %172 = vmatpush1.msra.mxu0 0.0
    %173 = vmatprep.subr.mxu0 0.0
    %174 = vmatpush1.msra.mxu0 0.0
    %175 = vmatprep.subr.mxu0 0.0
    %176 = vmatpush1.msra.mxu0 0.0
    %177 = vmatprep.subr.mxu0 0.0
    %178 = vmatpush1.msra.mxu0 0.0
    %179 = vmatprep.subr.mxu0 0.0
    %180 = vmatpush1.msra.mxu0 0.0
    %181 = vmatprep.subr.mxu0 0.0
    %182 = vmatpush1.msra.mxu0 0.0
    %183 = vmatprep.subr.mxu0 %v133
    %184 = vmatpush1.msra.mxu0 %v132
    %185 = vmatprep.subr.mxu0 %v130
    %186 = vmatpush1.msra.mxu0 %v129
    %187 = vmatprep.subr.mxu0 %v127
    %188 = vmatpush1.msra.mxu0 %v126
    %189 = vmatprep.subr.mxu0 %v124
    %190 = vmatpush1.msra.mxu0 %v123
    %191 = vmatprep.subr.mxu0 0.0
    %192 = vmatpush2.msra.mxu0 0.0
    %193 = vmatprep.subr.mxu0 0.0
    %194 = vmatpush2.msra.mxu0 0.0
    %195 = vmatprep.subr.mxu0 0.0
    %196 = vmatpush2.msra.mxu0 0.0
    %197 = vmatprep.subr.mxu0 0.0
    %198 = vmatpush2.msra.mxu0 0.0
    %199 = vmatprep.subr.mxu0 0.0
    %200 = vmatpush2.msra.mxu0 0.0
    %201 = vmatprep.subr.mxu0 0.0
    %202 = vmatpush2.msra.mxu0 0.0
    %203 = vmatprep.subr.mxu0 0.0
    %204 = vmatpush2.msra.mxu0 0.0
    %205 = vmatprep.subr.mxu0 0.0
    %206 = vmatpush2.msra.mxu0 0.0
    %207 = vmatprep.subr.mxu0 0.0
    %208 = vmatpush2.msra.mxu0 0.0
    %209 = vmatprep.subr.mxu0 0.0
    %210 = vmatpush2.msra.mxu0 0.0
    %211 = vmatprep.subr.mxu0 0.0
    %212 = vmatpush2.msra.mxu0 0.0
    %213 = vmatprep.subr.mxu0 0.0
    %214 = vmatpush2.msra.mxu0 0.0
    %215 = vmatprep.subr.mxu0 0.0
    %216 = vmatpush2.msra.mxu0 0.0
    %217 = vmatprep.subr.mxu0 0.0
    %218 = vmatpush2.msra.mxu0 0.0
    %219 = vmatprep.subr.mxu0 0.0
    %220 = vmatpush2.msra.mxu0 0.0
    %221 = vmatprep.subr.mxu0 0.0
    %222 = vmatpush2.msra.mxu0 0.0
    %223 = vmatprep.mubr.f32.mxu0 0.0
    %224 = vmatmul.mubr.f32.gmra.mxu0 %v154
    %v225 = vpop.f32.mrf.mxu0
    %v226 = vadd.f32 %v140, %v225
    %v227 = vpop.f32.mrf.mxu0
    %v228 = vadd.f32 %v144, %v227
    %229 = vmatprep.mubr.f32.mxu0 0.0
    %230 = vmatmul.mubr.f32.gmra.mxu0 %v157
    %v231 = vpop.f32.mrf.mxu0
    %v232 = vadd.f32 %v140, %v231
    %v233 = vpop.f32.mrf.mxu0
    %v234 = vadd.f32 %v144, %v233
    %235 = vdwg.mxu0
    %236 = vmatprep.subr.mxu0 0.0
    %237 = vmatpush1.msra.mxu0 0.0
    %238 = vmatprep.subr.mxu0 0.0
    %239 = vmatpush1.msra.mxu0 0.0
    %240 = vmatprep.subr.mxu0 0.0
    %241 = vmatpush1.msra.mxu0 0.0
    %242 = vmatprep.subr.mxu0 0.0
    %243 = vmatpush1.msra.mxu0 0.0
    %244 = vmatprep.subr.mxu0 0.0
    %245 = vmatpush1.msra.mxu0 0.0
    %246 = vmatprep.subr.mxu0 0.0
    %247 = vmatpush1.msra.mxu0 0.0
    %248 = vmatprep.subr.mxu0 0.0
    %249 = vmatpush1.msra.mxu0 0.0
    %250 = vmatprep.subr.mxu0 0.0
    %251 = vmatpush1.msra.mxu0 0.0
    %252 = vmatprep.subr.mxu0 0.0
    %253 = vmatpush1.msra.mxu0 0.0
    %254 = vmatprep.subr.mxu0 0.0
    %255 = vmatpush1.msra.mxu0 0.0
    %256 = vmatprep.subr.mxu0 0.0
    %257 = vmatpush1.msra.mxu0 0.0
    %258 = vmatprep.subr.mxu0 0.0
    %259 = vmatpush1.msra.mxu0 0.0
    %260 = vmatprep.subr.mxu0 0.0
    %261 = vmatpush1.msra.mxu0 %v134
    %262 = vmatprep.subr.mxu0 0.0
    %263 = vmatpush1.msra.mxu0 %v131
    %264 = vmatprep.subr.mxu0 0.0
    %265 = vmatpush1.msra.mxu0 %v128
    %266 = vmatprep.subr.mxu0 0.0
    %267 = vmatpush1.msra.mxu0 %v125
    %268 = vmatprep.subr.mxu0 0.0
    %269 = vmatpush2.msra.mxu0 0.0
    %270 = vmatprep.subr.mxu0 0.0
    %271 = vmatpush2.msra.mxu0 0.0
    %272 = vmatprep.subr.mxu0 0.0
    %273 = vmatpush2.msra.mxu0 0.0
    %274 = vmatprep.subr.mxu0 0.0
    %275 = vmatpush2.msra.mxu0 0.0
    %276 = vmatprep.subr.mxu0 0.0
    %277 = vmatpush2.msra.mxu0 0.0
    %278 = vmatprep.subr.mxu0 0.0
    %279 = vmatpush2.msra.mxu0 0.0
    %280 = vmatprep.subr.mxu0 0.0
    %281 = vmatpush2.msra.mxu0 0.0
    %282 = vmatprep.subr.mxu0 0.0
    %283 = vmatpush2.msra.mxu0 0.0
    %284 = vmatprep.subr.mxu0 0.0
    %285 = vmatpush2.msra.mxu0 0.0
    %286 = vmatprep.subr.mxu0 0.0
    %287 = vmatpush2.msra.mxu0 0.0
    %288 = vmatprep.subr.mxu0 0.0
    %289 = vmatpush2.msra.mxu0 0.0
    %290 = vmatprep.subr.mxu0 0.0
    %291 = vmatpush2.msra.mxu0 0.0
    %292 = vmatprep.subr.mxu0 0.0
    %293 = vmatpush2.msra.mxu0 0.0
    %294 = vmatprep.subr.mxu0 0.0
    %295 = vmatpush2.msra.mxu0 0.0
    %296 = vmatprep.subr.mxu0 0.0
    %297 = vmatpush2.msra.mxu0 0.0
    %298 = vmatprep.subr.mxu0 0.0
    %299 = vmatpush2.msra.mxu0 0.0
    %300 = vmatprep.mubr.f32.mxu0 0.0
    %301 = vmatmul.mubr.f32.gmra.mxu0 %v154
    %v302 = vpop.f32.mrf.mxu0
    %v303 = vadd.f32 %v148, %v302
    %v304 = vpop.f32.mrf.mxu0
    %305 = vmatprep.mubr.f32.mxu0 0.0
    %306 = vmatmul.mubr.f32.gmra.mxu0 %v157
    %v307 = vpop.f32.mrf.mxu0
    %v308 = vadd.f32 %v148, %v307
    %v309 = vpop.f32.mrf.mxu0
    %310 = vdwg.mxu0
    %v311 = vld [vmem:[#allocation8] sm:$0xff]
    %v312 = vld [vmem:[#allocation8 + $0x8] sm:$0xff]
    %v313 = vld [vmem:[#allocation8 + $0x10] sm:$0xff]
    %v314 = vld [vmem:[#allocation8 + $0x18] sm:$0xff]
    %v315 = vld [vmem:[#allocation8 + $0x20] sm:$0xff]
    %v316 = vld [vmem:[#allocation8 + $0x28] sm:$0xff]
    %v317 = vld [vmem:[#allocation8 + $0x30] sm:$0xff]
    %v318 = vld [vmem:[#allocation8 + $0x38] sm:$0xff]
    %v319 = vld [vmem:[#allocation8 + $0x40] sm:$0xff]
    %v320 = vld [vmem:[#allocation8 + $0x48] sm:$0xff]
    %v321 = vld [vmem:[#allocation8 + $0x50] sm:$0xff]
    %v322 = vld [vmem:[#allocation8 + $0x58] sm:$0xff]
    %v323 = vld [vmem:[#allocation8 + $0x60] sm:$0xff]
    %v324 = vld [vmem:[#allocation8 + $0x68] sm:$0xff]
    %v325 = vld [vmem:[#allocation8 + $0x70] sm:$0xff]
    %v326 = vld [vmem:[#allocation8 + $0x78] sm:$0xff]
    %v327 = vld [vmem:[#allocation8 + $0x80] sm:$0xff]
    %v328 = vld [vmem:[#allocation8 + $0x88] sm:$0xff]
    %v329 = vld [vmem:[#allocation8 + $0x90] sm:$0xff]
    %v330 = vld [vmem:[#allocation8 + $0x98] sm:$0xff]
    %v331 = vld [vmem:[#allocation8 + $0xa0] sm:$0xff]
    %v332 = vld [vmem:[#allocation8 + $0xa8] sm:$0xff]
    %v333 = vld [vmem:[#allocation8 + $0xb0] sm:$0xff]
    %v334 = vld [vmem:[#allocation8 + $0xb8] sm:$0xff]
    %v335 = vld [vmem:[#allocation8 + $0xc0] sm:$0xff]
    %v336 = vld [vmem:[#allocation8 + $0xc8] sm:$0xff]
    %v337 = vld [vmem:[#allocation8 + $0xd0] sm:$0xff]
    %v338 = vld [vmem:[#allocation8 + $0xd8] sm:$0xff]
    %v339 = vld [vmem:[#allocation8 + $0xe0] sm:$0xff]
    %v340 = vld [vmem:[#allocation8 + $0xe8] sm:$0xff]
    %v341 = vld [vmem:[#allocation8 + $0xf0] sm:$0xff]
    %v342 = vld [vmem:[#allocation8 + $0xf8] sm:$0xff]
    %v343 = vld [vmem:[#allocation8 + $0x100] sm:$0xff]
    %v344 = vld [vmem:[#allocation8 + $0x108] sm:$0xff]
    %v345 = vld [vmem:[#allocation8 + $0x110] sm:$0xff]
    %v346 = vld [vmem:[#allocation8 + $0x118] sm:$0xff]
    %v347 = vld [vmem:[#allocation8 + $0x120] sm:$0xff]
    %v348 = vld [vmem:[#allocation8 + $0x128] sm:$0xff]
    %v349 = vld [vmem:[#allocation8 + $0x130] sm:$0xff]
    %v350 = vld [vmem:[#allocation8 + $0x138] sm:$0xff]
    %v351 = vld [vmem:[#allocation8 + $0x140] sm:$0xff]
    %v352 = vld [vmem:[#allocation8 + $0x148] sm:$0xff]
    %v353 = vld [vmem:[#allocation8 + $0x150] sm:$0xff]
    %v354 = vld [vmem:[#allocation8 + $0x158] sm:$0xff]
    %v355 = vld [vmem:[#allocation8 + $0x160] sm:$0xff]
    %v356 = vld [vmem:[#allocation8 + $0x168] sm:$0xff]
    %v357 = vld [vmem:[#allocation8 + $0x170] sm:$0xff]
    %v358 = vld [vmem:[#allocation8 + $0x178] sm:$0xff]
    %v359 = vld [vmem:[%s4] sm:$0x1]
    %360 = vmatprep.subr.mxu0 %v357
    %361 = vmatpush1.msra.mxu0 %v356
    %362 = vmatprep.subr.mxu0 %v354
    %363 = vmatpush1.msra.mxu0 %v353
    %364 = vmatprep.subr.mxu0 %v351
    %365 = vmatpush1.msra.mxu0 %v350
    %366 = vmatprep.subr.mxu0 %v348
    %367 = vmatpush1.msra.mxu0 %v347
    %368 = vmatprep.subr.mxu0 %v345
    %369 = vmatpush1.msra.mxu0 %v344
    %370 = vmatprep.subr.mxu0 %v342
    %371 = vmatpush1.msra.mxu0 %v341
    %372 = vmatprep.subr.mxu0 %v339
    %373 = vmatpush1.msra.mxu0 %v338
    %374 = vmatprep.subr.mxu0 %v336
    %375 = vmatpush1.msra.mxu0 %v335
    %376 = vmatprep.subr.mxu0 %v333
    %377 = vmatpush1.msra.mxu0 %v332
    %378 = vmatprep.subr.mxu0 %v330
    %379 = vmatpush1.msra.mxu0 %v329
    %380 = vmatprep.subr.mxu0 %v327
    %381 = vmatpush1.msra.mxu0 %v326
    %382 = vmatprep.subr.mxu0 %v324
    %383 = vmatpush1.msra.mxu0 %v323
    %384 = vmatprep.subr.mxu0 %v321
    %385 = vmatpush1.msra.mxu0 %v320
    %386 = vmatprep.subr.mxu0 %v318
    %387 = vmatpush1.msra.mxu0 %v317
    %388 = vmatprep.subr.mxu0 %v315
    %389 = vmatpush1.msra.mxu0 %v314
    %390 = vmatprep.subr.mxu0 %v312
    %391 = vmatpush1.msra.mxu0 %v311
    %392 = vmatprep.subr.mxu0 0.0
    %393 = vmatpush2.msra.mxu0 0.0
    %394 = vmatprep.subr.mxu0 0.0
    %395 = vmatpush2.msra.mxu0 0.0
    %396 = vmatprep.subr.mxu0 0.0
    %397 = vmatpush2.msra.mxu0 0.0
    %398 = vmatprep.subr.mxu0 0.0
    %399 = vmatpush2.msra.mxu0 0.0
    %400 = vmatprep.subr.mxu0 0.0
    %401 = vmatpush2.msra.mxu0 0.0
    %402 = vmatprep.subr.mxu0 0.0
    %403 = vmatpush2.msra.mxu0 0.0
    %404 = vmatprep.subr.mxu0 0.0
    %405 = vmatpush2.msra.mxu0 0.0
    %406 = vmatprep.subr.mxu0 0.0
    %407 = vmatpush2.msra.mxu0 0.0
    %408 = vmatprep.subr.mxu0 0.0
    %409 = vmatpush2.msra.mxu0 0.0
    %410 = vmatprep.subr.mxu0 0.0
    %411 = vmatpush2.msra.mxu0 0.0
    %412 = vmatprep.subr.mxu0 0.0
    %413 = vmatpush2.msra.mxu0 0.0
    %414 = vmatprep.subr.mxu0 0.0
    %415 = vmatpush2.msra.mxu0 0.0
    %416 = vmatprep.subr.mxu0 0.0
    %417 = vmatpush2.msra.mxu0 0.0
    %418 = vmatprep.subr.mxu0 0.0
    %419 = vmatpush2.msra.mxu0 0.0
    %420 = vmatprep.subr.mxu0 0.0
    %421 = vmatpush2.msra.mxu0 0.0
    %422 = vmatprep.subr.mxu0 0.0
    %423 = vmatpush2.msra.mxu0 0.0
    %424 = vmatprep.mubr.f32.mxu0 0.0
    %425 = vmatmul.mubr.f32.gmra.mxu0 0.0
    %v426 = vpop.f32.mrf.mxu0
    %v427 = vadd.f32 0.0, %v426
    %v428 = vpop.f32.mrf.mxu0
    %v429 = vadd.f32 0.0, %v428
    %430 = vdwg.mxu0
    %431 = vmatprep.subr.mxu0 0.0
    %432 = vmatpush1.msra.mxu0 %v358
    %433 = vmatprep.subr.mxu0 0.0
    %434 = vmatpush1.msra.mxu0 %v355
    %435 = vmatprep.subr.mxu0 0.0
    %436 = vmatpush1.msra.mxu0 %v352
    %437 = vmatprep.subr.mxu0 0.0
    %438 = vmatpush1.msra.mxu0 %v349
    %439 = vmatprep.subr.mxu0 0.0
    %440 = vmatpush1.msra.mxu0 %v346
    %441 = vmatprep.subr.mxu0 0.0
    %442 = vmatpush1.msra.mxu0 %v343
    %443 = vmatprep.subr.mxu0 0.0
    %444 = vmatpush1.msra.mxu0 %v340
    %445 = vmatprep.subr.mxu0 0.0
    %446 = vmatpush1.msra.mxu0 %v337
    %447 = vmatprep.subr.mxu0 0.0
    %448 = vmatpush1.msra.mxu0 %v334
    %449 = vmatprep.subr.mxu0 0.0
    %450 = vmatpush1.msra.mxu0 %v331
    %451 = vmatprep.subr.mxu0 0.0
    %452 = vmatpush1.msra.mxu0 %v328
    %453 = vmatprep.subr.mxu0 0.0
    %454 = vmatpush1.msra.mxu0 %v325
    %455 = vmatprep.subr.mxu0 0.0
    %456 = vmatpush1.msra.mxu0 %v322
    %457 = vmatprep.subr.mxu0 0.0
    %458 = vmatpush1.msra.mxu0 %v319
    %459 = vmatprep.subr.mxu0 0.0
    %460 = vmatpush1.msra.mxu0 %v316
    %461 = vmatprep.subr.mxu0 0.0
    %462 = vmatpush1.msra.mxu0 %v313
    %463 = vmatprep.subr.mxu0 0.0
    %464 = vmatpush2.msra.mxu0 0.0
    %465 = vmatprep.subr.mxu0 0.0
    %466 = vmatpush2.msra.mxu0 0.0
    %467 = vmatprep.subr.mxu0 0.0
    %468 = vmatpush2.msra.mxu0 0.0
    %469 = vmatprep.subr.mxu0 0.0
    %470 = vmatpush2.msra.mxu0 0.0
    %471 = vmatprep.subr.mxu0 0.0
    %472 = vmatpush2.msra.mxu0 0.0
    %473 = vmatprep.subr.mxu0 0.0
    %474 = vmatpush2.msra.mxu0 0.0
    %475 = vmatprep.subr.mxu0 0.0
    %476 = vmatpush2.msra.mxu0 0.0
    %477 = vmatprep.subr.mxu0 0.0
    %478 = vmatpush2.msra.mxu0 0.0
    %479 = vmatprep.subr.mxu0 0.0
    %480 = vmatpush2.msra.mxu0 0.0
    %481 = vmatprep.subr.mxu0 0.0
    %482 = vmatpush2.msra.mxu0 0.0
    %483 = vmatprep.subr.mxu0 0.0
    %484 = vmatpush2.msra.mxu0 0.0
    %485 = vmatprep.subr.mxu0 0.0
    %486 = vmatpush2.msra.mxu0 0.0
    %487 = vmatprep.subr.mxu0 0.0
    %488 = vmatpush2.msra.mxu0 0.0
    %489 = vmatprep.subr.mxu0 0.0
    %490 = vmatpush2.msra.mxu0 0.0
    %491 = vmatprep.subr.mxu0 0.0
    %492 = vmatpush2.msra.mxu0 0.0
    %493 = vmatprep.subr.mxu0 0.0
    %494 = vmatpush2.msra.mxu0 0.0
    %495 = vmatprep.mubr.f32.mxu0 0.0
    %496 = vmatmul.mubr.f32.gmra.mxu0 0.0
    %v497 = vpop.f32.mrf.mxu0
    %v498 = vadd.f32 0.0, %v497
    %v499 = vpop.f32.mrf.mxu0
    %500 = vdwg.mxu0
    %v502 = vrot.slane %v427, 1
    %v505 = vadd.f32 %v226, %v427
    %v506 = vadd.f32 %v232, %v502
    %v507 = vxor.u32 %v505, 2147483648
    %v508 = vxor.u32 %v506, 2147483648
    %v509 = vmul.f32 %v507, 1.442695
    %v510 = vpow.pop %v509
    %v511 = vmul.f32 %v508, 1.442695
    %v512 = vpow.pop %v511
    %v513 = vadd.f32 %v510, 1.0
    %v514 = vadd.f32 %v512, 1.0
    %v515 = vrcp.pop %v513
    %v516 = vmul.f32 1.0, %v515
    %v517 = vrcp.pop %v514
    %v518 = vmul.f32 1.0, %v517
    %v520 = vrot.slane %v429, 1
    %v523 = vadd.f32 %v228, %v429
    %v524 = vadd.f32 %v234, %v520
    %v525 = vxor.u32 %v523, 2147483648
    %v526 = vxor.u32 %v524, 2147483648
    %v527 = vmul.f32 %v525, 1.442695
    %v528 = vpow.pop %v527
    %v529 = vmul.f32 %v526, 1.442695
    %v530 = vpow.pop %v529
    %v531 = vadd.f32 %v528, 1.0
    %v532 = vadd.f32 %v530, 1.0
    %v533 = vrcp.pop %v531
    %v534 = vmul.f32 1.0, %v533
    %v535 = vrcp.pop %v532
    %v536 = vmul.f32 1.0, %v535
    %v538 = vlaneseq
    %v539 = vshrl.u32 %v538, 7
    %v540 = vsub.s32 0, %v539
    %v541 = vrot.slane %v359, %v540
    %v543 = vadd.f32 %v498, %v541
    %v545 = vrot.slane %v543, 1
    %v548 = vmul.f32 %v516, %v543
    %v549 = vmul.f32 %v518, %v545
    %v550 = vadd.f32 %v303, %v548
    %v551 = vadd.f32 %v308, %v549
    %v552 = vtanh.pop %v550
    %v553 = vtanh.pop %v551
    %v554 = vsub.f32 0.0, %v552
    %v555 = vsub.f32 0.0, %v553
    %v556 = vmul.f32 %v534, %v554
    %v557 = vmul.f32 %v536, %v555
    %v558 = vadd.f32 %v552, %v556
    %v559 = vadd.f32 %v553, %v557
    %v562 = vrot.slane %v559, 7
    %vm563 = vcmask 1041409
    %v564 = vsel %vm563, %v562, %v558
    %566 = vst [vmem:[#allocation2] sm:$0x3] %v564
    %567 = vmatprep.subr.mxu0 %v357
    %568 = vmatpush1.msra.mxu0 %v356
    %569 = vmatprep.subr.mxu0 %v354
    %570 = vmatpush1.msra.mxu0 %v353
    %571 = vmatprep.subr.mxu0 %v351
    %572 = vmatpush1.msra.mxu0 %v350
    %573 = vmatprep.subr.mxu0 %v348
    %574 = vmatpush1.msra.mxu0 %v347
    %575 = vmatprep.subr.mxu0 %v345
    %576 = vmatpush1.msra.mxu0 %v344
    %577 = vmatprep.subr.mxu0 %v342
    %578 = vmatpush1.msra.mxu0 %v341
    %579 = vmatprep.subr.mxu0 %v339
    %580 = vmatpush1.msra.mxu0 %v338
    %581 = vmatprep.subr.mxu0 %v336
    %582 = vmatpush1.msra.mxu0 %v335
    %583 = vmatprep.subr.mxu0 %v333
    %584 = vmatpush1.msra.mxu0 %v332
    %585 = vmatprep.subr.mxu0 %v330
    %586 = vmatpush1.msra.mxu0 %v329
    %587 = vmatprep.subr.mxu0 %v327
    %588 = vmatpush1.msra.mxu0 %v326
    %589 = vmatprep.subr.mxu0 %v324
    %590 = vmatpush1.msra.mxu0 %v323
    %591 = vmatprep.subr.mxu0 %v321
    %592 = vmatpush1.msra.mxu0 %v320
    %593 = vmatprep.subr.mxu0 %v318
    %594 = vmatpush1.msra.mxu0 %v317
    %595 = vmatprep.subr.mxu0 %v315
    %596 = vmatpush1.msra.mxu0 %v314
    %597 = vmatprep.subr.mxu0 %v312
    %598 = vmatpush1.msra.mxu0 %v311
    %599 = vmatprep.subr.mxu0 0.0
    %600 = vmatpush2.msra.mxu0 0.0
    %601 = vmatprep.subr.mxu0 0.0
    %602 = vmatpush2.msra.mxu0 0.0
    %603 = vmatprep.subr.mxu0 0.0
    %604 = vmatpush2.msra.mxu0 0.0
    %605 = vmatprep.subr.mxu0 0.0
    %606 = vmatpush2.msra.mxu0 0.0
    %607 = vmatprep.subr.mxu0 0.0
    %608 = vmatpush2.msra.mxu0 0.0
    %609 = vmatprep.subr.mxu0 0.0
    %610 = vmatpush2.msra.mxu0 0.0
    %611 = vmatprep.subr.mxu0 0.0
    %612 = vmatpush2.msra.mxu0 0.0
    %613 = vmatprep.subr.mxu0 0.0
    %614 = vmatpush2.msra.mxu0 0.0
    %615 = vmatprep.subr.mxu0 0.0
    %616 = vmatpush2.msra.mxu0 0.0
    %617 = vmatprep.subr.mxu0 0.0
    %618 = vmatpush2.msra.mxu0 0.0
    %619 = vmatprep.subr.mxu0 0.0
    %620 = vmatpush2.msra.mxu0 0.0
    %621 = vmatprep.subr.mxu0 0.0
    %622 = vmatpush2.msra.mxu0 0.0
    %623 = vmatprep.subr.mxu0 0.0
    %624 = vmatpush2.msra.mxu0 0.0
    %625 = vmatprep.subr.mxu0 0.0
    %626 = vmatpush2.msra.mxu0 0.0
    %627 = vmatprep.subr.mxu0 0.0
    %628 = vmatpush2.msra.mxu0 0.0
    %629 = vmatprep.subr.mxu0 0.0
    %630 = vmatpush2.msra.mxu0 0.0
    %631 = vmatprep.mubr.f32.mxu0 0.0
    %632 = vmatmul.mubr.f32.gmra.mxu0 %v564
    %v633 = vpop.f32.mrf.mxu0
    %v634 = vadd.f32 0.0, %v633
    %v635 = vpop.f32.mrf.mxu0
    %v636 = vadd.f32 0.0, %v635
    %637 = vdwg.mxu0
    %638 = vmatprep.subr.mxu0 0.0
    %639 = vmatpush1.msra.mxu0 %v358
    %640 = vmatprep.subr.mxu0 0.0
    %641 = vmatpush1.msra.mxu0 %v355
    %642 = vmatprep.subr.mxu0 0.0
    %643 = vmatpush1.msra.mxu0 %v352
    %644 = vmatprep.subr.mxu0 0.0
    %645 = vmatpush1.msra.mxu0 %v349
    %646 = vmatprep.subr.mxu0 0.0
    %647 = vmatpush1.msra.mxu0 %v346
    %648 = vmatprep.subr.mxu0 0.0
    %649 = vmatpush1.msra.mxu0 %v343
    %650 = vmatprep.subr.mxu0 0.0
    %651 = vmatpush1.msra.mxu0 %v340
    %652 = vmatprep.subr.mxu0 0.0
    %653 = vmatpush1.msra.mxu0 %v337
    %654 = vmatprep.subr.mxu0 0.0
    %655 = vmatpush1.msra.mxu0 %v334
    %656 = vmatprep.subr.mxu0 0.0
    %657 = vmatpush1.msra.mxu0 %v331
    %658 = vmatprep.subr.mxu0 0.0
    %659 = vmatpush1.msra.mxu0 %v328
    %660 = vmatprep.subr.mxu0 0.0
    %661 = vmatpush1.msra.mxu0 %v325
    %662 = vmatprep.subr.mxu0 0.0
    %663 = vmatpush1.msra.mxu0 %v322
    %664 = vmatprep.subr.mxu0 0.0
    %665 = vmatpush1.msra.mxu0 %v319
    %666 = vmatprep.subr.mxu0 0.0
    %667 = vmatpush1.msra.mxu0 %v316
    %668 = vmatprep.subr.mxu0 0.0
    %669 = vmatpush1.msra.mxu0 %v313
    %670 = vmatprep.subr.mxu0 0.0
    %671 = vmatpush2.msra.mxu0 0.0
    %672 = vmatprep.subr.mxu0 0.0
    %673 = vmatpush2.msra.mxu0 0.0
    %674 = vmatprep.subr.mxu0 0.0
    %675 = vmatpush2.msra.mxu0 0.0
    %676 = vmatprep.subr.mxu0 0.0
    %677 = vmatpush2.msra.mxu0 0.0
    %678 = vmatprep.subr.mxu0 0.0
    %679 = vmatpush2.msra.mxu0 0.0
    %680 = vmatprep.subr.mxu0 0.0
    %681 = vmatpush2.msra.mxu0 0.0
    %682 = vmatprep.subr.mxu0 0.0
    %683 = vmatpush2.msra.mxu0 0.0
    %684 = vmatprep.subr.mxu0 0.0
    %685 = vmatpush2.msra.mxu0 0.0
    %686 = vmatprep.subr.mxu0 0.0
    %687 = vmatpush2.msra.mxu0 0.0
    %688 = vmatprep.subr.mxu0 0.0
    %689 = vmatpush2.msra.mxu0 0.0
    %690 = vmatprep.subr.mxu0 0.0
    %691 = vmatpush2.msra.mxu0 0.0
    %692 = vmatprep.subr.mxu0 0.0
    %693 = vmatpush2.msra.mxu0 0.0
    %694 = vmatprep.subr.mxu0 0.0
    %695 = vmatpush2.msra.mxu0 0.0
    %696 = vmatprep.subr.mxu0 0.0
    %697 = vmatpush2.msra.mxu0 0.0
    %698 = vmatprep.subr.mxu0 0.0
    %699 = vmatpush2.msra.mxu0 0.0
    %700 = vmatprep.subr.mxu0 0.0
    %701 = vmatpush2.msra.mxu0 0.0
    %702 = vmatprep.mubr.f32.mxu0 0.0
    %703 = vmatmul.mubr.f32.gmra.mxu0 %v564
    %v704 = vpop.f32.mrf.mxu0
    %v705 = vadd.f32 0.0, %v704
    %v706 = vpop.f32.mrf.mxu0
    %707 = vdwg.mxu0
    %v709 = vrot.slane %v634, 7
    %v712 = vadd.f32 %v226, %v709
    %v713 = vadd.f32 %v232, %v634
    %v714 = vxor.u32 %v712, 2147483648
    %v715 = vxor.u32 %v713, 2147483648
    %v716 = vmul.f32 %v714, 1.442695
    %v717 = vpow.pop %v716
    %v718 = vmul.f32 %v715, 1.442695
    %v719 = vpow.pop %v718
    %v720 = vadd.f32 %v717, 1.0
    %v721 = vadd.f32 %v719, 1.0
    %v722 = vrcp.pop %v720
    %v723 = vmul.f32 1.0, %v722
    %v724 = vrcp.pop %v721
    %v725 = vmul.f32 1.0, %v724
    %v727 = vrot.slane %v636, 7
    %v730 = vadd.f32 %v228, %v727
    %v731 = vadd.f32 %v234, %v636
    %v732 = vxor.u32 %v730, 2147483648
    %v733 = vxor.u32 %v731, 2147483648
    %v734 = vmul.f32 %v732, 1.442695
    %v735 = vpow.pop %v734
    %v736 = vmul.f32 %v733, 1.442695
    %v737 = vpow.pop %v736
    %v738 = vadd.f32 %v735, 1.0
    %v739 = vadd.f32 %v737, 1.0
    %v740 = vrcp.pop %v738
    %v741 = vmul.f32 1.0, %v740
    %v742 = vrcp.pop %v739
    %v743 = vmul.f32 1.0, %v742
    %v744 = vadd.f32 %v705, %v541
    %v746 = vrot.slane %v744, 7
    %v749 = vmul.f32 %v723, %v746
    %v750 = vmul.f32 %v725, %v744
    %v751 = vadd.f32 %v303, %v749
    %v752 = vadd.f32 %v308, %v750
    %v753 = vtanh.pop %v751
    %v754 = vtanh.pop %v752
    %v757 = vrot.slane %v753, 1
    %v758 = vrot.slane %v754, 1
    %v761 = vsub.f32 %v558, %v757
    %v762 = vsub.f32 %v559, %v758
    %v765 = vrot.slane %v761, 7
    %v766 = vrot.slane %v762, 7
    %v769 = vmul.f32 %v741, %v765
    %v770 = vmul.f32 %v743, %v766
    %v771 = vadd.f32 %v753, %v769
    %v772 = vadd.f32 %v754, %v770
    %v775 = vrot.slane %v772, 7
    %vm776 = vcmask 1042434
    %v777 = vsel %vm776, %v775, %v771
    %779 = vst [vmem:[#allocation2 + $0x1] sm:$0x6] %v777
    %v780 = vrot.slane %v771, 1
    %v781 = vsel %vm563, %v772, %v780
    %783 = vmatprep.subr.mxu0 %v357
    %784 = vmatpush1.msra.mxu0 %v356
    %785 = vmatprep.subr.mxu0 %v354
    %786 = vmatpush1.msra.mxu0 %v353
    %787 = vmatprep.subr.mxu0 %v351
    %788 = vmatpush1.msra.mxu0 %v350
    %789 = vmatprep.subr.mxu0 %v348
    %790 = vmatpush1.msra.mxu0 %v347
    %791 = vmatprep.subr.mxu0 %v345
    %792 = vmatpush1.msra.mxu0 %v344
    %793 = vmatprep.subr.mxu0 %v342
    %794 = vmatpush1.msra.mxu0 %v341
    %795 = vmatprep.subr.mxu0 %v339
    %796 = vmatpush1.msra.mxu0 %v338
    %797 = vmatprep.subr.mxu0 %v336
    %798 = vmatpush1.msra.mxu0 %v335
    %799 = vmatprep.subr.mxu0 %v333
    %800 = vmatpush1.msra.mxu0 %v332
    %801 = vmatprep.subr.mxu0 %v330
    %802 = vmatpush1.msra.mxu0 %v329
    %803 = vmatprep.subr.mxu0 %v327
    %804 = vmatpush1.msra.mxu0 %v326
    %805 = vmatprep.subr.mxu0 %v324
    %806 = vmatpush1.msra.mxu0 %v323
    %807 = vmatprep.subr.mxu0 %v321
    %808 = vmatpush1.msra.mxu0 %v320
    %809 = vmatprep.subr.mxu0 %v318
    %810 = vmatpush1.msra.mxu0 %v317
    %811 = vmatprep.subr.mxu0 %v315
    %812 = vmatpush1.msra.mxu0 %v314
    %813 = vmatprep.subr.mxu0 %v312
    %814 = vmatpush1.msra.mxu0 %v311
    %815 = vmatprep.subr.mxu0 0.0
    %816 = vmatpush2.msra.mxu0 0.0
    %817 = vmatprep.subr.mxu0 0.0
    %818 = vmatpush2.msra.mxu0 0.0
    %819 = vmatprep.subr.mxu0 0.0
    %820 = vmatpush2.msra.mxu0 0.0
    %821 = vmatprep.subr.mxu0 0.0
    %822 = vmatpush2.msra.mxu0 0.0
    %823 = vmatprep.subr.mxu0 0.0
    %824 = vmatpush2.msra.mxu0 0.0
    %825 = vmatprep.subr.mxu0 0.0
    %826 = vmatpush2.msra.mxu0 0.0
    %827 = vmatprep.subr.mxu0 0.0
    %828 = vmatpush2.msra.mxu0 0.0
    %829 = vmatprep.subr.mxu0 0.0
    %830 = vmatpush2.msra.mxu0 0.0
    %831 = vmatprep.subr.mxu0 0.0
    %832 = vmatpush2.msra.mxu0 0.0
    %833 = vmatprep.subr.mxu0 0.0
    %834 = vmatpush2.msra.mxu0 0.0
    %835 = vmatprep.subr.mxu0 0.0
    %836 = vmatpush2.msra.mxu0 0.0
    %837 = vmatprep.subr.mxu0 0.0
    %838 = vmatpush2.msra.mxu0 0.0
    %839 = vmatprep.subr.mxu0 0.0
    %840 = vmatpush2.msra.mxu0 0.0
    %841 = vmatprep.subr.mxu0 0.0
    %842 = vmatpush2.msra.mxu0 0.0
    %843 = vmatprep.subr.mxu0 0.0
    %844 = vmatpush2.msra.mxu0 0.0
    %845 = vmatprep.subr.mxu0 0.0
    %846 = vmatpush2.msra.mxu0 0.0
    %847 = vmatprep.mubr.f32.mxu0 0.0
    %848 = vmatmul.mubr.f32.gmra.mxu0 %v781
    %v849 = vpop.f32.mrf.mxu0
    %v850 = vadd.f32 0.0, %v849
    %v851 = vpop.f32.mrf.mxu0
    %v852 = vadd.f32 0.0, %v851
    %853 = vdwg.mxu0
    %854 = vmatprep.subr.mxu0 0.0
    %855 = vmatpush1.msra.mxu0 %v358
    %856 = vmatprep.subr.mxu0 0.0
    %857 = vmatpush1.msra.mxu0 %v355
    %858 = vmatprep.subr.mxu0 0.0
    %859 = vmatpush1.msra.mxu0 %v352
    %860 = vmatprep.subr.mxu0 0.0
    %861 = vmatpush1.msra.mxu0 %v349
    %862 = vmatprep.subr.mxu0 0.0
    %863 = vmatpush1.msra.mxu0 %v346
    %864 = vmatprep.subr.mxu0 0.0
    %865 = vmatpush1.msra.mxu0 %v343
    %866 = vmatprep.subr.mxu0 0.0
    %867 = vmatpush1.msra.mxu0 %v340
    %868 = vmatprep.subr.mxu0 0.0
    %869 = vmatpush1.msra.mxu0 %v337
    %870 = vmatprep.subr.mxu0 0.0
    %871 = vmatpush1.msra.mxu0 %v334
    %872 = vmatprep.subr.mxu0 0.0
    %873 = vmatpush1.msra.mxu0 %v331
    %874 = vmatprep.subr.mxu0 0.0
    %875 = vmatpush1.msra.mxu0 %v328
    %876 = vmatprep.subr.mxu0 0.0
    %877 = vmatpush1.msra.mxu0 %v325
    %878 = vmatprep.subr.mxu0 0.0
    %879 = vmatpush1.msra.mxu0 %v322
    %880 = vmatprep.subr.mxu0 0.0
    %881 = vmatpush1.msra.mxu0 %v319
    %882 = vmatprep.subr.mxu0 0.0
    %883 = vmatpush1.msra.mxu0 %v316
    %884 = vmatprep.subr.mxu0 0.0
    %885 = vmatpush1.msra.mxu0 %v313
    %886 = vmatprep.subr.mxu0 0.0
    %887 = vmatpush2.msra.mxu0 0.0
    %888 = vmatprep.subr.mxu0 0.0
    %889 = vmatpush2.msra.mxu0 0.0
    %890 = vmatprep.subr.mxu0 0.0
    %891 = vmatpush2.msra.mxu0 0.0
    %892 = vmatprep.subr.mxu0 0.0
    %893 = vmatpush2.msra.mxu0 0.0
    %894 = vmatprep.subr.mxu0 0.0
    %895 = vmatpush2.msra.mxu0 0.0
    %896 = vmatprep.subr.mxu0 0.0
    %897 = vmatpush2.msra.mxu0 0.0
    %898 = vmatprep.subr.mxu0 0.0
    %899 = vmatpush2.msra.mxu0 0.0
    %900 = vmatprep.subr.mxu0 0.0
    %901 = vmatpush2.msra.mxu0 0.0
    %902 = vmatprep.subr.mxu0 0.0
    %903 = vmatpush2.msra.mxu0 0.0
    %904 = vmatprep.subr.mxu0 0.0
    %905 = vmatpush2.msra.mxu0 0.0
    %906 = vmatprep.subr.mxu0 0.0
    %907 = vmatpush2.msra.mxu0 0.0
    %908 = vmatprep.subr.mxu0 0.0
    %909 = vmatpush2.msra.mxu0 0.0
    %910 = vmatprep.subr.mxu0 0.0
    %911 = vmatpush2.msra.mxu0 0.0
    %912 = vmatprep.subr.mxu0 0.0
    %913 = vmatpush2.msra.mxu0 0.0
    %914 = vmatprep.subr.mxu0 0.0
    %915 = vmatpush2.msra.mxu0 0.0
    %916 = vmatprep.subr.mxu0 0.0
    %917 = vmatpush2.msra.mxu0 0.0
    %918 = vmatprep.mubr.f32.mxu0 0.0
    %919 = vmatmul.mubr.f32.gmra.mxu0 %v781
    %v920 = vpop.f32.mrf.mxu0
    %v921 = vadd.f32 0.0, %v920
    %v922 = vpop.f32.mrf.mxu0
    %923 = vdwg.mxu0
    %v925 = vrot.slane %v850, 6
    %v926 = vrot.slane %v850, 7
    %v929 = vadd.f32 %v226, %v925
    %v930 = vadd.f32 %v232, %v926
    %v931 = vxor.u32 %v929, 2147483648
    %v932 = vxor.u32 %v930, 2147483648
    %v933 = vmul.f32 %v931, 1.442695
    %v934 = vpow.pop %v933
    %v935 = vmul.f32 %v932, 1.442695
    %v936 = vpow.pop %v935
    %v937 = vadd.f32 %v934, 1.0
    %v938 = vadd.f32 %v936, 1.0
    %v939 = vrcp.pop %v937
    %v940 = vmul.f32 1.0, %v939
    %v941 = vrcp.pop %v938
    %v942 = vmul.f32 1.0, %v941
    %v944 = vrot.slane %v852, 6
    %v945 = vrot.slane %v852, 7
    %v948 = vadd.f32 %v228, %v944
    %v949 = vadd.f32 %v234, %v945
    %v950 = vxor.u32 %v948, 2147483648
    %v951 = vxor.u32 %v949, 2147483648
    %v952 = vmul.f32 %v950, 1.442695
    %v953 = vpow.pop %v952
    %v954 = vmul.f32 %v951, 1.442695
    %v955 = vpow.pop %v954
    %v956 = vadd.f32 %v953, 1.0
    %v957 = vadd.f32 %v955, 1.0
    %v958 = vrcp.pop %v956
    %v959 = vmul.f32 1.0, %v958
    %v960 = vrcp.pop %v957
    %v961 = vmul.f32 1.0, %v960
    %v962 = vadd.f32 %v921, %v541
    %v964 = vrot.slane %v962, 6
    %v965 = vrot.slane %v962, 7
    %v968 = vmul.f32 %v940, %v964
    %v969 = vmul.f32 %v942, %v965
    %v970 = vadd.f32 %v303, %v968
    %v971 = vadd.f32 %v308, %v969
    %v972 = vtanh.pop %v970
    %v973 = vtanh.pop %v971
    %v976 = vrot.slane %v972, 1
    %v977 = vrot.slane %v973, 1
    %v980 = vsub.f32 %v771, %v976
    %v981 = vsub.f32 %v772, %v977
    %v984 = vrot.slane %v980, 7
    %v985 = vrot.slane %v981, 7
    %v988 = vmul.f32 %v959, %v984
    %v989 = vmul.f32 %v961, %v985
    %v990 = vadd.f32 %v972, %v988
    %v991 = vadd.f32 %v973, %v989
    %v994 = vrot.slane %v991, 7
    %vm995 = vcmask 1043459
    %v996 = vsel %vm995, %v994, %v990
    %998 = vst [vmem:[#allocation2 + $0x2] sm:$0xc] %v996
    %v999 = vrot.slane %v990, 2
    %v1000 = vrot.slane %v991, 1
    %v1001 = vsel %vm563, %v1000, %v999
    %1003 = vmatprep.subr.mxu0 %v357
    %1004 = vmatpush1.msra.mxu0 %v356
    %1005 = vmatprep.subr.mxu0 %v354
    %1006 = vmatpush1.msra.mxu0 %v353
    %1007 = vmatprep.subr.mxu0 %v351
    %1008 = vmatpush1.msra.mxu0 %v350
    %1009 = vmatprep.subr.mxu0 %v348
    %1010 = vmatpush1.msra.mxu0 %v347
    %1011 = vmatprep.subr.mxu0 %v345
    %1012 = vmatpush1.msra.mxu0 %v344
    %1013 = vmatprep.subr.mxu0 %v342
    %1014 = vmatpush1.msra.mxu0 %v341
    %1015 = vmatprep.subr.mxu0 %v339
    %1016 = vmatpush1.msra.mxu0 %v338
    %1017 = vmatprep.subr.mxu0 %v336
    %1018 = vmatpush1.msra.mxu0 %v335
    %1019 = vmatprep.subr.mxu0 %v333
    %1020 = vmatpush1.msra.mxu0 %v332
    %1021 = vmatprep.subr.mxu0 %v330
    %1022 = vmatpush1.msra.mxu0 %v329
    %1023 = vmatprep.subr.mxu0 %v327
    %1024 = vmatpush1.msra.mxu0 %v326
    %1025 = vmatprep.subr.mxu0 %v324
    %1026 = vmatpush1.msra.mxu0 %v323
    %1027 = vmatprep.subr.mxu0 %v321
    %1028 = vmatpush1.msra.mxu0 %v320
    %1029 = vmatprep.subr.mxu0 %v318
    %1030 = vmatpush1.msra.mxu0 %v317
    %1031 = vmatprep.subr.mxu0 %v315
    %1032 = vmatpush1.msra.mxu0 %v314
    %1033 = vmatprep.subr.mxu0 %v312
    %1034 = vmatpush1.msra.mxu0 %v311
    %1035 = vmatprep.subr.mxu0 0.0
    %1036 = vmatpush2.msra.mxu0 0.0
    %1037 = vmatprep.subr.mxu0 0.0
    %1038 = vmatpush2.msra.mxu0 0.0
    %1039 = vmatprep.subr.mxu0 0.0
    %1040 = vmatpush2.msra.mxu0 0.0
    %1041 = vmatprep.subr.mxu0 0.0
    %1042 = vmatpush2.msra.mxu0 0.0
    %1043 = vmatprep.subr.mxu0 0.0
    %1044 = vmatpush2.msra.mxu0 0.0
    %1045 = vmatprep.subr.mxu0 0.0
    %1046 = vmatpush2.msra.mxu0 0.0
    %1047 = vmatprep.subr.mxu0 0.0
    %1048 = vmatpush2.msra.mxu0 0.0
    %1049 = vmatprep.subr.mxu0 0.0
    %1050 = vmatpush2.msra.mxu0 0.0
    %1051 = vmatprep.subr.mxu0 0.0
    %1052 = vmatpush2.msra.mxu0 0.0
    %1053 = vmatprep.subr.mxu0 0.0
    %1054 = vmatpush2.msra.mxu0 0.0
    %1055 = vmatprep.subr.mxu0 0.0
    %1056 = vmatpush2.msra.mxu0 0.0
    %1057 = vmatprep.subr.mxu0 0.0
    %1058 = vmatpush2.msra.mxu0 0.0
    %1059 = vmatprep.subr.mxu0 0.0
    %1060 = vmatpush2.msra.mxu0 0.0
    %1061 = vmatprep.subr.mxu0 0.0
    %1062 = vmatpush2.msra.mxu0 0.0
    %1063 = vmatprep.subr.mxu0 0.0
    %1064 = vmatpush2.msra.mxu0 0.0
    %1065 = vmatprep.subr.mxu0 0.0
    %1066 = vmatpush2.msra.mxu0 0.0
    %1067 = vmatprep.mubr.f32.mxu0 0.0
    %1068 = vmatmul.mubr.f32.gmra.mxu0 %v1001
    %v1069 = vpop.f32.mrf.mxu0
    %v1070 = vadd.f32 0.0, %v1069
    %v1071 = vpop.f32.mrf.mxu0
    %v1072 = vadd.f32 0.0, %v1071
    %1073 = vdwg.mxu0
    %1074 = vmatprep.subr.mxu0 0.0
    %1075 = vmatpush1.msra.mxu0 %v358
    %1076 = vmatprep.subr.mxu0 0.0
    %1077 = vmatpush1.msra.mxu0 %v355
    %1078 = vmatprep.subr.mxu0 0.0
    %1079 = vmatpush1.msra.mxu0 %v352
    %1080 = vmatprep.subr.mxu0 0.0
    %1081 = vmatpush1.msra.mxu0 %v349
    %1082 = vmatprep.subr.mxu0 0.0
    %1083 = vmatpush1.msra.mxu0 %v346
    %1084 = vmatprep.subr.mxu0 0.0
    %1085 = vmatpush1.msra.mxu0 %v343
    %1086 = vmatprep.subr.mxu0 0.0
    %1087 = vmatpush1.msra.mxu0 %v340
    %1088 = vmatprep.subr.mxu0 0.0
    %1089 = vmatpush1.msra.mxu0 %v337
    %1090 = vmatprep.subr.mxu0 0.0
    %1091 = vmatpush1.msra.mxu0 %v334
    %1092 = vmatprep.subr.mxu0 0.0
    %1093 = vmatpush1.msra.mxu0 %v331
    %1094 = vmatprep.subr.mxu0 0.0
    %1095 = vmatpush1.msra.mxu0 %v328
    %1096 = vmatprep.subr.mxu0 0.0
    %1097 = vmatpush1.msra.mxu0 %v325
    %1098 = vmatprep.subr.mxu0 0.0
    %1099 = vmatpush1.msra.mxu0 %v322
    %1100 = vmatprep.subr.mxu0 0.0
    %1101 = vmatpush1.msra.mxu0 %v319
    %1102 = vmatprep.subr.mxu0 0.0
    %1103 = vmatpush1.msra.mxu0 %v316
    %1104 = vmatprep.subr.mxu0 0.0
    %1105 = vmatpush1.msra.mxu0 %v313
    %1106 = vmatprep.subr.mxu0 0.0
    %1107 = vmatpush2.msra.mxu0 0.0
    %1108 = vmatprep.subr.mxu0 0.0
    %1109 = vmatpush2.msra.mxu0 0.0
    %1110 = vmatprep.subr.mxu0 0.0
    %1111 = vmatpush2.msra.mxu0 0.0
    %1112 = vmatprep.subr.mxu0 0.0
    %1113 = vmatpush2.msra.mxu0 0.0
    %1114 = vmatprep.subr.mxu0 0.0
    %1115 = vmatpush2.msra.mxu0 0.0
    %1116 = vmatprep.subr.mxu0 0.0
    %1117 = vmatpush2.msra.mxu0 0.0
    %1118 = vmatprep.subr.mxu0 0.0
    %1119 = vmatpush2.msra.mxu0 0.0
    %1120 = vmatprep.subr.mxu0 0.0
    %1121 = vmatpush2.msra.mxu0 0.0
    %1122 = vmatprep.subr.mxu0 0.0
    %1123 = vmatpush2.msra.mxu0 0.0
    %1124 = vmatprep.subr.mxu0 0.0
    %1125 = vmatpush2.msra.mxu0 0.0
    %1126 = vmatprep.subr.mxu0 0.0
    %1127 = vmatpush2.msra.mxu0 0.0
    %1128 = vmatprep.subr.mxu0 0.0
    %1129 = vmatpush2.msra.mxu0 0.0
    %1130 = vmatprep.subr.mxu0 0.0
    %1131 = vmatpush2.msra.mxu0 0.0
    %1132 = vmatprep.subr.mxu0 0.0
    %1133 = vmatpush2.msra.mxu0 0.0
    %1134 = vmatprep.subr.mxu0 0.0
    %1135 = vmatpush2.msra.mxu0 0.0
    %1136 = vmatprep.subr.mxu0 0.0
    %1137 = vmatpush2.msra.mxu0 0.0
    %1138 = vmatprep.mubr.f32.mxu0 0.0
    %1139 = vmatmul.mubr.f32.gmra.mxu0 %v1001
    %v1140 = vpop.f32.mrf.mxu0
    %v1141 = vadd.f32 0.0, %v1140
    %v1142 = vpop.f32.mrf.mxu0
    %1143 = vdwg.mxu0
    %v1145 = vrot.slane %v1070, 5
    %v1146 = vrot.slane %v1070, 6
    %v1149 = vadd.f32 %v226, %v1145
    %v1150 = vadd.f32 %v232, %v1146
    %v1151 = vxor.u32 %v1149, 2147483648
    %v1152 = vxor.u32 %v1150, 2147483648
    %v1153 = vmul.f32 %v1151, 1.442695
    %v1154 = vpow.pop %v1153
    %v1155 = vmul.f32 %v1152, 1.442695
    %v1156 = vpow.pop %v1155
    %v1157 = vadd.f32 %v1154, 1.0
    %v1158 = vadd.f32 %v1156, 1.0
    %v1159 = vrcp.pop %v1157
    %v1160 = vmul.f32 1.0, %v1159
    %v1161 = vrcp.pop %v1158
    %v1162 = vmul.f32 1.0, %v1161
    %v1164 = vrot.slane %v1072, 5
    %v1165 = vrot.slane %v1072, 6
    %v1168 = vadd.f32 %v228, %v1164
    %v1169 = vadd.f32 %v234, %v1165
    %v1170 = vxor.u32 %v1168, 2147483648
    %v1171 = vxor.u32 %v1169, 2147483648
    %v1172 = vmul.f32 %v1170, 1.442695
    %v1173 = vpow.pop %v1172
    %v1174 = vmul.f32 %v1171, 1.442695
    %v1175 = vpow.pop %v1174
    %v1176 = vadd.f32 %v1173, 1.0
    %v1177 = vadd.f32 %v1175, 1.0
    %v1178 = vrcp.pop %v1176
    %v1179 = vmul.f32 1.0, %v1178
    %v1180 = vrcp.pop %v1177
    %v1181 = vmul.f32 1.0, %v1180
    %v1182 = vadd.f32 %v1141, %v541
    %v1184 = vrot.slane %v1182, 5
    %v1185 = vrot.slane %v1182, 6
    %v1188 = vmul.f32 %v1160, %v1184
    %v1189 = vmul.f32 %v1162, %v1185
    %v1190 = vadd.f32 %v303, %v1188
    %v1191 = vadd.f32 %v308, %v1189
    %v1192 = vtanh.pop %v1190
    %v1193 = vtanh.pop %v1191
    %v1196 = vrot.slane %v1192, 1
    %v1197 = vrot.slane %v1193, 1
    %v1200 = vsub.f32 %v990, %v1196
    %v1201 = vsub.f32 %v991, %v1197
    %v1204 = vrot.slane %v1200, 7
    %v1205 = vrot.slane %v1201, 7
    %v1208 = vmul.f32 %v1179, %v1204
    %v1209 = vmul.f32 %v1181, %v1205
    %v1210 = vadd.f32 %v1192, %v1208
    %v1211 = vadd.f32 %v1193, %v1209
    %v1214 = vrot.slane %v1211, 7
    %vm1215 = vcmask 1044484
    %v1216 = vsel %vm1215, %v1214, %v1210
    %1218 = vst [vmem:[#allocation2 + $0x3] sm:$0x18] %v1216
    %v1219 = vrot.slane %v1210, 3
    %v1220 = vrot.slane %v1211, 2
    %v1221 = vsel %vm563, %v1220, %v1219
    %1223 = vmatprep.subr.mxu0 %v357
    %1224 = vmatpush1.msra.mxu0 %v356
    %1225 = vmatprep.subr.mxu0 %v354
    %1226 = vmatpush1.msra.mxu0 %v353
    %1227 = vmatprep.subr.mxu0 %v351
    %1228 = vmatpush1.msra.mxu0 %v350
    %1229 = vmatprep.subr.mxu0 %v348
    %1230 = vmatpush1.msra.mxu0 %v347
    %1231 = vmatprep.subr.mxu0 %v345
    %1232 = vmatpush1.msra.mxu0 %v344
    %1233 = vmatprep.subr.mxu0 %v342
    %1234 = vmatpush1.msra.mxu0 %v341
    %1235 = vmatprep.subr.mxu0 %v339
    %1236 = vmatpush1.msra.mxu0 %v338
    %1237 = vmatprep.subr.mxu0 %v336
    %1238 = vmatpush1.msra.mxu0 %v335
    %1239 = vmatprep.subr.mxu0 %v333
    %1240 = vmatpush1.msra.mxu0 %v332
    %1241 = vmatprep.subr.mxu0 %v330
    %1242 = vmatpush1.msra.mxu0 %v329
    %1243 = vmatprep.subr.mxu0 %v327
    %1244 = vmatpush1.msra.mxu0 %v326
    %1245 = vmatprep.subr.mxu0 %v324
    %1246 = vmatpush1.msra.mxu0 %v323
    %1247 = vmatprep.subr.mxu0 %v321
    %1248 = vmatpush1.msra.mxu0 %v320
    %1249 = vmatprep.subr.mxu0 %v318
    %1250 = vmatpush1.msra.mxu0 %v317
    %1251 = vmatprep.subr.mxu0 %v315
    %1252 = vmatpush1.msra.mxu0 %v314
    %1253 = vmatprep.subr.mxu0 %v312
    %1254 = vmatpush1.msra.mxu0 %v311
    %1255 = vmatprep.subr.mxu0 0.0
    %1256 = vmatpush2.msra.mxu0 0.0
    %1257 = vmatprep.subr.mxu0 0.0
    %1258 = vmatpush2.msra.mxu0 0.0
    %1259 = vmatprep.subr.mxu0 0.0
    %1260 = vmatpush2.msra.mxu0 0.0
    %1261 = vmatprep.subr.mxu0 0.0
    %1262 = vmatpush2.msra.mxu0 0.0
    %1263 = vmatprep.subr.mxu0 0.0
    %1264 = vmatpush2.msra.mxu0 0.0
    %1265 = vmatprep.subr.mxu0 0.0
    %1266 = vmatpush2.msra.mxu0 0.0
    %1267 = vmatprep.subr.mxu0 0.0
    %1268 = vmatpush2.msra.mxu0 0.0
    %1269 = vmatprep.subr.mxu0 0.0
    %1270 = vmatpush2.msra.mxu0 0.0
    %1271 = vmatprep.subr.mxu0 0.0
    %1272 = vmatpush2.msra.mxu0 0.0
    %1273 = vmatprep.subr.mxu0 0.0
    %1274 = vmatpush2.msra.mxu0 0.0
    %1275 = vmatprep.subr.mxu0 0.0
    %1276 = vmatpush2.msra.mxu0 0.0
    %1277 = vmatprep.subr.mxu0 0.0
    %1278 = vmatpush2.msra.mxu0 0.0
    %1279 = vmatprep.subr.mxu0 0.0
    %1280 = vmatpush2.msra.mxu0 0.0
    %1281 = vmatprep.subr.mxu0 0.0
    %1282 = vmatpush2.msra.mxu0 0.0
    %1283 = vmatprep.subr.mxu0 0.0
    %1284 = vmatpush2.msra.mxu0 0.0
    %1285 = vmatprep.subr.mxu0 0.0
    %1286 = vmatpush2.msra.mxu0 0.0
    %1287 = vmatprep.mubr.f32.mxu0 0.0
    %1288 = vmatmul.mubr.f32.gmra.mxu0 %v1221
    %v1289 = vpop.f32.mrf.mxu0
    %v1290 = vadd.f32 0.0, %v1289
    %v1291 = vpop.f32.mrf.mxu0
    %v1292 = vadd.f32 0.0, %v1291
    %1293 = vdwg.mxu0
    %1294 = vmatprep.subr.mxu0 0.0
    %1295 = vmatpush1.msra.mxu0 %v358
    %1296 = vmatprep.subr.mxu0 0.0
    %1297 = vmatpush1.msra.mxu0 %v355
    %1298 = vmatprep.subr.mxu0 0.0
    %1299 = vmatpush1.msra.mxu0 %v352
    %1300 = vmatprep.subr.mxu0 0.0
    %1301 = vmatpush1.msra.mxu0 %v349
    %1302 = vmatprep.subr.mxu0 0.0
    %1303 = vmatpush1.msra.mxu0 %v346
    %1304 = vmatprep.subr.mxu0 0.0
    %1305 = vmatpush1.msra.mxu0 %v343
    %1306 = vmatprep.subr.mxu0 0.0
    %1307 = vmatpush1.msra.mxu0 %v340
    %1308 = vmatprep.subr.mxu0 0.0
    %1309 = vmatpush1.msra.mxu0 %v337
    %1310 = vmatprep.subr.mxu0 0.0
    %1311 = vmatpush1.msra.mxu0 %v334
    %1312 = vmatprep.subr.mxu0 0.0
    %1313 = vmatpush1.msra.mxu0 %v331
    %1314 = vmatprep.subr.mxu0 0.0
    %1315 = vmatpush1.msra.mxu0 %v328
    %1316 = vmatprep.subr.mxu0 0.0
    %1317 = vmatpush1.msra.mxu0 %v325
    %1318 = vmatprep.subr.mxu0 0.0
    %1319 = vmatpush1.msra.mxu0 %v322
    %1320 = vmatprep.subr.mxu0 0.0
    %1321 = vmatpush1.msra.mxu0 %v319
    %1322 = vmatprep.subr.mxu0 0.0
    %1323 = vmatpush1.msra.mxu0 %v316
    %1324 = vmatprep.subr.mxu0 0.0
    %1325 = vmatpush1.msra.mxu0 %v313
    %1326 = vmatprep.subr.mxu0 0.0
    %1327 = vmatpush2.msra.mxu0 0.0
    %1328 = vmatprep.subr.mxu0 0.0
    %1329 = vmatpush2.msra.mxu0 0.0
    %1330 = vmatprep.subr.mxu0 0.0
    %1331 = vmatpush2.msra.mxu0 0.0
    %1332 = vmatprep.subr.mxu0 0.0
    %1333 = vmatpush2.msra.mxu0 0.0
    %1334 = vmatprep.subr.mxu0 0.0
    %1335 = vmatpush2.msra.mxu0 0.0
    %1336 = vmatprep.subr.mxu0 0.0
    %1337 = vmatpush2.msra.mxu0 0.0
    %1338 = vmatprep.subr.mxu0 0.0
    %1339 = vmatpush2.msra.mxu0 0.0
    %1340 = vmatprep.subr.mxu0 0.0
    %1341 = vmatpush2.msra.mxu0 0.0
    %1342 = vmatprep.subr.mxu0 0.0
    %1343 = vmatpush2.msra.mxu0 0.0
    %1344 = vmatprep.subr.mxu0 0.0
    %1345 = vmatpush2.msra.mxu0 0.0
    %1346 = vmatprep.subr.mxu0 0.0
    %1347 = vmatpush2.msra.mxu0 0.0
    %1348 = vmatprep.subr.mxu0 0.0
    %1349 = vmatpush2.msra.mxu0 0.0
    %1350 = vmatprep.subr.mxu0 0.0
    %1351 = vmatpush2.msra.mxu0 0.0
    %1352 = vmatprep.subr.mxu0 0.0
    %1353 = vmatpush2.msra.mxu0 0.0
    %1354 = vmatprep.subr.mxu0 0.0
    %1355 = vmatpush2.msra.mxu0 0.0
    %1356 = vmatprep.subr.mxu0 0.0
    %1357 = vmatpush2.msra.mxu0 0.0
    %1358 = vmatprep.mubr.f32.mxu0 0.0
    %1359 = vmatmul.mubr.f32.gmra.mxu0 %v1221
    %v1360 = vpop.f32.mrf.mxu0
    %v1361 = vadd.f32 0.0, %v1360
    %v1362 = vpop.f32.mrf.mxu0
    %1363 = vdwg.mxu0
    %v1365 = vrot.slane %v1290, 4
    %v1366 = vrot.slane %v1290, 5
    %v1369 = vadd.f32 %v226, %v1365
    %v1370 = vadd.f32 %v232, %v1366
    %v1371 = vxor.u32 %v1369, 2147483648
    %v1372 = vxor.u32 %v1370, 2147483648
    %v1373 = vmul.f32 %v1371, 1.442695
    %v1374 = vpow.pop %v1373
    %v1375 = vmul.f32 %v1372, 1.442695
    %v1376 = vpow.pop %v1375
    %v1377 = vadd.f32 %v1374, 1.0
    %v1378 = vadd.f32 %v1376, 1.0
    %v1379 = vrcp.pop %v1377
    %v1380 = vmul.f32 1.0, %v1379
    %v1381 = vrcp.pop %v1378
    %v1382 = vmul.f32 1.0, %v1381
    %v1384 = vrot.slane %v1292, 4
    %v1385 = vrot.slane %v1292, 5
    %v1388 = vadd.f32 %v228, %v1384
    %v1389 = vadd.f32 %v234, %v1385
    %v1390 = vxor.u32 %v1388, 2147483648
    %v1391 = vxor.u32 %v1389, 2147483648
    %v1392 = vmul.f32 %v1390, 1.442695
    %v1393 = vpow.pop %v1392
    %v1394 = vmul.f32 %v1391, 1.442695
    %v1395 = vpow.pop %v1394
    %v1396 = vadd.f32 %v1393, 1.0
    %v1397 = vadd.f32 %v1395, 1.0
    %v1398 = vrcp.pop %v1396
    %v1399 = vmul.f32 1.0, %v1398
    %v1400 = vrcp.pop %v1397
    %v1401 = vmul.f32 1.0, %v1400
    %v1402 = vadd.f32 %v1361, %v541
    %v1404 = vrot.slane %v1402, 4
    %v1405 = vrot.slane %v1402, 5
    %v1408 = vmul.f32 %v1380, %v1404
    %v1409 = vmul.f32 %v1382, %v1405
    %v1410 = vadd.f32 %v303, %v1408
    %v1411 = vadd.f32 %v308, %v1409
    %v1412 = vtanh.pop %v1410
    %v1413 = vtanh.pop %v1411
    %v1416 = vrot.slane %v1412, 1
    %v1417 = vrot.slane %v1413, 1
    %v1420 = vsub.f32 %v1210, %v1416
    %v1421 = vsub.f32 %v1211, %v1417
    %v1424 = vrot.slane %v1420, 7
    %v1425 = vrot.slane %v1421, 7
    %v1428 = vmul.f32 %v1399, %v1424
    %v1429 = vmul.f32 %v1401, %v1425
    %v1430 = vadd.f32 %v1412, %v1428
    %v1431 = vadd.f32 %v1413, %v1429
    %v1434 = vrot.slane %v1431, 7
    %vm1435 = vcmask 1045509
    %v1436 = vsel %vm1435, %v1434, %v1430
    %1438 = vst [vmem:[#allocation2 + $0x4] sm:$0x30] %v1436
    %v1439 = vrot.slane %v1430, 4
    %v1440 = vrot.slane %v1431, 3
    %v1441 = vsel %vm563, %v1440, %v1439
    %1443 = vmatprep.subr.mxu0 %v357
    %1444 = vmatpush1.msra.mxu0 %v356
    %1445 = vmatprep.subr.mxu0 %v354
    %1446 = vmatpush1.msra.mxu0 %v353
    %1447 = vmatprep.subr.mxu0 %v351
    %1448 = vmatpush1.msra.mxu0 %v350
    %1449 = vmatprep.subr.mxu0 %v348
    %1450 = vmatpush1.msra.mxu0 %v347
    %1451 = vmatprep.subr.mxu0 %v345
    %1452 = vmatpush1.msra.mxu0 %v344
    %1453 = vmatprep.subr.mxu0 %v342
    %1454 = vmatpush1.msra.mxu0 %v341
    %1455 = vmatprep.subr.mxu0 %v339
    %1456 = vmatpush1.msra.mxu0 %v338
    %1457 = vmatprep.subr.mxu0 %v336
    %1458 = vmatpush1.msra.mxu0 %v335
    %1459 = vmatprep.subr.mxu0 %v333
    %1460 = vmatpush1.msra.mxu0 %v332
    %1461 = vmatprep.subr.mxu0 %v330
    %1462 = vmatpush1.msra.mxu0 %v329
    %1463 = vmatprep.subr.mxu0 %v327
    %1464 = vmatpush1.msra.mxu0 %v326
    %1465 = vmatprep.subr.mxu0 %v324
    %1466 = vmatpush1.msra.mxu0 %v323
    %1467 = vmatprep.subr.mxu0 %v321
    %1468 = vmatpush1.msra.mxu0 %v320
    %1469 = vmatprep.subr.mxu0 %v318
    %1470 = vmatpush1.msra.mxu0 %v317
    %1471 = vmatprep.subr.mxu0 %v315
    %1472 = vmatpush1.msra.mxu0 %v314
    %1473 = vmatprep.subr.mxu0 %v312
    %1474 = vmatpush1.msra.mxu0 %v311
    %1475 = vmatprep.subr.mxu0 0.0
    %1476 = vmatpush2.msra.mxu0 0.0
    %1477 = vmatprep.subr.mxu0 0.0
    %1478 = vmatpush2.msra.mxu0 0.0
    %1479 = vmatprep.subr.mxu0 0.0
    %1480 = vmatpush2.msra.mxu0 0.0
    %1481 = vmatprep.subr.mxu0 0.0
    %1482 = vmatpush2.msra.mxu0 0.0
    %1483 = vmatprep.subr.mxu0 0.0
    %1484 = vmatpush2.msra.mxu0 0.0
    %1485 = vmatprep.subr.mxu0 0.0
    %1486 = vmatpush2.msra.mxu0 0.0
    %1487 = vmatprep.subr.mxu0 0.0
    %1488 = vmatpush2.msra.mxu0 0.0
    %1489 = vmatprep.subr.mxu0 0.0
    %1490 = vmatpush2.msra.mxu0 0.0
    %1491 = vmatprep.subr.mxu0 0.0
    %1492 = vmatpush2.msra.mxu0 0.0
    %1493 = vmatprep.subr.mxu0 0.0
    %1494 = vmatpush2.msra.mxu0 0.0
    %1495 = vmatprep.subr.mxu0 0.0
    %1496 = vmatpush2.msra.mxu0 0.0
    %1497 = vmatprep.subr.mxu0 0.0
    %1498 = vmatpush2.msra.mxu0 0.0
    %1499 = vmatprep.subr.mxu0 0.0
    %1500 = vmatpush2.msra.mxu0 0.0
    %1501 = vmatprep.subr.mxu0 0.0
    %1502 = vmatpush2.msra.mxu0 0.0
    %1503 = vmatprep.subr.mxu0 0.0
    %1504 = vmatpush2.msra.mxu0 0.0
    %1505 = vmatprep.subr.mxu0 0.0
    %1506 = vmatpush2.msra.mxu0 0.0
    %1507 = vmatprep.mubr.f32.mxu0 0.0
    %1508 = vmatmul.mubr.f32.gmra.mxu0 %v1441
    %v1509 = vpop.f32.mrf.mxu0
    %v1510 = vadd.f32 0.0, %v1509
    %v1511 = vpop.f32.mrf.mxu0
    %v1512 = vadd.f32 0.0, %v1511
    %1513 = vdwg.mxu0
    %1514 = vmatprep.subr.mxu0 0.0
    %1515 = vmatpush1.msra.mxu0 %v358
    %1516 = vmatprep.subr.mxu0 0.0
    %1517 = vmatpush1.msra.mxu0 %v355
    %1518 = vmatprep.subr.mxu0 0.0
    %1519 = vmatpush1.msra.mxu0 %v352
    %1520 = vmatprep.subr.mxu0 0.0
    %1521 = vmatpush1.msra.mxu0 %v349
    %1522 = vmatprep.subr.mxu0 0.0
    %1523 = vmatpush1.msra.mxu0 %v346
    %1524 = vmatprep.subr.mxu0 0.0
    %1525 = vmatpush1.msra.mxu0 %v343
    %1526 = vmatprep.subr.mxu0 0.0
    %1527 = vmatpush1.msra.mxu0 %v340
    %1528 = vmatprep.subr.mxu0 0.0
    %1529 = vmatpush1.msra.mxu0 %v337
    %1530 = vmatprep.subr.mxu0 0.0
    %1531 = vmatpush1.msra.mxu0 %v334
    %1532 = vmatprep.subr.mxu0 0.0
    %1533 = vmatpush1.msra.mxu0 %v331
    %1534 = vmatprep.subr.mxu0 0.0
    %1535 = vmatpush1.msra.mxu0 %v328
    %1536 = vmatprep.subr.mxu0 0.0
    %1537 = vmatpush1.msra.mxu0 %v325
    %1538 = vmatprep.subr.mxu0 0.0
    %1539 = vmatpush1.msra.mxu0 %v322
    %1540 = vmatprep.subr.mxu0 0.0
    %1541 = vmatpush1.msra.mxu0 %v319
    %1542 = vmatprep.subr.mxu0 0.0
    %1543 = vmatpush1.msra.mxu0 %v316
    %1544 = vmatprep.subr.mxu0 0.0
    %1545 = vmatpush1.msra.mxu0 %v313
    %1546 = vmatprep.subr.mxu0 0.0
    %1547 = vmatpush2.msra.mxu0 0.0
    %1548 = vmatprep.subr.mxu0 0.0
    %1549 = vmatpush2.msra.mxu0 0.0
    %1550 = vmatprep.subr.mxu0 0.0
    %1551 = vmatpush2.msra.mxu0 0.0
    %1552 = vmatprep.subr.mxu0 0.0
    %1553 = vmatpush2.msra.mxu0 0.0
    %1554 = vmatprep.subr.mxu0 0.0
    %1555 = vmatpush2.msra.mxu0 0.0
    %1556 = vmatprep.subr.mxu0 0.0
    %1557 = vmatpush2.msra.mxu0 0.0
    %1558 = vmatprep.subr.mxu0 0.0
    %1559 = vmatpush2.msra.mxu0 0.0
    %1560 = vmatprep.subr.mxu0 0.0
    %1561 = vmatpush2.msra.mxu0 0.0
    %1562 = vmatprep.subr.mxu0 0.0
    %1563 = vmatpush2.msra.mxu0 0.0
    %1564 = vmatprep.subr.mxu0 0.0
    %1565 = vmatpush2.msra.mxu0 0.0
    %1566 = vmatprep.subr.mxu0 0.0
    %1567 = vmatpush2.msra.mxu0 0.0
    %1568 = vmatprep.subr.mxu0 0.0
    %1569 = vmatpush2.msra.mxu0 0.0
    %1570 = vmatprep.subr.mxu0 0.0
    %1571 = vmatpush2.msra.mxu0 0.0
    %1572 = vmatprep.subr.mxu0 0.0
    %1573 = vmatpush2.msra.mxu0 0.0
    %1574 = vmatprep.subr.mxu0 0.0
    %1575 = vmatpush2.msra.mxu0 0.0
    %1576 = vmatprep.subr.mxu0 0.0
    %1577 = vmatpush2.msra.mxu0 0.0
    %1578 = vmatprep.mubr.f32.mxu0 0.0
    %1579 = vmatmul.mubr.f32.gmra.mxu0 %v1441
    %v1580 = vpop.f32.mrf.mxu0
    %v1581 = vadd.f32 0.0, %v1580
    %v1582 = vpop.f32.mrf.mxu0
    %1583 = vdwg.mxu0
    %v1585 = vrot.slane %v1510, 3
    %v1586 = vrot.slane %v1510, 4
    %v1589 = vadd.f32 %v226, %v1585
    %v1590 = vadd.f32 %v232, %v1586
    %v1591 = vxor.u32 %v1589, 2147483648
    %v1592 = vxor.u32 %v1590, 2147483648
    %v1593 = vmul.f32 %v1591, 1.442695
    %v1594 = vpow.pop %v1593
    %v1595 = vmul.f32 %v1592, 1.442695
    %v1596 = vpow.pop %v1595
    %v1597 = vadd.f32 %v1594, 1.0
    %v1598 = vadd.f32 %v1596, 1.0
    %v1599 = vrcp.pop %v1597
    %v1600 = vmul.f32 1.0, %v1599
    %v1601 = vrcp.pop %v1598
    %v1602 = vmul.f32 1.0, %v1601
    %v1604 = vrot.slane %v1512, 3
    %v1605 = vrot.slane %v1512, 4
    %v1608 = vadd.f32 %v228, %v1604
    %v1609 = vadd.f32 %v234, %v1605
    %v1610 = vxor.u32 %v1608, 2147483648
    %v1611 = vxor.u32 %v1609, 2147483648
    %v1612 = vmul.f32 %v1610, 1.442695
    %v1613 = vpow.pop %v1612
    %v1614 = vmul.f32 %v1611, 1.442695
    %v1615 = vpow.pop %v1614
    %v1616 = vadd.f32 %v1613, 1.0
    %v1617 = vadd.f32 %v1615, 1.0
    %v1618 = vrcp.pop %v1616
    %v1619 = vmul.f32 1.0, %v1618
    %v1620 = vrcp.pop %v1617
    %v1621 = vmul.f32 1.0, %v1620
    %v1622 = vadd.f32 %v1581, %v541
    %v1624 = vrot.slane %v1622, 3
    %v1625 = vrot.slane %v1622, 4
    %v1628 = vmul.f32 %v1600, %v1624
    %v1629 = vmul.f32 %v1602, %v1625
    %v1630 = vadd.f32 %v303, %v1628
    %v1631 = vadd.f32 %v308, %v1629
    %v1632 = vtanh.pop %v1630
    %v1633 = vtanh.pop %v1631
    %v1636 = vrot.slane %v1632, 1
    %v1637 = vrot.slane %v1633, 1
    %v1640 = vsub.f32 %v1430, %v1636
    %v1641 = vsub.f32 %v1431, %v1637
    %v1644 = vrot.slane %v1640, 7
    %v1645 = vrot.slane %v1641, 7
    %v1648 = vmul.f32 %v1619, %v1644
    %v1649 = vmul.f32 %v1621, %v1645
    %v1650 = vadd.f32 %v1632, %v1648
    %v1651 = vadd.f32 %v1633, %v1649
    %v1654 = vrot.slane %v1651, 7
    %vm1655 = vcmask 1046534
    %v1656 = vsel %vm1655, %v1654, %v1650
    %1658 = vst [vmem:[#allocation2 + $0x5] sm:$0x60] %v1656
    %v1659 = vrot.slane %v1650, 5
    %v1660 = vrot.slane %v1651, 4
    %v1661 = vsel %vm563, %v1660, %v1659
    %1663 = vmatprep.subr.mxu0 %v357
    %1664 = vmatpush1.msra.mxu0 %v356
    %1665 = vmatprep.subr.mxu0 %v354
    %1666 = vmatpush1.msra.mxu0 %v353
    %1667 = vmatprep.subr.mxu0 %v351
    %1668 = vmatpush1.msra.mxu0 %v350
    %1669 = vmatprep.subr.mxu0 %v348
    %1670 = vmatpush1.msra.mxu0 %v347
    %1671 = vmatprep.subr.mxu0 %v345
    %1672 = vmatpush1.msra.mxu0 %v344
    %1673 = vmatprep.subr.mxu0 %v342
    %1674 = vmatpush1.msra.mxu0 %v341
    %1675 = vmatprep.subr.mxu0 %v339
    %1676 = vmatpush1.msra.mxu0 %v338
    %1677 = vmatprep.subr.mxu0 %v336
    %1678 = vmatpush1.msra.mxu0 %v335
    %1679 = vmatprep.subr.mxu0 %v333
    %1680 = vmatpush1.msra.mxu0 %v332
    %1681 = vmatprep.subr.mxu0 %v330
    %1682 = vmatpush1.msra.mxu0 %v329
    %1683 = vmatprep.subr.mxu0 %v327
    %1684 = vmatpush1.msra.mxu0 %v326
    %1685 = vmatprep.subr.mxu0 %v324
    %1686 = vmatpush1.msra.mxu0 %v323
    %1687 = vmatprep.subr.mxu0 %v321
    %1688 = vmatpush1.msra.mxu0 %v320
    %1689 = vmatprep.subr.mxu0 %v318
    %1690 = vmatpush1.msra.mxu0 %v317
    %1691 = vmatprep.subr.mxu0 %v315
    %1692 = vmatpush1.msra.mxu0 %v314
    %1693 = vmatprep.subr.mxu0 %v312
    %1694 = vmatpush1.msra.mxu0 %v311
    %1695 = vmatprep.subr.mxu0 0.0
    %1696 = vmatpush2.msra.mxu0 0.0
    %1697 = vmatprep.subr.mxu0 0.0
    %1698 = vmatpush2.msra.mxu0 0.0
    %1699 = vmatprep.subr.mxu0 0.0
    %1700 = vmatpush2.msra.mxu0 0.0
    %1701 = vmatprep.subr.mxu0 0.0
    %1702 = vmatpush2.msra.mxu0 0.0
    %1703 = vmatprep.subr.mxu0 0.0
    %1704 = vmatpush2.msra.mxu0 0.0
    %1705 = vmatprep.subr.mxu0 0.0
    %1706 = vmatpush2.msra.mxu0 0.0
    %1707 = vmatprep.subr.mxu0 0.0
    %1708 = vmatpush2.msra.mxu0 0.0
    %1709 = vmatprep.subr.mxu0 0.0
    %1710 = vmatpush2.msra.mxu0 0.0
    %1711 = vmatprep.subr.mxu0 0.0
    %1712 = vmatpush2.msra.mxu0 0.0
    %1713 = vmatprep.subr.mxu0 0.0
    %1714 = vmatpush2.msra.mxu0 0.0
    %1715 = vmatprep.subr.mxu0 0.0
    %1716 = vmatpush2.msra.mxu0 0.0
    %1717 = vmatprep.subr.mxu0 0.0
    %1718 = vmatpush2.msra.mxu0 0.0
    %1719 = vmatprep.subr.mxu0 0.0
    %1720 = vmatpush2.msra.mxu0 0.0
    %1721 = vmatprep.subr.mxu0 0.0
    %1722 = vmatpush2.msra.mxu0 0.0
    %1723 = vmatprep.subr.mxu0 0.0
    %1724 = vmatpush2.msra.mxu0 0.0
    %1725 = vmatprep.subr.mxu0 0.0
    %1726 = vmatpush2.msra.mxu0 0.0
    %1727 = vmatprep.mubr.f32.mxu0 0.0
    %1728 = vmatmul.mubr.f32.gmra.mxu0 %v1661
    %v1729 = vpop.f32.mrf.mxu0
    %v1730 = vadd.f32 0.0, %v1729
    %v1731 = vpop.f32.mrf.mxu0
    %v1732 = vadd.f32 0.0, %v1731
    %1733 = vdwg.mxu0
    %1734 = vmatprep.subr.mxu0 0.0
    %1735 = vmatpush1.msra.mxu0 %v358
    %1736 = vmatprep.subr.mxu0 0.0
    %1737 = vmatpush1.msra.mxu0 %v355
    %1738 = vmatprep.subr.mxu0 0.0
    %1739 = vmatpush1.msra.mxu0 %v352
    %1740 = vmatprep.subr.mxu0 0.0
    %1741 = vmatpush1.msra.mxu0 %v349
    %1742 = vmatprep.subr.mxu0 0.0
    %1743 = vmatpush1.msra.mxu0 %v346
    %1744 = vmatprep.subr.mxu0 0.0
    %1745 = vmatpush1.msra.mxu0 %v343
    %1746 = vmatprep.subr.mxu0 0.0
    %1747 = vmatpush1.msra.mxu0 %v340
    %1748 = vmatprep.subr.mxu0 0.0
    %1749 = vmatpush1.msra.mxu0 %v337
    %1750 = vmatprep.subr.mxu0 0.0
    %1751 = vmatpush1.msra.mxu0 %v334
    %1752 = vmatprep.subr.mxu0 0.0
    %1753 = vmatpush1.msra.mxu0 %v331
    %1754 = vmatprep.subr.mxu0 0.0
    %1755 = vmatpush1.msra.mxu0 %v328
    %1756 = vmatprep.subr.mxu0 0.0
    %1757 = vmatpush1.msra.mxu0 %v325
    %1758 = vmatprep.subr.mxu0 0.0
    %1759 = vmatpush1.msra.mxu0 %v322
    %1760 = vmatprep.subr.mxu0 0.0
    %1761 = vmatpush1.msra.mxu0 %v319
    %1762 = vmatprep.subr.mxu0 0.0
    %1763 = vmatpush1.msra.mxu0 %v316
    %1764 = vmatprep.subr.mxu0 0.0
    %1765 = vmatpush1.msra.mxu0 %v313
    %1766 = vmatprep.subr.mxu0 0.0
    %1767 = vmatpush2.msra.mxu0 0.0
    %1768 = vmatprep.subr.mxu0 0.0
    %1769 = vmatpush2.msra.mxu0 0.0
    %1770 = vmatprep.subr.mxu0 0.0
    %1771 = vmatpush2.msra.mxu0 0.0
    %1772 = vmatprep.subr.mxu0 0.0
    %1773 = vmatpush2.msra.mxu0 0.0
    %1774 = vmatprep.subr.mxu0 0.0
    %1775 = vmatpush2.msra.mxu0 0.0
    %1776 = vmatprep.subr.mxu0 0.0
    %1777 = vmatpush2.msra.mxu0 0.0
    %1778 = vmatprep.subr.mxu0 0.0
    %1779 = vmatpush2.msra.mxu0 0.0
    %1780 = vmatprep.subr.mxu0 0.0
    %1781 = vmatpush2.msra.mxu0 0.0
    %1782 = vmatprep.subr.mxu0 0.0
    %1783 = vmatpush2.msra.mxu0 0.0
    %1784 = vmatprep.subr.mxu0 0.0
    %1785 = vmatpush2.msra.mxu0 0.0
    %1786 = vmatprep.subr.mxu0 0.0
    %1787 = vmatpush2.msra.mxu0 0.0
    %1788 = vmatprep.subr.mxu0 0.0
    %1789 = vmatpush2.msra.mxu0 0.0
    %1790 = vmatprep.subr.mxu0 0.0
    %1791 = vmatpush2.msra.mxu0 0.0
    %1792 = vmatprep.subr.mxu0 0.0
    %1793 = vmatpush2.msra.mxu0 0.0
    %1794 = vmatprep.subr.mxu0 0.0
    %1795 = vmatpush2.msra.mxu0 0.0
    %1796 = vmatprep.subr.mxu0 0.0
    %1797 = vmatpush2.msra.mxu0 0.0
    %1798 = vmatprep.mubr.f32.mxu0 0.0
    %1799 = vmatmul.mubr.f32.gmra.mxu0 %v1661
    %v1800 = vpop.f32.mrf.mxu0
    %v1801 = vadd.f32 0.0, %v1800
    %v1802 = vpop.f32.mrf.mxu0
    %1803 = vdwg.mxu0
    %v1805 = vrot.slane %v1730, 2
    %v1806 = vrot.slane %v1730, 3
    %v1809 = vadd.f32 %v226, %v1805
    %v1810 = vadd.f32 %v232, %v1806
    %v1811 = vxor.u32 %v1809, 2147483648
    %v1812 = vxor.u32 %v1810, 2147483648
    %v1813 = vmul.f32 %v1811, 1.442695
    %v1814 = vpow.pop %v1813
    %v1815 = vmul.f32 %v1812, 1.442695
    %v1816 = vpow.pop %v1815
    %v1817 = vadd.f32 %v1814, 1.0
    %v1818 = vadd.f32 %v1816, 1.0
    %v1819 = vrcp.pop %v1817
    %v1820 = vmul.f32 1.0, %v1819
    %v1821 = vrcp.pop %v1818
    %v1822 = vmul.f32 1.0, %v1821
    %v1824 = vrot.slane %v1732, 2
    %v1825 = vrot.slane %v1732, 3
    %v1828 = vadd.f32 %v228, %v1824
    %v1829 = vadd.f32 %v234, %v1825
    %v1830 = vxor.u32 %v1828, 2147483648
    %v1831 = vxor.u32 %v1829, 2147483648
    %v1832 = vmul.f32 %v1830, 1.442695
    %v1833 = vpow.pop %v1832
    %v1834 = vmul.f32 %v1831, 1.442695
    %v1835 = vpow.pop %v1834
    %v1836 = vadd.f32 %v1833, 1.0
    %v1837 = vadd.f32 %v1835, 1.0
    %v1838 = vrcp.pop %v1836
    %v1839 = vmul.f32 1.0, %v1838
    %v1840 = vrcp.pop %v1837
    %v1841 = vmul.f32 1.0, %v1840
    %v1842 = vadd.f32 %v1801, %v541
    %v1844 = vrot.slane %v1842, 2
    %v1845 = vrot.slane %v1842, 3
    %v1848 = vmul.f32 %v1820, %v1844
    %v1849 = vmul.f32 %v1822, %v1845
    %v1850 = vadd.f32 %v303, %v1848
    %v1851 = vadd.f32 %v308, %v1849
    %v1852 = vtanh.pop %v1850
    %v1853 = vtanh.pop %v1851
    %v1856 = vrot.slane %v1852, 1
    %v1857 = vrot.slane %v1853, 1
    %v1860 = vsub.f32 %v1650, %v1856
    %v1861 = vsub.f32 %v1651, %v1857
    %v1864 = vrot.slane %v1860, 7
    %v1865 = vrot.slane %v1861, 7
    %v1868 = vmul.f32 %v1839, %v1864
    %v1869 = vmul.f32 %v1841, %v1865
    %v1870 = vadd.f32 %v1852, %v1868
    %v1871 = vadd.f32 %v1853, %v1869
    %v1874 = vrot.slane %v1871, 7
    %vm1875 = vcmask 1047559
    %v1876 = vsel %vm1875, %v1874, %v1870
    %1878 = vst [vmem:[#allocation2 + $0x6] sm:$0xc0] %v1876
    %v1879 = vrot.slane %v1870, 6
    %v1880 = vrot.slane %v1871, 5
    %v1881 = vsel %vm563, %v1880, %v1879
    %1883 = vmatprep.subr.mxu0 %v357
    %1884 = vmatpush1.msra.mxu0 %v356
    %1885 = vmatprep.subr.mxu0 %v354
    %1886 = vmatpush1.msra.mxu0 %v353
    %1887 = vmatprep.subr.mxu0 %v351
    %1888 = vmatpush1.msra.mxu0 %v350
    %1889 = vmatprep.subr.mxu0 %v348
    %1890 = vmatpush1.msra.mxu0 %v347
    %1891 = vmatprep.subr.mxu0 %v345
    %1892 = vmatpush1.msra.mxu0 %v344
    %1893 = vmatprep.subr.mxu0 %v342
    %1894 = vmatpush1.msra.mxu0 %v341
    %1895 = vmatprep.subr.mxu0 %v339
    %1896 = vmatpush1.msra.mxu0 %v338
    %1897 = vmatprep.subr.mxu0 %v336
    %1898 = vmatpush1.msra.mxu0 %v335
    %1899 = vmatprep.subr.mxu0 %v333
    %1900 = vmatpush1.msra.mxu0 %v332
    %1901 = vmatprep.subr.mxu0 %v330
    %1902 = vmatpush1.msra.mxu0 %v329
    %1903 = vmatprep.subr.mxu0 %v327
    %1904 = vmatpush1.msra.mxu0 %v326
    %1905 = vmatprep.subr.mxu0 %v324
    %1906 = vmatpush1.msra.mxu0 %v323
    %1907 = vmatprep.subr.mxu0 %v321
    %1908 = vmatpush1.msra.mxu0 %v320
    %1909 = vmatprep.subr.mxu0 %v318
    %1910 = vmatpush1.msra.mxu0 %v317
    %1911 = vmatprep.subr.mxu0 %v315
    %1912 = vmatpush1.msra.mxu0 %v314
    %1913 = vmatprep.subr.mxu0 %v312
    %1914 = vmatpush1.msra.mxu0 %v311
    %1915 = vmatprep.subr.mxu0 0.0
    %1916 = vmatpush2.msra.mxu0 0.0
    %1917 = vmatprep.subr.mxu0 0.0
    %1918 = vmatpush2.msra.mxu0 0.0
    %1919 = vmatprep.subr.mxu0 0.0
    %1920 = vmatpush2.msra.mxu0 0.0
    %1921 = vmatprep.subr.mxu0 0.0
    %1922 = vmatpush2.msra.mxu0 0.0
    %1923 = vmatprep.subr.mxu0 0.0
    %1924 = vmatpush2.msra.mxu0 0.0
    %1925 = vmatprep.subr.mxu0 0.0
    %1926 = vmatpush2.msra.mxu0 0.0
    %1927 = vmatprep.subr.mxu0 0.0
    %1928 = vmatpush2.msra.mxu0 0.0
    %1929 = vmatprep.subr.mxu0 0.0
    %1930 = vmatpush2.msra.mxu0 0.0
    %1931 = vmatprep.subr.mxu0 0.0
    %1932 = vmatpush2.msra.mxu0 0.0
    %1933 = vmatprep.subr.mxu0 0.0
    %1934 = vmatpush2.msra.mxu0 0.0
    %1935 = vmatprep.subr.mxu0 0.0
    %1936 = vmatpush2.msra.mxu0 0.0
    %1937 = vmatprep.subr.mxu0 0.0
    %1938 = vmatpush2.msra.mxu0 0.0
    %1939 = vmatprep.subr.mxu0 0.0
    %1940 = vmatpush2.msra.mxu0 0.0
    %1941 = vmatprep.subr.mxu0 0.0
    %1942 = vmatpush2.msra.mxu0 0.0
    %1943 = vmatprep.subr.mxu0 0.0
    %1944 = vmatpush2.msra.mxu0 0.0
    %1945 = vmatprep.subr.mxu0 0.0
    %1946 = vmatpush2.msra.mxu0 0.0
    %1947 = vmatprep.mubr.f32.mxu0 0.0
    %1948 = vmatmul.mubr.f32.gmra.mxu0 %v1881
    %v1949 = vpop.f32.mrf.mxu0
    %v1950 = vadd.f32 0.0, %v1949
    %v1951 = vpop.f32.mrf.mxu0
    %v1952 = vadd.f32 0.0, %v1951
    %1953 = vdwg.mxu0
    %1954 = vmatprep.subr.mxu0 0.0
    %1955 = vmatpush1.msra.mxu0 %v358
    %1956 = vmatprep.subr.mxu0 0.0
    %1957 = vmatpush1.msra.mxu0 %v355
    %1958 = vmatprep.subr.mxu0 0.0
    %1959 = vmatpush1.msra.mxu0 %v352
    %1960 = vmatprep.subr.mxu0 0.0
    %1961 = vmatpush1.msra.mxu0 %v349
    %1962 = vmatprep.subr.mxu0 0.0
    %1963 = vmatpush1.msra.mxu0 %v346
    %1964 = vmatprep.subr.mxu0 0.0
    %1965 = vmatpush1.msra.mxu0 %v343
    %1966 = vmatprep.subr.mxu0 0.0
    %1967 = vmatpush1.msra.mxu0 %v340
    %1968 = vmatprep.subr.mxu0 0.0
    %1969 = vmatpush1.msra.mxu0 %v337
    %1970 = vmatprep.subr.mxu0 0.0
    %1971 = vmatpush1.msra.mxu0 %v334
    %1972 = vmatprep.subr.mxu0 0.0
    %1973 = vmatpush1.msra.mxu0 %v331
    %1974 = vmatprep.subr.mxu0 0.0
    %1975 = vmatpush1.msra.mxu0 %v328
    %1976 = vmatprep.subr.mxu0 0.0
    %1977 = vmatpush1.msra.mxu0 %v325
    %1978 = vmatprep.subr.mxu0 0.0
    %1979 = vmatpush1.msra.mxu0 %v322
    %1980 = vmatprep.subr.mxu0 0.0
    %1981 = vmatpush1.msra.mxu0 %v319
    %1982 = vmatprep.subr.mxu0 0.0
    %1983 = vmatpush1.msra.mxu0 %v316
    %1984 = vmatprep.subr.mxu0 0.0
    %1985 = vmatpush1.msra.mxu0 %v313
    %1986 = vmatprep.subr.mxu0 0.0
    %1987 = vmatpush2.msra.mxu0 0.0
    %1988 = vmatprep.subr.mxu0 0.0
    %1989 = vmatpush2.msra.mxu0 0.0
    %1990 = vmatprep.subr.mxu0 0.0
    %1991 = vmatpush2.msra.mxu0 0.0
    %1992 = vmatprep.subr.mxu0 0.0
    %1993 = vmatpush2.msra.mxu0 0.0
    %1994 = vmatprep.subr.mxu0 0.0
    %1995 = vmatpush2.msra.mxu0 0.0
    %1996 = vmatprep.subr.mxu0 0.0
    %1997 = vmatpush2.msra.mxu0 0.0
    %1998 = vmatprep.subr.mxu0 0.0
    %1999 = vmatpush2.msra.mxu0 0.0
    %2000 = vmatprep.subr.mxu0 0.0
    %2001 = vmatpush2.msra.mxu0 0.0
    %2002 = vmatprep.subr.mxu0 0.0
    %2003 = vmatpush2.msra.mxu0 0.0
    %2004 = vmatprep.subr.mxu0 0.0
    %2005 = vmatpush2.msra.mxu0 0.0
    %2006 = vmatprep.subr.mxu0 0.0
    %2007 = vmatpush2.msra.mxu0 0.0
    %2008 = vmatprep.subr.mxu0 0.0
    %2009 = vmatpush2.msra.mxu0 0.0
    %2010 = vmatprep.subr.mxu0 0.0
    %2011 = vmatpush2.msra.mxu0 0.0
    %2012 = vmatprep.subr.mxu0 0.0
    %2013 = vmatpush2.msra.mxu0 0.0
    %2014 = vmatprep.subr.mxu0 0.0
    %2015 = vmatpush2.msra.mxu0 0.0
    %2016 = vmatprep.subr.mxu0 0.0
    %2017 = vmatpush2.msra.mxu0 0.0
    %2018 = vmatprep.mubr.f32.mxu0 0.0
    %2019 = vmatmul.mubr.f32.gmra.mxu0 %v1881
    %v2020 = vpop.f32.mrf.mxu0
    %v2021 = vadd.f32 0.0, %v2020
    %v2022 = vpop.f32.mrf.mxu0
    %2023 = vdwg.mxu0
    %v2025 = vrot.slane %v1950, 1
    %v2026 = vrot.slane %v1950, 2
    %v2029 = vadd.f32 %v226, %v2025
    %v2030 = vadd.f32 %v232, %v2026
    %v2031 = vxor.u32 %v2029, 2147483648
    %v2032 = vxor.u32 %v2030, 2147483648
    %v2033 = vmul.f32 %v2031, 1.442695
    %v2034 = vpow.pop %v2033
    %v2035 = vmul.f32 %v2032, 1.442695
    %v2036 = vpow.pop %v2035
    %v2037 = vadd.f32 %v2034, 1.0
    %v2038 = vadd.f32 %v2036, 1.0
    %v2039 = vrcp.pop %v2037
    %v2040 = vmul.f32 1.0, %v2039
    %v2041 = vrcp.pop %v2038
    %v2042 = vmul.f32 1.0, %v2041
    %v2044 = vrot.slane %v1952, 1
    %v2045 = vrot.slane %v1952, 2
    %v2048 = vadd.f32 %v228, %v2044
    %v2049 = vadd.f32 %v234, %v2045
    %v2050 = vxor.u32 %v2048, 2147483648
    %v2051 = vxor.u32 %v2049, 2147483648
    %v2052 = vmul.f32 %v2050, 1.442695
    %v2053 = vpow.pop %v2052
    %v2054 = vmul.f32 %v2051, 1.442695
    %v2055 = vpow.pop %v2054
    %v2056 = vadd.f32 %v2053, 1.0
    %v2057 = vadd.f32 %v2055, 1.0
    %v2058 = vrcp.pop %v2056
    %v2059 = vmul.f32 1.0, %v2058
    %v2060 = vrcp.pop %v2057
    %v2061 = vmul.f32 1.0, %v2060
    %v2062 = vadd.f32 %v2021, %v541
    %v2064 = vrot.slane %v2062, 1
    %v2065 = vrot.slane %v2062, 2
    %v2068 = vmul.f32 %v2040, %v2064
    %v2069 = vmul.f32 %v2042, %v2065
    %v2070 = vadd.f32 %v303, %v2068
    %v2071 = vadd.f32 %v308, %v2069
    %v2072 = vtanh.pop %v2070
    %v2073 = vtanh.pop %v2071
    %v2076 = vrot.slane %v2072, 1
    %v2077 = vrot.slane %v2073, 1
    %v2080 = vsub.f32 %v1870, %v2076
    %v2081 = vsub.f32 %v1871, %v2077
    %v2084 = vrot.slane %v2080, 7
    %v2085 = vrot.slane %v2081, 7
    %v2088 = vmul.f32 %v2059, %v2084
    %v2089 = vmul.f32 %v2061, %v2085
    %v2090 = vadd.f32 %v2072, %v2088
    %v2091 = vadd.f32 %v2073, %v2089
    %v2094 = vrot.slane %v2091, 7
    %2097 = vst [vmem:[#allocation2 + $0x7] sm:$0x80] %v2090
    %2098 = vst [vmem:[#allocation2 + $0xf] sm:$0x1] %v2094
    %v2099 = vld [vmem:[#allocation2] sm:$0xff]
    %v2100 = vld [vmem:[#allocation2 + $0x8] sm:$0xff]
    %v2101 = vld [vmem:[#allocation9] sm:$0xff]
    %v2102 = vld [vmem:[#allocation9 + $0x8] sm:$0xff]
    %v2103 = vld [vmem:[#allocation9 + $0x10] sm:$0xff]
    %v2104 = vld [vmem:[#allocation9 + $0x18] sm:$0xff]
    %v2105 = vld [vmem:[#allocation9 + $0x20] sm:$0xff]
    %v2106 = vld [vmem:[#allocation9 + $0x28] sm:$0xff]
    %v2107 = vld [vmem:[#allocation9 + $0x30] sm:$0xff]
    %v2108 = vld [vmem:[#allocation9 + $0x38] sm:$0xff]
    %v2109 = vld [vmem:[#allocation9 + $0x40] sm:$0xff]
    %v2110 = vld [vmem:[#allocation9 + $0x48] sm:$0xff]
    %v2111 = vld [vmem:[#allocation9 + $0x50] sm:$0xff]
    %v2112 = vld [vmem:[#allocation9 + $0x58] sm:$0xff]
    %v2113 = vld [vmem:[#allocation9 + $0x60] sm:$0xff]
    %v2114 = vld [vmem:[#allocation9 + $0x68] sm:$0xff]
    %v2115 = vld [vmem:[#allocation9 + $0x70] sm:$0xff]
    %v2116 = vld [vmem:[#allocation9 + $0x78] sm:$0xff]
    %v2117 = vld [vmem:[#allocation9 + $0x80] sm:$0xff]
    %v2118 = vld [vmem:[#allocation9 + $0x88] sm:$0xff]
    %v2119 = vld [vmem:[#allocation9 + $0x90] sm:$0xff]
    %v2120 = vld [vmem:[#allocation9 + $0x98] sm:$0xff]
    %v2121 = vld [vmem:[#allocation9 + $0xa0] sm:$0xff]
    %v2122 = vld [vmem:[#allocation9 + $0xa8] sm:$0xff]
    %v2123 = vld [vmem:[#allocation9 + $0xb0] sm:$0xff]
    %v2124 = vld [vmem:[#allocation9 + $0xb8] sm:$0xff]
    %v2125 = vld [vmem:[#allocation9 + $0xc0] sm:$0xff]
    %v2126 = vld [vmem:[#allocation9 + $0xc8] sm:$0xff]
    %v2127 = vld [vmem:[#allocation9 + $0xd0] sm:$0xff]
    %v2128 = vld [vmem:[#allocation9 + $0xd8] sm:$0xff]
    %v2129 = vld [vmem:[#allocation9 + $0xe0] sm:$0xff]
    %v2130 = vld [vmem:[#allocation9 + $0xe8] sm:$0xff]
    %v2131 = vld [vmem:[#allocation9 + $0xf0] sm:$0xff]
    %v2132 = vld [vmem:[#allocation9 + $0xf8] sm:$0xff]
    %v2133 = vld [vmem:[#allocation9 + $0x100] sm:$0xff]
    %v2134 = vld [vmem:[#allocation9 + $0x108] sm:$0xff]
    %v2135 = vld [vmem:[#allocation9 + $0x110] sm:$0xff]
    %v2136 = vld [vmem:[#allocation9 + $0x118] sm:$0xff]
    %v2137 = vld [vmem:[#allocation9 + $0x120] sm:$0xff]
    %v2138 = vld [vmem:[#allocation9 + $0x128] sm:$0xff]
    %v2139 = vld [vmem:[#allocation9 + $0x130] sm:$0xff]
    %v2140 = vld [vmem:[#allocation9 + $0x138] sm:$0xff]
    %v2141 = vld [vmem:[#allocation9 + $0x140] sm:$0xff]
    %v2142 = vld [vmem:[#allocation9 + $0x148] sm:$0xff]
    %v2143 = vld [vmem:[#allocation9 + $0x150] sm:$0xff]
    %v2144 = vld [vmem:[#allocation9 + $0x158] sm:$0xff]
    %v2145 = vld [vmem:[#allocation9 + $0x160] sm:$0xff]
    %v2146 = vld [vmem:[#allocation9 + $0x168] sm:$0xff]
    %v2147 = vld [vmem:[#allocation9 + $0x170] sm:$0xff]
    %v2148 = vld [vmem:[#allocation9 + $0x178] sm:$0xff]
    %v2149 = vld [vmem:[%s7] sm:$0x7]
    %v2151 = vlaneseq
    %v2152 = vshrl.u32 %v2151, 7
    %v2153 = vsub.s32 0, %v2152
    %v2154 = vrot.slane %v2149, %v2153
    %v2155 = vlaneseq
    %v2156 = vshrl.u32 %v2155, 7
    %v2157 = vsub.s32 1, %v2156
    %v2158 = vrot.slane %v2149, %v2157
    %v2159 = vlaneseq
    %v2160 = vshrl.u32 %v2159, 7
    %v2161 = vsub.s32 2, %v2160
    %v2162 = vrot.slane %v2149, %v2161
    %2166 = vmatprep.subr.mxu0 %v2147
    %2167 = vmatpush1.msra.mxu0 %v2146
    %2168 = vmatprep.subr.mxu0 %v2144
    %2169 = vmatpush1.msra.mxu0 %v2143
    %2170 = vmatprep.subr.mxu0 %v2141
    %2171 = vmatpush1.msra.mxu0 %v2140
    %2172 = vmatprep.subr.mxu0 %v2138
    %2173 = vmatpush1.msra.mxu0 %v2137
    %2174 = vmatprep.subr.mxu0 %v2135
    %2175 = vmatpush1.msra.mxu0 %v2134
    %2176 = vmatprep.subr.mxu0 %v2132
    %2177 = vmatpush1.msra.mxu0 %v2131
    %2178 = vmatprep.subr.mxu0 %v2129
    %2179 = vmatpush1.msra.mxu0 %v2128
    %2180 = vmatprep.subr.mxu0 %v2126
    %2181 = vmatpush1.msra.mxu0 %v2125
    %2182 = vmatprep.subr.mxu0 %v2123
    %2183 = vmatpush1.msra.mxu0 %v2122
    %2184 = vmatprep.subr.mxu0 %v2120
    %2185 = vmatpush1.msra.mxu0 %v2119
    %2186 = vmatprep.subr.mxu0 %v2117
    %2187 = vmatpush1.msra.mxu0 %v2116
    %2188 = vmatprep.subr.mxu0 %v2114
    %2189 = vmatpush1.msra.mxu0 %v2113
    %2190 = vmatprep.subr.mxu0 %v2111
    %2191 = vmatpush1.msra.mxu0 %v2110
    %2192 = vmatprep.subr.mxu0 %v2108
    %2193 = vmatpush1.msra.mxu0 %v2107
    %2194 = vmatprep.subr.mxu0 %v2105
    %2195 = vmatpush1.msra.mxu0 %v2104
    %2196 = vmatprep.subr.mxu0 %v2102
    %2197 = vmatpush1.msra.mxu0 %v2101
    %2198 = vmatprep.subr.mxu0 0.0
    %2199 = vmatpush2.msra.mxu0 0.0
    %2200 = vmatprep.subr.mxu0 0.0
    %2201 = vmatpush2.msra.mxu0 0.0
    %2202 = vmatprep.subr.mxu0 0.0
    %2203 = vmatpush2.msra.mxu0 0.0
    %2204 = vmatprep.subr.mxu0 0.0
    %2205 = vmatpush2.msra.mxu0 0.0
    %2206 = vmatprep.subr.mxu0 0.0
    %2207 = vmatpush2.msra.mxu0 0.0
    %2208 = vmatprep.subr.mxu0 0.0
    %2209 = vmatpush2.msra.mxu0 0.0
    %2210 = vmatprep.subr.mxu0 0.0
    %2211 = vmatpush2.msra.mxu0 0.0
    %2212 = vmatprep.subr.mxu0 0.0
    %2213 = vmatpush2.msra.mxu0 0.0
    %2214 = vmatprep.subr.mxu0 0.0
    %2215 = vmatpush2.msra.mxu0 0.0
    %2216 = vmatprep.subr.mxu0 0.0
    %2217 = vmatpush2.msra.mxu0 0.0
    %2218 = vmatprep.subr.mxu0 0.0
    %2219 = vmatpush2.msra.mxu0 0.0
    %2220 = vmatprep.subr.mxu0 0.0
    %2221 = vmatpush2.msra.mxu0 0.0
    %2222 = vmatprep.subr.mxu0 0.0
    %2223 = vmatpush2.msra.mxu0 0.0
    %2224 = vmatprep.subr.mxu0 0.0
    %2225 = vmatpush2.msra.mxu0 0.0
    %2226 = vmatprep.subr.mxu0 0.0
    %2227 = vmatpush2.msra.mxu0 0.0
    %2228 = vmatprep.subr.mxu0 0.0
    %2229 = vmatpush2.msra.mxu0 0.0
    %2230 = vmatprep.mubr.f32.mxu0 0.0
    %2231 = vmatmul.mubr.f32.gmra.mxu0 %v2099
    %v2232 = vpop.f32.mrf.mxu0
    %v2233 = vadd.f32 %v2154, %v2232
    %v2234 = vpop.f32.mrf.mxu0
    %v2235 = vadd.f32 %v2158, %v2234
    %2236 = vmatprep.mubr.f32.mxu0 0.0
    %2237 = vmatmul.mubr.f32.gmra.mxu0 %v2100
    %v2238 = vpop.f32.mrf.mxu0
    %v2239 = vadd.f32 %v2154, %v2238
    %v2240 = vpop.f32.mrf.mxu0
    %v2241 = vadd.f32 %v2158, %v2240
    %2242 = vdwg.mxu0
    %2243 = vmatprep.subr.mxu0 0.0
    %2244 = vmatpush1.msra.mxu0 %v2148
    %2245 = vmatprep.subr.mxu0 0.0
    %2246 = vmatpush1.msra.mxu0 %v2145
    %2247 = vmatprep.subr.mxu0 0.0
    %2248 = vmatpush1.msra.mxu0 %v2142
    %2249 = vmatprep.subr.mxu0 0.0
    %2250 = vmatpush1.msra.mxu0 %v2139
    %2251 = vmatprep.subr.mxu0 0.0
    %2252 = vmatpush1.msra.mxu0 %v2136
    %2253 = vmatprep.subr.mxu0 0.0
    %2254 = vmatpush1.msra.mxu0 %v2133
    %2255 = vmatprep.subr.mxu0 0.0
    %2256 = vmatpush1.msra.mxu0 %v2130
    %2257 = vmatprep.subr.mxu0 0.0
    %2258 = vmatpush1.msra.mxu0 %v2127
    %2259 = vmatprep.subr.mxu0 0.0
    %2260 = vmatpush1.msra.mxu0 %v2124
    %2261 = vmatprep.subr.mxu0 0.0
    %2262 = vmatpush1.msra.mxu0 %v2121
    %2263 = vmatprep.subr.mxu0 0.0
    %2264 = vmatpush1.msra.mxu0 %v2118
    %2265 = vmatprep.subr.mxu0 0.0
    %2266 = vmatpush1.msra.mxu0 %v2115
    %2267 = vmatprep.subr.mxu0 0.0
    %2268 = vmatpush1.msra.mxu0 %v2112
    %2269 = vmatprep.subr.mxu0 0.0
    %2270 = vmatpush1.msra.mxu0 %v2109
    %2271 = vmatprep.subr.mxu0 0.0
    %2272 = vmatpush1.msra.mxu0 %v2106
    %2273 = vmatprep.subr.mxu0 0.0
    %2274 = vmatpush1.msra.mxu0 %v2103
    %2275 = vmatprep.subr.mxu0 0.0
    %2276 = vmatpush2.msra.mxu0 0.0
    %2277 = vmatprep.subr.mxu0 0.0
    %2278 = vmatpush2.msra.mxu0 0.0
    %2279 = vmatprep.subr.mxu0 0.0
    %2280 = vmatpush2.msra.mxu0 0.0
    %2281 = vmatprep.subr.mxu0 0.0
    %2282 = vmatpush2.msra.mxu0 0.0
    %2283 = vmatprep.subr.mxu0 0.0
    %2284 = vmatpush2.msra.mxu0 0.0
    %2285 = vmatprep.subr.mxu0 0.0
    %2286 = vmatpush2.msra.mxu0 0.0
    %2287 = vmatprep.subr.mxu0 0.0
    %2288 = vmatpush2.msra.mxu0 0.0
    %2289 = vmatprep.subr.mxu0 0.0
    %2290 = vmatpush2.msra.mxu0 0.0
    %2291 = vmatprep.subr.mxu0 0.0
    %2292 = vmatpush2.msra.mxu0 0.0
    %2293 = vmatprep.subr.mxu0 0.0
    %2294 = vmatpush2.msra.mxu0 0.0
    %2295 = vmatprep.subr.mxu0 0.0
    %2296 = vmatpush2.msra.mxu0 0.0
    %2297 = vmatprep.subr.mxu0 0.0
    %2298 = vmatpush2.msra.mxu0 0.0
    %2299 = vmatprep.subr.mxu0 0.0
    %2300 = vmatpush2.msra.mxu0 0.0
    %2301 = vmatprep.subr.mxu0 0.0
    %2302 = vmatpush2.msra.mxu0 0.0
    %2303 = vmatprep.subr.mxu0 0.0
    %2304 = vmatpush2.msra.mxu0 0.0
    %2305 = vmatprep.subr.mxu0 0.0
    %2306 = vmatpush2.msra.mxu0 0.0
    %2307 = vmatprep.mubr.f32.mxu0 0.0
    %2308 = vmatmul.mubr.f32.gmra.mxu0 %v2099
    %v2309 = vpop.f32.mrf.mxu0
    %v2310 = vadd.f32 %v2162, %v2309
    %v2311 = vpop.f32.mrf.mxu0
    %2312 = vmatprep.mubr.f32.mxu0 0.0
    %2313 = vmatmul.mubr.f32.gmra.mxu0 %v2100
    %v2314 = vpop.f32.mrf.mxu0
    %v2315 = vadd.f32 %v2162, %v2314
    %v2316 = vpop.f32.mrf.mxu0
    %2317 = vdwg.mxu0
    %v2318 = vld [vmem:[#allocation11] sm:$0xff]
    %v2319 = vld [vmem:[#allocation11 + $0x8] sm:$0xff]
    %v2320 = vld [vmem:[#allocation11 + $0x10] sm:$0xff]
    %v2321 = vld [vmem:[#allocation11 + $0x18] sm:$0xff]
    %v2322 = vld [vmem:[#allocation11 + $0x20] sm:$0xff]
    %v2323 = vld [vmem:[#allocation11 + $0x28] sm:$0xff]
    %v2324 = vld [vmem:[#allocation11 + $0x30] sm:$0xff]
    %v2325 = vld [vmem:[#allocation11 + $0x38] sm:$0xff]
    %v2326 = vld [vmem:[#allocation11 + $0x40] sm:$0xff]
    %v2327 = vld [vmem:[#allocation11 + $0x48] sm:$0xff]
    %v2328 = vld [vmem:[#allocation11 + $0x50] sm:$0xff]
    %v2329 = vld [vmem:[#allocation11 + $0x58] sm:$0xff]
    %v2330 = vld [vmem:[#allocation11 + $0x60] sm:$0xff]
    %v2331 = vld [vmem:[#allocation11 + $0x68] sm:$0xff]
    %v2332 = vld [vmem:[#allocation11 + $0x70] sm:$0xff]
    %v2333 = vld [vmem:[#allocation11 + $0x78] sm:$0xff]
    %v2334 = vld [vmem:[#allocation11 + $0x80] sm:$0xff]
    %v2335 = vld [vmem:[#allocation11 + $0x88] sm:$0xff]
    %v2336 = vld [vmem:[#allocation11 + $0x90] sm:$0xff]
    %v2337 = vld [vmem:[#allocation11 + $0x98] sm:$0xff]
    %v2338 = vld [vmem:[#allocation11 + $0xa0] sm:$0xff]
    %v2339 = vld [vmem:[#allocation11 + $0xa8] sm:$0xff]
    %v2340 = vld [vmem:[#allocation11 + $0xb0] sm:$0xff]
    %v2341 = vld [vmem:[#allocation11 + $0xb8] sm:$0xff]
    %v2342 = vld [vmem:[#allocation11 + $0xc0] sm:$0xff]
    %v2343 = vld [vmem:[#allocation11 + $0xc8] sm:$0xff]
    %v2344 = vld [vmem:[#allocation11 + $0xd0] sm:$0xff]
    %v2345 = vld [vmem:[#allocation11 + $0xd8] sm:$0xff]
    %v2346 = vld [vmem:[#allocation11 + $0xe0] sm:$0xff]
    %v2347 = vld [vmem:[#allocation11 + $0xe8] sm:$0xff]
    %v2348 = vld [vmem:[#allocation11 + $0xf0] sm:$0xff]
    %v2349 = vld [vmem:[#allocation11 + $0xf8] sm:$0xff]
    %v2350 = vld [vmem:[#allocation11 + $0x100] sm:$0xff]
    %v2351 = vld [vmem:[#allocation11 + $0x108] sm:$0xff]
    %v2352 = vld [vmem:[#allocation11 + $0x110] sm:$0xff]
    %v2353 = vld [vmem:[#allocation11 + $0x118] sm:$0xff]
    %v2354 = vld [vmem:[#allocation11 + $0x120] sm:$0xff]
    %v2355 = vld [vmem:[#allocation11 + $0x128] sm:$0xff]
    %v2356 = vld [vmem:[#allocation11 + $0x130] sm:$0xff]
    %v2357 = vld [vmem:[#allocation11 + $0x138] sm:$0xff]
    %v2358 = vld [vmem:[#allocation11 + $0x140] sm:$0xff]
    %v2359 = vld [vmem:[#allocation11 + $0x148] sm:$0xff]
    %v2360 = vld [vmem:[#allocation11 + $0x150] sm:$0xff]
    %v2361 = vld [vmem:[#allocation11 + $0x158] sm:$0xff]
    %v2362 = vld [vmem:[#allocation11 + $0x160] sm:$0xff]
    %v2363 = vld [vmem:[#allocation11 + $0x168] sm:$0xff]
    %v2364 = vld [vmem:[#allocation11 + $0x170] sm:$0xff]
    %v2365 = vld [vmem:[#allocation11 + $0x178] sm:$0xff]
    %v2366 = vld [vmem:[%s8] sm:$0x1]
    %2367 = vmatprep.subr.mxu0 %v2364
    %2368 = vmatpush1.msra.mxu0 %v2363
    %2369 = vmatprep.subr.mxu0 %v2361
    %2370 = vmatpush1.msra.mxu0 %v2360
    %2371 = vmatprep.subr.mxu0 %v2358
    %2372 = vmatpush1.msra.mxu0 %v2357
    %2373 = vmatprep.subr.mxu0 %v2355
    %2374 = vmatpush1.msra.mxu0 %v2354
    %2375 = vmatprep.subr.mxu0 %v2352
    %2376 = vmatpush1.msra.mxu0 %v2351
    %2377 = vmatprep.subr.mxu0 %v2349
    %2378 = vmatpush1.msra.mxu0 %v2348
    %2379 = vmatprep.subr.mxu0 %v2346
    %2380 = vmatpush1.msra.mxu0 %v2345
    %2381 = vmatprep.subr.mxu0 %v2343
    %2382 = vmatpush1.msra.mxu0 %v2342
    %2383 = vmatprep.subr.mxu0 %v2340
    %2384 = vmatpush1.msra.mxu0 %v2339
    %2385 = vmatprep.subr.mxu0 %v2337
    %2386 = vmatpush1.msra.mxu0 %v2336
    %2387 = vmatprep.subr.mxu0 %v2334
    %2388 = vmatpush1.msra.mxu0 %v2333
    %2389 = vmatprep.subr.mxu0 %v2331
    %2390 = vmatpush1.msra.mxu0 %v2330
    %2391 = vmatprep.subr.mxu0 %v2328
    %2392 = vmatpush1.msra.mxu0 %v2327
    %2393 = vmatprep.subr.mxu0 %v2325
    %2394 = vmatpush1.msra.mxu0 %v2324
    %2395 = vmatprep.subr.mxu0 %v2322
    %2396 = vmatpush1.msra.mxu0 %v2321
    %2397 = vmatprep.subr.mxu0 %v2319
    %2398 = vmatpush1.msra.mxu0 %v2318
    %2399 = vmatprep.subr.mxu0 0.0
    %2400 = vmatpush2.msra.mxu0 0.0
    %2401 = vmatprep.subr.mxu0 0.0
    %2402 = vmatpush2.msra.mxu0 0.0
    %2403 = vmatprep.subr.mxu0 0.0
    %2404 = vmatpush2.msra.mxu0 0.0
    %2405 = vmatprep.subr.mxu0 0.0
    %2406 = vmatpush2.msra.mxu0 0.0
    %2407 = vmatprep.subr.mxu0 0.0
    %2408 = vmatpush2.msra.mxu0 0.0
    %2409 = vmatprep.subr.mxu0 0.0
    %2410 = vmatpush2.msra.mxu0 0.0
    %2411 = vmatprep.subr.mxu0 0.0
    %2412 = vmatpush2.msra.mxu0 0.0
    %2413 = vmatprep.subr.mxu0 0.0
    %2414 = vmatpush2.msra.mxu0 0.0
    %2415 = vmatprep.subr.mxu0 0.0
    %2416 = vmatpush2.msra.mxu0 0.0
    %2417 = vmatprep.subr.mxu0 0.0
    %2418 = vmatpush2.msra.mxu0 0.0
    %2419 = vmatprep.subr.mxu0 0.0
    %2420 = vmatpush2.msra.mxu0 0.0
    %2421 = vmatprep.subr.mxu0 0.0
    %2422 = vmatpush2.msra.mxu0 0.0
    %2423 = vmatprep.subr.mxu0 0.0
    %2424 = vmatpush2.msra.mxu0 0.0
    %2425 = vmatprep.subr.mxu0 0.0
    %2426 = vmatpush2.msra.mxu0 0.0
    %2427 = vmatprep.subr.mxu0 0.0
    %2428 = vmatpush2.msra.mxu0 0.0
    %2429 = vmatprep.subr.mxu0 0.0
    %2430 = vmatpush2.msra.mxu0 0.0
    %2431 = vmatprep.mubr.f32.mxu0 0.0
    %2432 = vmatmul.mubr.f32.gmra.mxu0 0.0
    %v2433 = vpop.f32.mrf.mxu0
    %v2434 = vadd.f32 0.0, %v2433
    %v2435 = vpop.f32.mrf.mxu0
    %v2436 = vadd.f32 0.0, %v2435
    %2437 = vdwg.mxu0
    %2438 = vmatprep.subr.mxu0 0.0
    %2439 = vmatpush1.msra.mxu0 %v2365
    %2440 = vmatprep.subr.mxu0 0.0
    %2441 = vmatpush1.msra.mxu0 %v2362
    %2442 = vmatprep.subr.mxu0 0.0
    %2443 = vmatpush1.msra.mxu0 %v2359
    %2444 = vmatprep.subr.mxu0 0.0
    %2445 = vmatpush1.msra.mxu0 %v2356
    %2446 = vmatprep.subr.mxu0 0.0
    %2447 = vmatpush1.msra.mxu0 %v2353
    %2448 = vmatprep.subr.mxu0 0.0
    %2449 = vmatpush1.msra.mxu0 %v2350
    %2450 = vmatprep.subr.mxu0 0.0
    %2451 = vmatpush1.msra.mxu0 %v2347
    %2452 = vmatprep.subr.mxu0 0.0
    %2453 = vmatpush1.msra.mxu0 %v2344
    %2454 = vmatprep.subr.mxu0 0.0
    %2455 = vmatpush1.msra.mxu0 %v2341
    %2456 = vmatprep.subr.mxu0 0.0
    %2457 = vmatpush1.msra.mxu0 %v2338
    %2458 = vmatprep.subr.mxu0 0.0
    %2459 = vmatpush1.msra.mxu0 %v2335
    %2460 = vmatprep.subr.mxu0 0.0
    %2461 = vmatpush1.msra.mxu0 %v2332
    %2462 = vmatprep.subr.mxu0 0.0
    %2463 = vmatpush1.msra.mxu0 %v2329
    %2464 = vmatprep.subr.mxu0 0.0
    %2465 = vmatpush1.msra.mxu0 %v2326
    %2466 = vmatprep.subr.mxu0 0.0
    %2467 = vmatpush1.msra.mxu0 %v2323
    %2468 = vmatprep.subr.mxu0 0.0
    %2469 = vmatpush1.msra.mxu0 %v2320
    %2470 = vmatprep.subr.mxu0 0.0
    %2471 = vmatpush2.msra.mxu0 0.0
    %2472 = vmatprep.subr.mxu0 0.0
    %2473 = vmatpush2.msra.mxu0 0.0
    %2474 = vmatprep.subr.mxu0 0.0
    %2475 = vmatpush2.msra.mxu0 0.0
    %2476 = vmatprep.subr.mxu0 0.0
    %2477 = vmatpush2.msra.mxu0 0.0
    %2478 = vmatprep.subr.mxu0 0.0
    %2479 = vmatpush2.msra.mxu0 0.0
    %2480 = vmatprep.subr.mxu0 0.0
    %2481 = vmatpush2.msra.mxu0 0.0
    %2482 = vmatprep.subr.mxu0 0.0
    %2483 = vmatpush2.msra.mxu0 0.0
    %2484 = vmatprep.subr.mxu0 0.0
    %2485 = vmatpush2.msra.mxu0 0.0
    %2486 = vmatprep.subr.mxu0 0.0
    %2487 = vmatpush2.msra.mxu0 0.0
    %2488 = vmatprep.subr.mxu0 0.0
    %2489 = vmatpush2.msra.mxu0 0.0
    %2490 = vmatprep.subr.mxu0 0.0
    %2491 = vmatpush2.msra.mxu0 0.0
    %2492 = vmatprep.subr.mxu0 0.0
    %2493 = vmatpush2.msra.mxu0 0.0
    %2494 = vmatprep.subr.mxu0 0.0
    %2495 = vmatpush2.msra.mxu0 0.0
    %2496 = vmatprep.subr.mxu0 0.0
    %2497 = vmatpush2.msra.mxu0 0.0
    %2498 = vmatprep.subr.mxu0 0.0
    %2499 = vmatpush2.msra.mxu0 0.0
    %2500 = vmatprep.subr.mxu0 0.0
    %2501 = vmatpush2.msra.mxu0 0.0
    %2502 = vmatprep.mubr.f32.mxu0 0.0
    %2503 = vmatmul.mubr.f32.gmra.mxu0 0.0
    %v2504 = vpop.f32.mrf.mxu0
    %v2505 = vadd.f32 0.0, %v2504
    %v2506 = vpop.f32.mrf.mxu0
    %2507 = vdwg.mxu0
    %v2508 = vadd.f32 %v2233, %v2434
    %v2509 = vxor.u32 %v2508, 2147483648
    %v2510 = vmul.f32 %v2509, 1.442695
    %v2511 = vpow.pop %v2510
    %v2512 = vadd.f32 %v2511, 1.0
    %v2513 = vrcp.pop %v2512
    %v2514 = vmul.f32 1.0, %v2513
    %v2515 = vadd.f32 %v2235, %v2436
    %v2516 = vxor.u32 %v2515, 2147483648
    %v2517 = vmul.f32 %v2516, 1.442695
    %v2518 = vpow.pop %v2517
    %v2519 = vadd.f32 %v2518, 1.0
    %v2520 = vrcp.pop %v2519
    %v2521 = vmul.f32 1.0, %v2520
    %v2523 = vlaneseq
    %v2524 = vshrl.u32 %v2523, 7
    %v2525 = vsub.s32 0, %v2524
    %v2526 = vrot.slane %v2366, %v2525
    %v2528 = vadd.f32 %v2505, %v2526
    %v2529 = vmul.f32 %v2514, %v2528
    %v2530 = vadd.f32 %v2310, %v2529
    %v2531 = vtanh.pop %v2530
    %v2532 = vsub.f32 0.0, %v2531
    %v2533 = vmul.f32 %v2521, %v2532
    %v2534 = vadd.f32 %v2531, %v2533
    %2535 = vmatprep.subr.mxu0 %v2364
    %2536 = vmatpush1.msra.mxu0 %v2363
    %2537 = vmatprep.subr.mxu0 %v2361
    %2538 = vmatpush1.msra.mxu0 %v2360
    %2539 = vmatprep.subr.mxu0 %v2358
    %2540 = vmatpush1.msra.mxu0 %v2357
    %2541 = vmatprep.subr.mxu0 %v2355
    %2542 = vmatpush1.msra.mxu0 %v2354
    %2543 = vmatprep.subr.mxu0 %v2352
    %2544 = vmatpush1.msra.mxu0 %v2351
    %2545 = vmatprep.subr.mxu0 %v2349
    %2546 = vmatpush1.msra.mxu0 %v2348
    %2547 = vmatprep.subr.mxu0 %v2346
    %2548 = vmatpush1.msra.mxu0 %v2345
    %2549 = vmatprep.subr.mxu0 %v2343
    %2550 = vmatpush1.msra.mxu0 %v2342
    %2551 = vmatprep.subr.mxu0 %v2340
    %2552 = vmatpush1.msra.mxu0 %v2339
    %2553 = vmatprep.subr.mxu0 %v2337
    %2554 = vmatpush1.msra.mxu0 %v2336
    %2555 = vmatprep.subr.mxu0 %v2334
    %2556 = vmatpush1.msra.mxu0 %v2333
    %2557 = vmatprep.subr.mxu0 %v2331
    %2558 = vmatpush1.msra.mxu0 %v2330
    %2559 = vmatprep.subr.mxu0 %v2328
    %2560 = vmatpush1.msra.mxu0 %v2327
    %2561 = vmatprep.subr.mxu0 %v2325
    %2562 = vmatpush1.msra.mxu0 %v2324
    %2563 = vmatprep.subr.mxu0 %v2322
    %2564 = vmatpush1.msra.mxu0 %v2321
    %2565 = vmatprep.subr.mxu0 %v2319
    %2566 = vmatpush1.msra.mxu0 %v2318
    %2567 = vmatprep.subr.mxu0 0.0
    %2568 = vmatpush2.msra.mxu0 0.0
    %2569 = vmatprep.subr.mxu0 0.0
    %2570 = vmatpush2.msra.mxu0 0.0
    %2571 = vmatprep.subr.mxu0 0.0
    %2572 = vmatpush2.msra.mxu0 0.0
    %2573 = vmatprep.subr.mxu0 0.0
    %2574 = vmatpush2.msra.mxu0 0.0
    %2575 = vmatprep.subr.mxu0 0.0
    %2576 = vmatpush2.msra.mxu0 0.0
    %2577 = vmatprep.subr.mxu0 0.0
    %2578 = vmatpush2.msra.mxu0 0.0
    %2579 = vmatprep.subr.mxu0 0.0
    %2580 = vmatpush2.msra.mxu0 0.0
    %2581 = vmatprep.subr.mxu0 0.0
    %2582 = vmatpush2.msra.mxu0 0.0
    %2583 = vmatprep.subr.mxu0 0.0
    %2584 = vmatpush2.msra.mxu0 0.0
    %2585 = vmatprep.subr.mxu0 0.0
    %2586 = vmatpush2.msra.mxu0 0.0
    %2587 = vmatprep.subr.mxu0 0.0
    %2588 = vmatpush2.msra.mxu0 0.0
    %2589 = vmatprep.subr.mxu0 0.0
    %2590 = vmatpush2.msra.mxu0 0.0
    %2591 = vmatprep.subr.mxu0 0.0
    %2592 = vmatpush2.msra.mxu0 0.0
    %2593 = vmatprep.subr.mxu0 0.0
    %2594 = vmatpush2.msra.mxu0 0.0
    %2595 = vmatprep.subr.mxu0 0.0
    %2596 = vmatpush2.msra.mxu0 0.0
    %2597 = vmatprep.subr.mxu0 0.0
    %2598 = vmatpush2.msra.mxu0 0.0
    %2599 = vmatprep.mubr.f32.mxu0 0.0
    %2600 = vmatmul.mubr.f32.gmra.mxu0 %v2534
    %v2601 = vpop.f32.mrf.mxu0
    %v2602 = vadd.f32 0.0, %v2601
    %v2603 = vpop.f32.mrf.mxu0
    %v2604 = vadd.f32 0.0, %v2603
    %2605 = vdwg.mxu0
    %2606 = vmatprep.subr.mxu0 0.0
    %2607 = vmatpush1.msra.mxu0 %v2365
    %2608 = vmatprep.subr.mxu0 0.0
    %2609 = vmatpush1.msra.mxu0 %v2362
    %2610 = vmatprep.subr.mxu0 0.0
    %2611 = vmatpush1.msra.mxu0 %v2359
    %2612 = vmatprep.subr.mxu0 0.0
    %2613 = vmatpush1.msra.mxu0 %v2356
    %2614 = vmatprep.subr.mxu0 0.0
    %2615 = vmatpush1.msra.mxu0 %v2353
    %2616 = vmatprep.subr.mxu0 0.0
    %2617 = vmatpush1.msra.mxu0 %v2350
    %2618 = vmatprep.subr.mxu0 0.0
    %2619 = vmatpush1.msra.mxu0 %v2347
    %2620 = vmatprep.subr.mxu0 0.0
    %2621 = vmatpush1.msra.mxu0 %v2344
    %2622 = vmatprep.subr.mxu0 0.0
    %2623 = vmatpush1.msra.mxu0 %v2341
    %2624 = vmatprep.subr.mxu0 0.0
    %2625 = vmatpush1.msra.mxu0 %v2338
    %2626 = vmatprep.subr.mxu0 0.0
    %2627 = vmatpush1.msra.mxu0 %v2335
    %2628 = vmatprep.subr.mxu0 0.0
    %2629 = vmatpush1.msra.mxu0 %v2332
    %2630 = vmatprep.subr.mxu0 0.0
    %2631 = vmatpush1.msra.mxu0 %v2329
    %2632 = vmatprep.subr.mxu0 0.0
    %2633 = vmatpush1.msra.mxu0 %v2326
    %2634 = vmatprep.subr.mxu0 0.0
    %2635 = vmatpush1.msra.mxu0 %v2323
    %2636 = vmatprep.subr.mxu0 0.0
    %2637 = vmatpush1.msra.mxu0 %v2320
    %2638 = vmatprep.subr.mxu0 0.0
    %2639 = vmatpush2.msra.mxu0 0.0
    %2640 = vmatprep.subr.mxu0 0.0
    %2641 = vmatpush2.msra.mxu0 0.0
    %2642 = vmatprep.subr.mxu0 0.0
    %2643 = vmatpush2.msra.mxu0 0.0
    %2644 = vmatprep.subr.mxu0 0.0
    %2645 = vmatpush2.msra.mxu0 0.0
    %2646 = vmatprep.subr.mxu0 0.0
    %2647 = vmatpush2.msra.mxu0 0.0
    %2648 = vmatprep.subr.mxu0 0.0
    %2649 = vmatpush2.msra.mxu0 0.0
    %2650 = vmatprep.subr.mxu0 0.0
    %2651 = vmatpush2.msra.mxu0 0.0
    %2652 = vmatprep.subr.mxu0 0.0
    %2653 = vmatpush2.msra.mxu0 0.0
    %2654 = vmatprep.subr.mxu0 0.0
    %2655 = vmatpush2.msra.mxu0 0.0
    %2656 = vmatprep.subr.mxu0 0.0
    %2657 = vmatpush2.msra.mxu0 0.0
    %2658 = vmatprep.subr.mxu0 0.0
    %2659 = vmatpush2.msra.mxu0 0.0
    %2660 = vmatprep.subr.mxu0 0.0
    %2661 = vmatpush2.msra.mxu0 0.0
    %2662 = vmatprep.subr.mxu0 0.0
    %2663 = vmatpush2.msra.mxu0 0.0
    %2664 = vmatprep.subr.mxu0 0.0
    %2665 = vmatpush2.msra.mxu0 0.0
    %2666 = vmatprep.subr.mxu0 0.0
    %2667 = vmatpush2.msra.mxu0 0.0
    %2668 = vmatprep.subr.mxu0 0.0
    %2669 = vmatpush2.msra.mxu0 0.0
    %2670 = vmatprep.mubr.f32.mxu0 0.0
    %2671 = vmatmul.mubr.f32.gmra.mxu0 %v2534
    %v2672 = vpop.f32.mrf.mxu0
    %v2673 = vadd.f32 0.0, %v2672
    %v2674 = vpop.f32.mrf.mxu0
    %2675 = vdwg.mxu0
    %v2677 = vrot.slane %v2602, 6
    %v2679 = vadd.f32 %v2233, %v2677
    %v2680 = vxor.u32 %v2679, 2147483648
    %v2681 = vmul.f32 %v2680, 1.442695
    %v2682 = vpow.pop %v2681
    %v2683 = vadd.f32 %v2682, 1.0
    %v2684 = vrcp.pop %v2683
    %v2685 = vmul.f32 1.0, %v2684
    %v2687 = vrot.slane %v2604, 6
    %v2689 = vadd.f32 %v2235, %v2687
    %v2690 = vxor.u32 %v2689, 2147483648
    %v2691 = vmul.f32 %v2690, 1.442695
    %v2692 = vpow.pop %v2691
    %v2693 = vadd.f32 %v2692, 1.0
    %v2694 = vrcp.pop %v2693
    %v2695 = vmul.f32 1.0, %v2694
    %v2696 = vadd.f32 %v2673, %v2526
    %v2698 = vrot.slane %v2696, 6
    %v2700 = vmul.f32 %v2685, %v2698
    %v2701 = vadd.f32 %v2310, %v2700
    %v2702 = vtanh.pop %v2701
    %v2704 = vrot.slane %v2702, 2
    %v2706 = vsub.f32 %v2534, %v2704
    %v2708 = vrot.slane %v2706, 6
    %v2710 = vmul.f32 %v2695, %v2708
    %v2711 = vadd.f32 %v2702, %v2710
    %v2713 = vrot.slane %v2711, 2
    %2715 = vmatprep.subr.mxu0 %v2364
    %2716 = vmatpush1.msra.mxu0 %v2363
    %2717 = vmatprep.subr.mxu0 %v2361
    %2718 = vmatpush1.msra.mxu0 %v2360
    %2719 = vmatprep.subr.mxu0 %v2358
    %2720 = vmatpush1.msra.mxu0 %v2357
    %2721 = vmatprep.subr.mxu0 %v2355
    %2722 = vmatpush1.msra.mxu0 %v2354
    %2723 = vmatprep.subr.mxu0 %v2352
    %2724 = vmatpush1.msra.mxu0 %v2351
    %2725 = vmatprep.subr.mxu0 %v2349
    %2726 = vmatpush1.msra.mxu0 %v2348
    %2727 = vmatprep.subr.mxu0 %v2346
    %2728 = vmatpush1.msra.mxu0 %v2345
    %2729 = vmatprep.subr.mxu0 %v2343
    %2730 = vmatpush1.msra.mxu0 %v2342
    %2731 = vmatprep.subr.mxu0 %v2340
    %2732 = vmatpush1.msra.mxu0 %v2339
    %2733 = vmatprep.subr.mxu0 %v2337
    %2734 = vmatpush1.msra.mxu0 %v2336
    %2735 = vmatprep.subr.mxu0 %v2334
    %2736 = vmatpush1.msra.mxu0 %v2333
    %2737 = vmatprep.subr.mxu0 %v2331
    %2738 = vmatpush1.msra.mxu0 %v2330
    %2739 = vmatprep.subr.mxu0 %v2328
    %2740 = vmatpush1.msra.mxu0 %v2327
    %2741 = vmatprep.subr.mxu0 %v2325
    %2742 = vmatpush1.msra.mxu0 %v2324
    %2743 = vmatprep.subr.mxu0 %v2322
    %2744 = vmatpush1.msra.mxu0 %v2321
    %2745 = vmatprep.subr.mxu0 %v2319
    %2746 = vmatpush1.msra.mxu0 %v2318
    %2747 = vmatprep.subr.mxu0 0.0
    %2748 = vmatpush2.msra.mxu0 0.0
    %2749 = vmatprep.subr.mxu0 0.0
    %2750 = vmatpush2.msra.mxu0 0.0
    %2751 = vmatprep.subr.mxu0 0.0
    %2752 = vmatpush2.msra.mxu0 0.0
    %2753 = vmatprep.subr.mxu0 0.0
    %2754 = vmatpush2.msra.mxu0 0.0
    %2755 = vmatprep.subr.mxu0 0.0
    %2756 = vmatpush2.msra.mxu0 0.0
    %2757 = vmatprep.subr.mxu0 0.0
    %2758 = vmatpush2.msra.mxu0 0.0
    %2759 = vmatprep.subr.mxu0 0.0
    %2760 = vmatpush2.msra.mxu0 0.0
    %2761 = vmatprep.subr.mxu0 0.0
    %2762 = vmatpush2.msra.mxu0 0.0
    %2763 = vmatprep.subr.mxu0 0.0
    %2764 = vmatpush2.msra.mxu0 0.0
    %2765 = vmatprep.subr.mxu0 0.0
    %2766 = vmatpush2.msra.mxu0 0.0
    %2767 = vmatprep.subr.mxu0 0.0
    %2768 = vmatpush2.msra.mxu0 0.0
    %2769 = vmatprep.subr.mxu0 0.0
    %2770 = vmatpush2.msra.mxu0 0.0
    %2771 = vmatprep.subr.mxu0 0.0
    %2772 = vmatpush2.msra.mxu0 0.0
    %2773 = vmatprep.subr.mxu0 0.0
    %2774 = vmatpush2.msra.mxu0 0.0
    %2775 = vmatprep.subr.mxu0 0.0
    %2776 = vmatpush2.msra.mxu0 0.0
    %2777 = vmatprep.subr.mxu0 0.0
    %2778 = vmatpush2.msra.mxu0 0.0
    %2779 = vmatprep.mubr.f32.mxu0 0.0
    %2780 = vmatmul.mubr.f32.gmra.mxu0 %v2713
    %v2781 = vpop.f32.mrf.mxu0
    %v2782 = vadd.f32 0.0, %v2781
    %v2783 = vpop.f32.mrf.mxu0
    %v2784 = vadd.f32 0.0, %v2783
    %2785 = vdwg.mxu0
    %2786 = vmatprep.subr.mxu0 0.0
    %2787 = vmatpush1.msra.mxu0 %v2365
    %2788 = vmatprep.subr.mxu0 0.0
    %2789 = vmatpush1.msra.mxu0 %v2362
    %2790 = vmatprep.subr.mxu0 0.0
    %2791 = vmatpush1.msra.mxu0 %v2359
    %2792 = vmatprep.subr.mxu0 0.0
    %2793 = vmatpush1.msra.mxu0 %v2356
    %2794 = vmatprep.subr.mxu0 0.0
    %2795 = vmatpush1.msra.mxu0 %v2353
    %2796 = vmatprep.subr.mxu0 0.0
    %2797 = vmatpush1.msra.mxu0 %v2350
    %2798 = vmatprep.subr.mxu0 0.0
    %2799 = vmatpush1.msra.mxu0 %v2347
    %2800 = vmatprep.subr.mxu0 0.0
    %2801 = vmatpush1.msra.mxu0 %v2344
    %2802 = vmatprep.subr.mxu0 0.0
    %2803 = vmatpush1.msra.mxu0 %v2341
    %2804 = vmatprep.subr.mxu0 0.0
    %2805 = vmatpush1.msra.mxu0 %v2338
    %2806 = vmatprep.subr.mxu0 0.0
    %2807 = vmatpush1.msra.mxu0 %v2335
    %2808 = vmatprep.subr.mxu0 0.0
    %2809 = vmatpush1.msra.mxu0 %v2332
    %2810 = vmatprep.subr.mxu0 0.0
    %2811 = vmatpush1.msra.mxu0 %v2329
    %2812 = vmatprep.subr.mxu0 0.0
    %2813 = vmatpush1.msra.mxu0 %v2326
    %2814 = vmatprep.subr.mxu0 0.0
    %2815 = vmatpush1.msra.mxu0 %v2323
    %2816 = vmatprep.subr.mxu0 0.0
    %2817 = vmatpush1.msra.mxu0 %v2320
    %2818 = vmatprep.subr.mxu0 0.0
    %2819 = vmatpush2.msra.mxu0 0.0
    %2820 = vmatprep.subr.mxu0 0.0
    %2821 = vmatpush2.msra.mxu0 0.0
    %2822 = vmatprep.subr.mxu0 0.0
    %2823 = vmatpush2.msra.mxu0 0.0
    %2824 = vmatprep.subr.mxu0 0.0
    %2825 = vmatpush2.msra.mxu0 0.0
    %2826 = vmatprep.subr.mxu0 0.0
    %2827 = vmatpush2.msra.mxu0 0.0
    %2828 = vmatprep.subr.mxu0 0.0
    %2829 = vmatpush2.msra.mxu0 0.0
    %2830 = vmatprep.subr.mxu0 0.0
    %2831 = vmatpush2.msra.mxu0 0.0
    %2832 = vmatprep.subr.mxu0 0.0
    %2833 = vmatpush2.msra.mxu0 0.0
    %2834 = vmatprep.subr.mxu0 0.0
    %2835 = vmatpush2.msra.mxu0 0.0
    %2836 = vmatprep.subr.mxu0 0.0
    %2837 = vmatpush2.msra.mxu0 0.0
    %2838 = vmatprep.subr.mxu0 0.0
    %2839 = vmatpush2.msra.mxu0 0.0
    %2840 = vmatprep.subr.mxu0 0.0
    %2841 = vmatpush2.msra.mxu0 0.0
    %2842 = vmatprep.subr.mxu0 0.0
    %2843 = vmatpush2.msra.mxu0 0.0
    %2844 = vmatprep.subr.mxu0 0.0
    %2845 = vmatpush2.msra.mxu0 0.0
    %2846 = vmatprep.subr.mxu0 0.0
    %2847 = vmatpush2.msra.mxu0 0.0
    %2848 = vmatprep.subr.mxu0 0.0
    %2849 = vmatpush2.msra.mxu0 0.0
    %2850 = vmatprep.mubr.f32.mxu0 0.0
    %2851 = vmatmul.mubr.f32.gmra.mxu0 %v2713
    %v2852 = vpop.f32.mrf.mxu0
    %v2853 = vadd.f32 0.0, %v2852
    %v2854 = vpop.f32.mrf.mxu0
    %2855 = vdwg.mxu0
    %v2857 = vrot.slane %v2782, 4
    %v2859 = vadd.f32 %v2233, %v2857
    %v2860 = vxor.u32 %v2859, 2147483648
    %v2861 = vmul.f32 %v2860, 1.442695
    %v2862 = vpow.pop %v2861
    %v2863 = vadd.f32 %v2862, 1.0
    %v2864 = vrcp.pop %v2863
    %v2865 = vmul.f32 1.0, %v2864
    %v2867 = vrot.slane %v2784, 4
    %v2869 = vadd.f32 %v2235, %v2867
    %v2870 = vxor.u32 %v2869, 2147483648
    %v2871 = vmul.f32 %v2870, 1.442695
    %v2872 = vpow.pop %v2871
    %v2873 = vadd.f32 %v2872, 1.0
    %v2874 = vrcp.pop %v2873
    %v2875 = vmul.f32 1.0, %v2874
    %v2876 = vadd.f32 %v2853, %v2526
    %v2878 = vrot.slane %v2876, 4
    %v2880 = vmul.f32 %v2865, %v2878
    %v2881 = vadd.f32 %v2310, %v2880
    %v2882 = vtanh.pop %v2881
    %v2884 = vrot.slane %v2882, 2
    %v2886 = vsub.f32 %v2711, %v2884
    %v2888 = vrot.slane %v2886, 6
    %v2890 = vmul.f32 %v2875, %v2888
    %v2891 = vadd.f32 %v2882, %v2890
    %v2893 = vrot.slane %v2891, 4
    %2895 = vmatprep.subr.mxu0 %v2364
    %2896 = vmatpush1.msra.mxu0 %v2363
    %2897 = vmatprep.subr.mxu0 %v2361
    %2898 = vmatpush1.msra.mxu0 %v2360
    %2899 = vmatprep.subr.mxu0 %v2358
    %2900 = vmatpush1.msra.mxu0 %v2357
    %2901 = vmatprep.subr.mxu0 %v2355
    %2902 = vmatpush1.msra.mxu0 %v2354
    %2903 = vmatprep.subr.mxu0 %v2352
    %2904 = vmatpush1.msra.mxu0 %v2351
    %2905 = vmatprep.subr.mxu0 %v2349
    %2906 = vmatpush1.msra.mxu0 %v2348
    %2907 = vmatprep.subr.mxu0 %v2346
    %2908 = vmatpush1.msra.mxu0 %v2345
    %2909 = vmatprep.subr.mxu0 %v2343
    %2910 = vmatpush1.msra.mxu0 %v2342
    %2911 = vmatprep.subr.mxu0 %v2340
    %2912 = vmatpush1.msra.mxu0 %v2339
    %2913 = vmatprep.subr.mxu0 %v2337
    %2914 = vmatpush1.msra.mxu0 %v2336
    %2915 = vmatprep.subr.mxu0 %v2334
    %2916 = vmatpush1.msra.mxu0 %v2333
    %2917 = vmatprep.subr.mxu0 %v2331
    %2918 = vmatpush1.msra.mxu0 %v2330
    %2919 = vmatprep.subr.mxu0 %v2328
    %2920 = vmatpush1.msra.mxu0 %v2327
    %2921 = vmatprep.subr.mxu0 %v2325
    %2922 = vmatpush1.msra.mxu0 %v2324
    %2923 = vmatprep.subr.mxu0 %v2322
    %2924 = vmatpush1.msra.mxu0 %v2321
    %2925 = vmatprep.subr.mxu0 %v2319
    %2926 = vmatpush1.msra.mxu0 %v2318
    %2927 = vmatprep.subr.mxu0 0.0
    %2928 = vmatpush2.msra.mxu0 0.0
    %2929 = vmatprep.subr.mxu0 0.0
    %2930 = vmatpush2.msra.mxu0 0.0
    %2931 = vmatprep.subr.mxu0 0.0
    %2932 = vmatpush2.msra.mxu0 0.0
    %2933 = vmatprep.subr.mxu0 0.0
    %2934 = vmatpush2.msra.mxu0 0.0
    %2935 = vmatprep.subr.mxu0 0.0
    %2936 = vmatpush2.msra.mxu0 0.0
    %2937 = vmatprep.subr.mxu0 0.0
    %2938 = vmatpush2.msra.mxu0 0.0
    %2939 = vmatprep.subr.mxu0 0.0
    %2940 = vmatpush2.msra.mxu0 0.0
    %2941 = vmatprep.subr.mxu0 0.0
    %2942 = vmatpush2.msra.mxu0 0.0
    %2943 = vmatprep.subr.mxu0 0.0
    %2944 = vmatpush2.msra.mxu0 0.0
    %2945 = vmatprep.subr.mxu0 0.0
    %2946 = vmatpush2.msra.mxu0 0.0
    %2947 = vmatprep.subr.mxu0 0.0
    %2948 = vmatpush2.msra.mxu0 0.0
    %2949 = vmatprep.subr.mxu0 0.0
    %2950 = vmatpush2.msra.mxu0 0.0
    %2951 = vmatprep.subr.mxu0 0.0
    %2952 = vmatpush2.msra.mxu0 0.0
    %2953 = vmatprep.subr.mxu0 0.0
    %2954 = vmatpush2.msra.mxu0 0.0
    %2955 = vmatprep.subr.mxu0 0.0
    %2956 = vmatpush2.msra.mxu0 0.0
    %2957 = vmatprep.subr.mxu0 0.0
    %2958 = vmatpush2.msra.mxu0 0.0
    %2959 = vmatprep.mubr.f32.mxu0 0.0
    %2960 = vmatmul.mubr.f32.gmra.mxu0 %v2893
    %v2961 = vpop.f32.mrf.mxu0
    %v2962 = vadd.f32 0.0, %v2961
    %v2963 = vpop.f32.mrf.mxu0
    %v2964 = vadd.f32 0.0, %v2963
    %2965 = vdwg.mxu0
    %2966 = vmatprep.subr.mxu0 0.0
    %2967 = vmatpush1.msra.mxu0 %v2365
    %2968 = vmatprep.subr.mxu0 0.0
    %2969 = vmatpush1.msra.mxu0 %v2362
    %2970 = vmatprep.subr.mxu0 0.0
    %2971 = vmatpush1.msra.mxu0 %v2359
    %2972 = vmatprep.subr.mxu0 0.0
    %2973 = vmatpush1.msra.mxu0 %v2356
    %2974 = vmatprep.subr.mxu0 0.0
    %2975 = vmatpush1.msra.mxu0 %v2353
    %2976 = vmatprep.subr.mxu0 0.0
    %2977 = vmatpush1.msra.mxu0 %v2350
    %2978 = vmatprep.subr.mxu0 0.0
    %2979 = vmatpush1.msra.mxu0 %v2347
    %2980 = vmatprep.subr.mxu0 0.0
    %2981 = vmatpush1.msra.mxu0 %v2344
    %2982 = vmatprep.subr.mxu0 0.0
    %2983 = vmatpush1.msra.mxu0 %v2341
    %2984 = vmatprep.subr.mxu0 0.0
    %2985 = vmatpush1.msra.mxu0 %v2338
    %2986 = vmatprep.subr.mxu0 0.0
    %2987 = vmatpush1.msra.mxu0 %v2335
    %2988 = vmatprep.subr.mxu0 0.0
    %2989 = vmatpush1.msra.mxu0 %v2332
    %2990 = vmatprep.subr.mxu0 0.0
    %2991 = vmatpush1.msra.mxu0 %v2329
    %2992 = vmatprep.subr.mxu0 0.0
    %2993 = vmatpush1.msra.mxu0 %v2326
    %2994 = vmatprep.subr.mxu0 0.0
    %2995 = vmatpush1.msra.mxu0 %v2323
    %2996 = vmatprep.subr.mxu0 0.0
    %2997 = vmatpush1.msra.mxu0 %v2320
    %2998 = vmatprep.subr.mxu0 0.0
    %2999 = vmatpush2.msra.mxu0 0.0
    %3000 = vmatprep.subr.mxu0 0.0
    %3001 = vmatpush2.msra.mxu0 0.0
    %3002 = vmatprep.subr.mxu0 0.0
    %3003 = vmatpush2.msra.mxu0 0.0
    %3004 = vmatprep.subr.mxu0 0.0
    %3005 = vmatpush2.msra.mxu0 0.0
    %3006 = vmatprep.subr.mxu0 0.0
    %3007 = vmatpush2.msra.mxu0 0.0
    %3008 = vmatprep.subr.mxu0 0.0
    %3009 = vmatpush2.msra.mxu0 0.0
    %3010 = vmatprep.subr.mxu0 0.0
    %3011 = vmatpush2.msra.mxu0 0.0
    %3012 = vmatprep.subr.mxu0 0.0
    %3013 = vmatpush2.msra.mxu0 0.0
    %3014 = vmatprep.subr.mxu0 0.0
    %3015 = vmatpush2.msra.mxu0 0.0
    %3016 = vmatprep.subr.mxu0 0.0
    %3017 = vmatpush2.msra.mxu0 0.0
    %3018 = vmatprep.subr.mxu0 0.0
    %3019 = vmatpush2.msra.mxu0 0.0
    %3020 = vmatprep.subr.mxu0 0.0
    %3021 = vmatpush2.msra.mxu0 0.0
    %3022 = vmatprep.subr.mxu0 0.0
    %3023 = vmatpush2.msra.mxu0 0.0
    %3024 = vmatprep.subr.mxu0 0.0
    %3025 = vmatpush2.msra.mxu0 0.0
    %3026 = vmatprep.subr.mxu0 0.0
    %3027 = vmatpush2.msra.mxu0 0.0
    %3028 = vmatprep.subr.mxu0 0.0
    %3029 = vmatpush2.msra.mxu0 0.0
    %3030 = vmatprep.mubr.f32.mxu0 0.0
    %3031 = vmatmul.mubr.f32.gmra.mxu0 %v2893
    %v3032 = vpop.f32.mrf.mxu0
    %v3033 = vadd.f32 0.0, %v3032
    %v3034 = vpop.f32.mrf.mxu0
    %3035 = vdwg.mxu0
    %v3037 = vrot.slane %v2962, 2
    %v3039 = vadd.f32 %v2233, %v3037
    %v3040 = vxor.u32 %v3039, 2147483648
    %v3041 = vmul.f32 %v3040, 1.442695
    %v3042 = vpow.pop %v3041
    %v3043 = vadd.f32 %v3042, 1.0
    %v3044 = vrcp.pop %v3043
    %v3045 = vmul.f32 1.0, %v3044
    %v3047 = vrot.slane %v2964, 2
    %v3049 = vadd.f32 %v2235, %v3047
    %v3050 = vxor.u32 %v3049, 2147483648
    %v3051 = vmul.f32 %v3050, 1.442695
    %v3052 = vpow.pop %v3051
    %v3053 = vadd.f32 %v3052, 1.0
    %v3054 = vrcp.pop %v3053
    %v3055 = vmul.f32 1.0, %v3054
    %v3056 = vadd.f32 %v3033, %v2526
    %v3058 = vrot.slane %v3056, 2
    %v3060 = vmul.f32 %v3045, %v3058
    %v3061 = vadd.f32 %v2310, %v3060
    %v3062 = vtanh.pop %v3061
    %v3064 = vrot.slane %v3062, 2
    %v3066 = vsub.f32 %v2891, %v3064
    %v3068 = vrot.slane %v3066, 6
    %v3070 = vmul.f32 %v3055, %v3068
    %v3071 = vadd.f32 %v3062, %v3070
    %v3073 = vrot.slane %v3071, 6
    %3075 = vmatprep.subr.mxu0 %v2364
    %3076 = vmatpush1.msra.mxu0 %v2363
    %3077 = vmatprep.subr.mxu0 %v2361
    %3078 = vmatpush1.msra.mxu0 %v2360
    %3079 = vmatprep.subr.mxu0 %v2358
    %3080 = vmatpush1.msra.mxu0 %v2357
    %3081 = vmatprep.subr.mxu0 %v2355
    %3082 = vmatpush1.msra.mxu0 %v2354
    %3083 = vmatprep.subr.mxu0 %v2352
    %3084 = vmatpush1.msra.mxu0 %v2351
    %3085 = vmatprep.subr.mxu0 %v2349
    %3086 = vmatpush1.msra.mxu0 %v2348
    %3087 = vmatprep.subr.mxu0 %v2346
    %3088 = vmatpush1.msra.mxu0 %v2345
    %3089 = vmatprep.subr.mxu0 %v2343
    %3090 = vmatpush1.msra.mxu0 %v2342
    %3091 = vmatprep.subr.mxu0 %v2340
    %3092 = vmatpush1.msra.mxu0 %v2339
    %3093 = vmatprep.subr.mxu0 %v2337
    %3094 = vmatpush1.msra.mxu0 %v2336
    %3095 = vmatprep.subr.mxu0 %v2334
    %3096 = vmatpush1.msra.mxu0 %v2333
    %3097 = vmatprep.subr.mxu0 %v2331
    %3098 = vmatpush1.msra.mxu0 %v2330
    %3099 = vmatprep.subr.mxu0 %v2328
    %3100 = vmatpush1.msra.mxu0 %v2327
    %3101 = vmatprep.subr.mxu0 %v2325
    %3102 = vmatpush1.msra.mxu0 %v2324
    %3103 = vmatprep.subr.mxu0 %v2322
    %3104 = vmatpush1.msra.mxu0 %v2321
    %3105 = vmatprep.subr.mxu0 %v2319
    %3106 = vmatpush1.msra.mxu0 %v2318
    %3107 = vmatprep.subr.mxu0 0.0
    %3108 = vmatpush2.msra.mxu0 0.0
    %3109 = vmatprep.subr.mxu0 0.0
    %3110 = vmatpush2.msra.mxu0 0.0
    %3111 = vmatprep.subr.mxu0 0.0
    %3112 = vmatpush2.msra.mxu0 0.0
    %3113 = vmatprep.subr.mxu0 0.0
    %3114 = vmatpush2.msra.mxu0 0.0
    %3115 = vmatprep.subr.mxu0 0.0
    %3116 = vmatpush2.msra.mxu0 0.0
    %3117 = vmatprep.subr.mxu0 0.0
    %3118 = vmatpush2.msra.mxu0 0.0
    %3119 = vmatprep.subr.mxu0 0.0
    %3120 = vmatpush2.msra.mxu0 0.0
    %3121 = vmatprep.subr.mxu0 0.0
    %3122 = vmatpush2.msra.mxu0 0.0
    %3123 = vmatprep.subr.mxu0 0.0
    %3124 = vmatpush2.msra.mxu0 0.0
    %3125 = vmatprep.subr.mxu0 0.0
    %3126 = vmatpush2.msra.mxu0 0.0
    %3127 = vmatprep.subr.mxu0 0.0
    %3128 = vmatpush2.msra.mxu0 0.0
    %3129 = vmatprep.subr.mxu0 0.0
    %3130 = vmatpush2.msra.mxu0 0.0
    %3131 = vmatprep.subr.mxu0 0.0
    %3132 = vmatpush2.msra.mxu0 0.0
    %3133 = vmatprep.subr.mxu0 0.0
    %3134 = vmatpush2.msra.mxu0 0.0
    %3135 = vmatprep.subr.mxu0 0.0
    %3136 = vmatpush2.msra.mxu0 0.0
    %3137 = vmatprep.subr.mxu0 0.0
    %3138 = vmatpush2.msra.mxu0 0.0
    %3139 = vmatprep.mubr.f32.mxu0 0.0
    %3140 = vmatmul.mubr.f32.gmra.mxu0 %v3073
    %v3141 = vpop.f32.mrf.mxu0
    %v3142 = vadd.f32 0.0, %v3141
    %v3143 = vpop.f32.mrf.mxu0
    %v3144 = vadd.f32 0.0, %v3143
    %3145 = vdwg.mxu0
    %3146 = vmatprep.subr.mxu0 0.0
    %3147 = vmatpush1.msra.mxu0 %v2365
    %3148 = vmatprep.subr.mxu0 0.0
    %3149 = vmatpush1.msra.mxu0 %v2362
    %3150 = vmatprep.subr.mxu0 0.0
    %3151 = vmatpush1.msra.mxu0 %v2359
    %3152 = vmatprep.subr.mxu0 0.0
    %3153 = vmatpush1.msra.mxu0 %v2356
    %3154 = vmatprep.subr.mxu0 0.0
    %3155 = vmatpush1.msra.mxu0 %v2353
    %3156 = vmatprep.subr.mxu0 0.0
    %3157 = vmatpush1.msra.mxu0 %v2350
    %3158 = vmatprep.subr.mxu0 0.0
    %3159 = vmatpush1.msra.mxu0 %v2347
    %3160 = vmatprep.subr.mxu0 0.0
    %3161 = vmatpush1.msra.mxu0 %v2344
    %3162 = vmatprep.subr.mxu0 0.0
    %3163 = vmatpush1.msra.mxu0 %v2341
    %3164 = vmatprep.subr.mxu0 0.0
    %3165 = vmatpush1.msra.mxu0 %v2338
    %3166 = vmatprep.subr.mxu0 0.0
    %3167 = vmatpush1.msra.mxu0 %v2335
    %3168 = vmatprep.subr.mxu0 0.0
    %3169 = vmatpush1.msra.mxu0 %v2332
    %3170 = vmatprep.subr.mxu0 0.0
    %3171 = vmatpush1.msra.mxu0 %v2329
    %3172 = vmatprep.subr.mxu0 0.0
    %3173 = vmatpush1.msra.mxu0 %v2326
    %3174 = vmatprep.subr.mxu0 0.0
    %3175 = vmatpush1.msra.mxu0 %v2323
    %3176 = vmatprep.subr.mxu0 0.0
    %3177 = vmatpush1.msra.mxu0 %v2320
    %3178 = vmatprep.subr.mxu0 0.0
    %3179 = vmatpush2.msra.mxu0 0.0
    %3180 = vmatprep.subr.mxu0 0.0
    %3181 = vmatpush2.msra.mxu0 0.0
    %3182 = vmatprep.subr.mxu0 0.0
    %3183 = vmatpush2.msra.mxu0 0.0
    %3184 = vmatprep.subr.mxu0 0.0
    %3185 = vmatpush2.msra.mxu0 0.0
    %3186 = vmatprep.subr.mxu0 0.0
    %3187 = vmatpush2.msra.mxu0 0.0
    %3188 = vmatprep.subr.mxu0 0.0
    %3189 = vmatpush2.msra.mxu0 0.0
    %3190 = vmatprep.subr.mxu0 0.0
    %3191 = vmatpush2.msra.mxu0 0.0
    %3192 = vmatprep.subr.mxu0 0.0
    %3193 = vmatpush2.msra.mxu0 0.0
    %3194 = vmatprep.subr.mxu0 0.0
    %3195 = vmatpush2.msra.mxu0 0.0
    %3196 = vmatprep.subr.mxu0 0.0
    %3197 = vmatpush2.msra.mxu0 0.0
    %3198 = vmatprep.subr.mxu0 0.0
    %3199 = vmatpush2.msra.mxu0 0.0
    %3200 = vmatprep.subr.mxu0 0.0
    %3201 = vmatpush2.msra.mxu0 0.0
    %3202 = vmatprep.subr.mxu0 0.0
    %3203 = vmatpush2.msra.mxu0 0.0
    %3204 = vmatprep.subr.mxu0 0.0
    %3205 = vmatpush2.msra.mxu0 0.0
    %3206 = vmatprep.subr.mxu0 0.0
    %3207 = vmatpush2.msra.mxu0 0.0
    %3208 = vmatprep.subr.mxu0 0.0
    %3209 = vmatpush2.msra.mxu0 0.0
    %3210 = vmatprep.mubr.f32.mxu0 0.0
    %3211 = vmatmul.mubr.f32.gmra.mxu0 %v3073
    %v3212 = vpop.f32.mrf.mxu0
    %v3213 = vadd.f32 0.0, %v3212
    %v3214 = vpop.f32.mrf.mxu0
    %3215 = vdwg.mxu0
    %v3216 = vadd.f32 %v2239, %v3142
    %v3217 = vxor.u32 %v3216, 2147483648
    %v3218 = vmul.f32 %v3217, 1.442695
    %v3219 = vpow.pop %v3218
    %v3220 = vadd.f32 %v3219, 1.0
    %v3221 = vrcp.pop %v3220
    %v3222 = vmul.f32 1.0, %v3221
    %v3223 = vadd.f32 %v2241, %v3144
    %v3224 = vxor.u32 %v3223, 2147483648
    %v3225 = vmul.f32 %v3224, 1.442695
    %v3226 = vpow.pop %v3225
    %v3227 = vadd.f32 %v3226, 1.0
    %v3228 = vrcp.pop %v3227
    %v3229 = vmul.f32 1.0, %v3228
    %v3230 = vadd.f32 %v3213, %v2526
    %v3231 = vmul.f32 %v3222, %v3230
    %v3232 = vadd.f32 %v2315, %v3231
    %v3233 = vtanh.pop %v3232
    %v3235 = vrot.slane %v3233, 2
    %v3237 = vsub.f32 %v3071, %v3235
    %v3239 = vrot.slane %v3237, 6
    %v3241 = vmul.f32 %v3229, %v3239
    %v3242 = vadd.f32 %v3233, %v3241
    %3243 = vmatprep.subr.mxu0 %v2364
    %3244 = vmatpush1.msra.mxu0 %v2363
    %3245 = vmatprep.subr.mxu0 %v2361
    %3246 = vmatpush1.msra.mxu0 %v2360
    %3247 = vmatprep.subr.mxu0 %v2358
    %3248 = vmatpush1.msra.mxu0 %v2357
    %3249 = vmatprep.subr.mxu0 %v2355
    %3250 = vmatpush1.msra.mxu0 %v2354
    %3251 = vmatprep.subr.mxu0 %v2352
    %3252 = vmatpush1.msra.mxu0 %v2351
    %3253 = vmatprep.subr.mxu0 %v2349
    %3254 = vmatpush1.msra.mxu0 %v2348
    %3255 = vmatprep.subr.mxu0 %v2346
    %3256 = vmatpush1.msra.mxu0 %v2345
    %3257 = vmatprep.subr.mxu0 %v2343
    %3258 = vmatpush1.msra.mxu0 %v2342
    %3259 = vmatprep.subr.mxu0 %v2340
    %3260 = vmatpush1.msra.mxu0 %v2339
    %3261 = vmatprep.subr.mxu0 %v2337
    %3262 = vmatpush1.msra.mxu0 %v2336
    %3263 = vmatprep.subr.mxu0 %v2334
    %3264 = vmatpush1.msra.mxu0 %v2333
    %3265 = vmatprep.subr.mxu0 %v2331
    %3266 = vmatpush1.msra.mxu0 %v2330
    %3267 = vmatprep.subr.mxu0 %v2328
    %3268 = vmatpush1.msra.mxu0 %v2327
    %3269 = vmatprep.subr.mxu0 %v2325
    %3270 = vmatpush1.msra.mxu0 %v2324
    %3271 = vmatprep.subr.mxu0 %v2322
    %3272 = vmatpush1.msra.mxu0 %v2321
    %3273 = vmatprep.subr.mxu0 %v2319
    %3274 = vmatpush1.msra.mxu0 %v2318
    %3275 = vmatprep.subr.mxu0 0.0
    %3276 = vmatpush2.msra.mxu0 0.0
    %3277 = vmatprep.subr.mxu0 0.0
    %3278 = vmatpush2.msra.mxu0 0.0
    %3279 = vmatprep.subr.mxu0 0.0
    %3280 = vmatpush2.msra.mxu0 0.0
    %3281 = vmatprep.subr.mxu0 0.0
    %3282 = vmatpush2.msra.mxu0 0.0
    %3283 = vmatprep.subr.mxu0 0.0
    %3284 = vmatpush2.msra.mxu0 0.0
    %3285 = vmatprep.subr.mxu0 0.0
    %3286 = vmatpush2.msra.mxu0 0.0
    %3287 = vmatprep.subr.mxu0 0.0
    %3288 = vmatpush2.msra.mxu0 0.0
    %3289 = vmatprep.subr.mxu0 0.0
    %3290 = vmatpush2.msra.mxu0 0.0
    %3291 = vmatprep.subr.mxu0 0.0
    %3292 = vmatpush2.msra.mxu0 0.0
    %3293 = vmatprep.subr.mxu0 0.0
    %3294 = vmatpush2.msra.mxu0 0.0
    %3295 = vmatprep.subr.mxu0 0.0
    %3296 = vmatpush2.msra.mxu0 0.0
    %3297 = vmatprep.subr.mxu0 0.0
    %3298 = vmatpush2.msra.mxu0 0.0
    %3299 = vmatprep.subr.mxu0 0.0
    %3300 = vmatpush2.msra.mxu0 0.0
    %3301 = vmatprep.subr.mxu0 0.0
    %3302 = vmatpush2.msra.mxu0 0.0
    %3303 = vmatprep.subr.mxu0 0.0
    %3304 = vmatpush2.msra.mxu0 0.0
    %3305 = vmatprep.subr.mxu0 0.0
    %3306 = vmatpush2.msra.mxu0 0.0
    %3307 = vmatprep.mubr.f32.mxu0 0.0
    %3308 = vmatmul.mubr.f32.gmra.mxu0 %v3242
    %v3309 = vpop.f32.mrf.mxu0
    %v3310 = vadd.f32 0.0, %v3309
    %v3311 = vpop.f32.mrf.mxu0
    %v3312 = vadd.f32 0.0, %v3311
    %3313 = vdwg.mxu0
    %3314 = vmatprep.subr.mxu0 0.0
    %3315 = vmatpush1.msra.mxu0 %v2365
    %3316 = vmatprep.subr.mxu0 0.0
    %3317 = vmatpush1.msra.mxu0 %v2362
    %3318 = vmatprep.subr.mxu0 0.0
    %3319 = vmatpush1.msra.mxu0 %v2359
    %3320 = vmatprep.subr.mxu0 0.0
    %3321 = vmatpush1.msra.mxu0 %v2356
    %3322 = vmatprep.subr.mxu0 0.0
    %3323 = vmatpush1.msra.mxu0 %v2353
    %3324 = vmatprep.subr.mxu0 0.0
    %3325 = vmatpush1.msra.mxu0 %v2350
    %3326 = vmatprep.subr.mxu0 0.0
    %3327 = vmatpush1.msra.mxu0 %v2347
    %3328 = vmatprep.subr.mxu0 0.0
    %3329 = vmatpush1.msra.mxu0 %v2344
    %3330 = vmatprep.subr.mxu0 0.0
    %3331 = vmatpush1.msra.mxu0 %v2341
    %3332 = vmatprep.subr.mxu0 0.0
    %3333 = vmatpush1.msra.mxu0 %v2338
    %3334 = vmatprep.subr.mxu0 0.0
    %3335 = vmatpush1.msra.mxu0 %v2335
    %3336 = vmatprep.subr.mxu0 0.0
    %3337 = vmatpush1.msra.mxu0 %v2332
    %3338 = vmatprep.subr.mxu0 0.0
    %3339 = vmatpush1.msra.mxu0 %v2329
    %3340 = vmatprep.subr.mxu0 0.0
    %3341 = vmatpush1.msra.mxu0 %v2326
    %3342 = vmatprep.subr.mxu0 0.0
    %3343 = vmatpush1.msra.mxu0 %v2323
    %3344 = vmatprep.subr.mxu0 0.0
    %3345 = vmatpush1.msra.mxu0 %v2320
    %3346 = vmatprep.subr.mxu0 0.0
    %3347 = vmatpush2.msra.mxu0 0.0
    %3348 = vmatprep.subr.mxu0 0.0
    %3349 = vmatpush2.msra.mxu0 0.0
    %3350 = vmatprep.subr.mxu0 0.0
    %3351 = vmatpush2.msra.mxu0 0.0
    %3352 = vmatprep.subr.mxu0 0.0
    %3353 = vmatpush2.msra.mxu0 0.0
    %3354 = vmatprep.subr.mxu0 0.0
    %3355 = vmatpush2.msra.mxu0 0.0
    %3356 = vmatprep.subr.mxu0 0.0
    %3357 = vmatpush2.msra.mxu0 0.0
    %3358 = vmatprep.subr.mxu0 0.0
    %3359 = vmatpush2.msra.mxu0 0.0
    %3360 = vmatprep.subr.mxu0 0.0
    %3361 = vmatpush2.msra.mxu0 0.0
    %3362 = vmatprep.subr.mxu0 0.0
    %3363 = vmatpush2.msra.mxu0 0.0
    %3364 = vmatprep.subr.mxu0 0.0
    %3365 = vmatpush2.msra.mxu0 0.0
    %3366 = vmatprep.subr.mxu0 0.0
    %3367 = vmatpush2.msra.mxu0 0.0
    %3368 = vmatprep.subr.mxu0 0.0
    %3369 = vmatpush2.msra.mxu0 0.0
    %3370 = vmatprep.subr.mxu0 0.0
    %3371 = vmatpush2.msra.mxu0 0.0
    %3372 = vmatprep.subr.mxu0 0.0
    %3373 = vmatpush2.msra.mxu0 0.0
    %3374 = vmatprep.subr.mxu0 0.0
    %3375 = vmatpush2.msra.mxu0 0.0
    %3376 = vmatprep.subr.mxu0 0.0
    %3377 = vmatpush2.msra.mxu0 0.0
    %3378 = vmatprep.mubr.f32.mxu0 0.0
    %3379 = vmatmul.mubr.f32.gmra.mxu0 %v3242
    %v3380 = vpop.f32.mrf.mxu0
    %v3381 = vadd.f32 0.0, %v3380
    %v3382 = vpop.f32.mrf.mxu0
    %3383 = vdwg.mxu0
    %v3385 = vrot.slane %v3310, 6
    %v3387 = vadd.f32 %v2239, %v3385
    %v3388 = vxor.u32 %v3387, 2147483648
    %v3389 = vmul.f32 %v3388, 1.442695
    %v3390 = vpow.pop %v3389
    %v3391 = vadd.f32 %v3390, 1.0
    %v3392 = vrcp.pop %v3391
    %v3393 = vmul.f32 1.0, %v3392
    %v3395 = vrot.slane %v3312, 6
    %v3397 = vadd.f32 %v2241, %v3395
    %v3398 = vxor.u32 %v3397, 2147483648
    %v3399 = vmul.f32 %v3398, 1.442695
    %v3400 = vpow.pop %v3399
    %v3401 = vadd.f32 %v3400, 1.0
    %v3402 = vrcp.pop %v3401
    %v3403 = vmul.f32 1.0, %v3402
    %v3404 = vadd.f32 %v3381, %v2526
    %v3406 = vrot.slane %v3404, 6
    %v3408 = vmul.f32 %v3393, %v3406
    %v3409 = vadd.f32 %v2315, %v3408
    %v3410 = vtanh.pop %v3409
    %v3412 = vrot.slane %v3410, 2
    %v3414 = vsub.f32 %v3242, %v3412
    %v3416 = vrot.slane %v3414, 6
    %v3418 = vmul.f32 %v3403, %v3416
    %v3419 = vadd.f32 %v3410, %v3418
    %v3421 = vrot.slane %v3419, 2
    %3423 = vmatprep.subr.mxu0 %v2364
    %3424 = vmatpush1.msra.mxu0 %v2363
    %3425 = vmatprep.subr.mxu0 %v2361
    %3426 = vmatpush1.msra.mxu0 %v2360
    %3427 = vmatprep.subr.mxu0 %v2358
    %3428 = vmatpush1.msra.mxu0 %v2357
    %3429 = vmatprep.subr.mxu0 %v2355
    %3430 = vmatpush1.msra.mxu0 %v2354
    %3431 = vmatprep.subr.mxu0 %v2352
    %3432 = vmatpush1.msra.mxu0 %v2351
    %3433 = vmatprep.subr.mxu0 %v2349
    %3434 = vmatpush1.msra.mxu0 %v2348
    %3435 = vmatprep.subr.mxu0 %v2346
    %3436 = vmatpush1.msra.mxu0 %v2345
    %3437 = vmatprep.subr.mxu0 %v2343
    %3438 = vmatpush1.msra.mxu0 %v2342
    %3439 = vmatprep.subr.mxu0 %v2340
    %3440 = vmatpush1.msra.mxu0 %v2339
    %3441 = vmatprep.subr.mxu0 %v2337
    %3442 = vmatpush1.msra.mxu0 %v2336
    %3443 = vmatprep.subr.mxu0 %v2334
    %3444 = vmatpush1.msra.mxu0 %v2333
    %3445 = vmatprep.subr.mxu0 %v2331
    %3446 = vmatpush1.msra.mxu0 %v2330
    %3447 = vmatprep.subr.mxu0 %v2328
    %3448 = vmatpush1.msra.mxu0 %v2327
    %3449 = vmatprep.subr.mxu0 %v2325
    %3450 = vmatpush1.msra.mxu0 %v2324
    %3451 = vmatprep.subr.mxu0 %v2322
    %3452 = vmatpush1.msra.mxu0 %v2321
    %3453 = vmatprep.subr.mxu0 %v2319
    %3454 = vmatpush1.msra.mxu0 %v2318
    %3455 = vmatprep.subr.mxu0 0.0
    %3456 = vmatpush2.msra.mxu0 0.0
    %3457 = vmatprep.subr.mxu0 0.0
    %3458 = vmatpush2.msra.mxu0 0.0
    %3459 = vmatprep.subr.mxu0 0.0
    %3460 = vmatpush2.msra.mxu0 0.0
    %3461 = vmatprep.subr.mxu0 0.0
    %3462 = vmatpush2.msra.mxu0 0.0
    %3463 = vmatprep.subr.mxu0 0.0
    %3464 = vmatpush2.msra.mxu0 0.0
    %3465 = vmatprep.subr.mxu0 0.0
    %3466 = vmatpush2.msra.mxu0 0.0
    %3467 = vmatprep.subr.mxu0 0.0
    %3468 = vmatpush2.msra.mxu0 0.0
    %3469 = vmatprep.subr.mxu0 0.0
    %3470 = vmatpush2.msra.mxu0 0.0
    %3471 = vmatprep.subr.mxu0 0.0
    %3472 = vmatpush2.msra.mxu0 0.0
    %3473 = vmatprep.subr.mxu0 0.0
    %3474 = vmatpush2.msra.mxu0 0.0
    %3475 = vmatprep.subr.mxu0 0.0
    %3476 = vmatpush2.msra.mxu0 0.0
    %3477 = vmatprep.subr.mxu0 0.0
    %3478 = vmatpush2.msra.mxu0 0.0
    %3479 = vmatprep.subr.mxu0 0.0
    %3480 = vmatpush2.msra.mxu0 0.0
    %3481 = vmatprep.subr.mxu0 0.0
    %3482 = vmatpush2.msra.mxu0 0.0
    %3483 = vmatprep.subr.mxu0 0.0
    %3484 = vmatpush2.msra.mxu0 0.0
    %3485 = vmatprep.subr.mxu0 0.0
    %3486 = vmatpush2.msra.mxu0 0.0
    %3487 = vmatprep.mubr.f32.mxu0 0.0
    %3488 = vmatmul.mubr.f32.gmra.mxu0 %v3421
    %v3489 = vpop.f32.mrf.mxu0
    %v3490 = vadd.f32 0.0, %v3489
    %v3491 = vpop.f32.mrf.mxu0
    %v3492 = vadd.f32 0.0, %v3491
    %3493 = vdwg.mxu0
    %3494 = vmatprep.subr.mxu0 0.0
    %3495 = vmatpush1.msra.mxu0 %v2365
    %3496 = vmatprep.subr.mxu0 0.0
    %3497 = vmatpush1.msra.mxu0 %v2362
    %3498 = vmatprep.subr.mxu0 0.0
    %3499 = vmatpush1.msra.mxu0 %v2359
    %3500 = vmatprep.subr.mxu0 0.0
    %3501 = vmatpush1.msra.mxu0 %v2356
    %3502 = vmatprep.subr.mxu0 0.0
    %3503 = vmatpush1.msra.mxu0 %v2353
    %3504 = vmatprep.subr.mxu0 0.0
    %3505 = vmatpush1.msra.mxu0 %v2350
    %3506 = vmatprep.subr.mxu0 0.0
    %3507 = vmatpush1.msra.mxu0 %v2347
    %3508 = vmatprep.subr.mxu0 0.0
    %3509 = vmatpush1.msra.mxu0 %v2344
    %3510 = vmatprep.subr.mxu0 0.0
    %3511 = vmatpush1.msra.mxu0 %v2341
    %3512 = vmatprep.subr.mxu0 0.0
    %3513 = vmatpush1.msra.mxu0 %v2338
    %3514 = vmatprep.subr.mxu0 0.0
    %3515 = vmatpush1.msra.mxu0 %v2335
    %3516 = vmatprep.subr.mxu0 0.0
    %3517 = vmatpush1.msra.mxu0 %v2332
    %3518 = vmatprep.subr.mxu0 0.0
    %3519 = vmatpush1.msra.mxu0 %v2329
    %3520 = vmatprep.subr.mxu0 0.0
    %3521 = vmatpush1.msra.mxu0 %v2326
    %3522 = vmatprep.subr.mxu0 0.0
    %3523 = vmatpush1.msra.mxu0 %v2323
    %3524 = vmatprep.subr.mxu0 0.0
    %3525 = vmatpush1.msra.mxu0 %v2320
    %3526 = vmatprep.subr.mxu0 0.0
    %3527 = vmatpush2.msra.mxu0 0.0
    %3528 = vmatprep.subr.mxu0 0.0
    %3529 = vmatpush2.msra.mxu0 0.0
    %3530 = vmatprep.subr.mxu0 0.0
    %3531 = vmatpush2.msra.mxu0 0.0
    %3532 = vmatprep.subr.mxu0 0.0
    %3533 = vmatpush2.msra.mxu0 0.0
    %3534 = vmatprep.subr.mxu0 0.0
    %3535 = vmatpush2.msra.mxu0 0.0
    %3536 = vmatprep.subr.mxu0 0.0
    %3537 = vmatpush2.msra.mxu0 0.0
    %3538 = vmatprep.subr.mxu0 0.0
    %3539 = vmatpush2.msra.mxu0 0.0
    %3540 = vmatprep.subr.mxu0 0.0
    %3541 = vmatpush2.msra.mxu0 0.0
    %3542 = vmatprep.subr.mxu0 0.0
    %3543 = vmatpush2.msra.mxu0 0.0
    %3544 = vmatprep.subr.mxu0 0.0
    %3545 = vmatpush2.msra.mxu0 0.0
    %3546 = vmatprep.subr.mxu0 0.0
    %3547 = vmatpush2.msra.mxu0 0.0
    %3548 = vmatprep.subr.mxu0 0.0
    %3549 = vmatpush2.msra.mxu0 0.0
    %3550 = vmatprep.subr.mxu0 0.0
    %3551 = vmatpush2.msra.mxu0 0.0
    %3552 = vmatprep.subr.mxu0 0.0
    %3553 = vmatpush2.msra.mxu0 0.0
    %3554 = vmatprep.subr.mxu0 0.0
    %3555 = vmatpush2.msra.mxu0 0.0
    %3556 = vmatprep.subr.mxu0 0.0
    %3557 = vmatpush2.msra.mxu0 0.0
    %3558 = vmatprep.mubr.f32.mxu0 0.0
    %3559 = vmatmul.mubr.f32.gmra.mxu0 %v3421
    %v3560 = vpop.f32.mrf.mxu0
    %v3561 = vadd.f32 0.0, %v3560
    %v3562 = vpop.f32.mrf.mxu0
    %3563 = vdwg.mxu0
    %v3565 = vrot.slane %v3490, 4
    %v3567 = vadd.f32 %v2239, %v3565
    %v3568 = vxor.u32 %v3567, 2147483648
    %v3569 = vmul.f32 %v3568, 1.442695
    %v3570 = vpow.pop %v3569
    %v3571 = vadd.f32 %v3570, 1.0
    %v3572 = vrcp.pop %v3571
    %v3573 = vmul.f32 1.0, %v3572
    %v3575 = vrot.slane %v3492, 4
    %v3577 = vadd.f32 %v2241, %v3575
    %v3578 = vxor.u32 %v3577, 2147483648
    %v3579 = vmul.f32 %v3578, 1.442695
    %v3580 = vpow.pop %v3579
    %v3581 = vadd.f32 %v3580, 1.0
    %v3582 = vrcp.pop %v3581
    %v3583 = vmul.f32 1.0, %v3582
    %v3584 = vadd.f32 %v3561, %v2526
    %v3586 = vrot.slane %v3584, 4
    %v3588 = vmul.f32 %v3573, %v3586
    %v3589 = vadd.f32 %v2315, %v3588
    %v3590 = vtanh.pop %v3589
    %v3592 = vrot.slane %v3590, 2
    %v3594 = vsub.f32 %v3419, %v3592
    %v3596 = vrot.slane %v3594, 6
    %v3598 = vmul.f32 %v3583, %v3596
    %v3599 = vadd.f32 %v3590, %v3598
    %v3601 = vrot.slane %v3599, 4
    %3603 = vmatprep.subr.mxu0 %v2364
    %3604 = vmatpush1.msra.mxu0 %v2363
    %3605 = vmatprep.subr.mxu0 %v2361
    %3606 = vmatpush1.msra.mxu0 %v2360
    %3607 = vmatprep.subr.mxu0 %v2358
    %3608 = vmatpush1.msra.mxu0 %v2357
    %3609 = vmatprep.subr.mxu0 %v2355
    %3610 = vmatpush1.msra.mxu0 %v2354
    %3611 = vmatprep.subr.mxu0 %v2352
    %3612 = vmatpush1.msra.mxu0 %v2351
    %3613 = vmatprep.subr.mxu0 %v2349
    %3614 = vmatpush1.msra.mxu0 %v2348
    %3615 = vmatprep.subr.mxu0 %v2346
    %3616 = vmatpush1.msra.mxu0 %v2345
    %3617 = vmatprep.subr.mxu0 %v2343
    %3618 = vmatpush1.msra.mxu0 %v2342
    %3619 = vmatprep.subr.mxu0 %v2340
    %3620 = vmatpush1.msra.mxu0 %v2339
    %3621 = vmatprep.subr.mxu0 %v2337
    %3622 = vmatpush1.msra.mxu0 %v2336
    %3623 = vmatprep.subr.mxu0 %v2334
    %3624 = vmatpush1.msra.mxu0 %v2333
    %3625 = vmatprep.subr.mxu0 %v2331
    %3626 = vmatpush1.msra.mxu0 %v2330
    %3627 = vmatprep.subr.mxu0 %v2328
    %3628 = vmatpush1.msra.mxu0 %v2327
    %3629 = vmatprep.subr.mxu0 %v2325
    %3630 = vmatpush1.msra.mxu0 %v2324
    %3631 = vmatprep.subr.mxu0 %v2322
    %3632 = vmatpush1.msra.mxu0 %v2321
    %3633 = vmatprep.subr.mxu0 %v2319
    %3634 = vmatpush1.msra.mxu0 %v2318
    %3635 = vmatprep.subr.mxu0 0.0
    %3636 = vmatpush2.msra.mxu0 0.0
    %3637 = vmatprep.subr.mxu0 0.0
    %3638 = vmatpush2.msra.mxu0 0.0
    %3639 = vmatprep.subr.mxu0 0.0
    %3640 = vmatpush2.msra.mxu0 0.0
    %3641 = vmatprep.subr.mxu0 0.0
    %3642 = vmatpush2.msra.mxu0 0.0
    %3643 = vmatprep.subr.mxu0 0.0
    %3644 = vmatpush2.msra.mxu0 0.0
    %3645 = vmatprep.subr.mxu0 0.0
    %3646 = vmatpush2.msra.mxu0 0.0
    %3647 = vmatprep.subr.mxu0 0.0
    %3648 = vmatpush2.msra.mxu0 0.0
    %3649 = vmatprep.subr.mxu0 0.0
    %3650 = vmatpush2.msra.mxu0 0.0
    %3651 = vmatprep.subr.mxu0 0.0
    %3652 = vmatpush2.msra.mxu0 0.0
    %3653 = vmatprep.subr.mxu0 0.0
    %3654 = vmatpush2.msra.mxu0 0.0
    %3655 = vmatprep.subr.mxu0 0.0
    %3656 = vmatpush2.msra.mxu0 0.0
    %3657 = vmatprep.subr.mxu0 0.0
    %3658 = vmatpush2.msra.mxu0 0.0
    %3659 = vmatprep.subr.mxu0 0.0
    %3660 = vmatpush2.msra.mxu0 0.0
    %3661 = vmatprep.subr.mxu0 0.0
    %3662 = vmatpush2.msra.mxu0 0.0
    %3663 = vmatprep.subr.mxu0 0.0
    %3664 = vmatpush2.msra.mxu0 0.0
    %3665 = vmatprep.subr.mxu0 0.0
    %3666 = vmatpush2.msra.mxu0 0.0
    %3667 = vmatprep.mubr.f32.mxu0 0.0
    %3668 = vmatmul.mubr.f32.gmra.mxu0 %v3601
    %v3669 = vpop.f32.mrf.mxu0
    %v3670 = vadd.f32 0.0, %v3669
    %v3671 = vpop.f32.mrf.mxu0
    %v3672 = vadd.f32 0.0, %v3671
    %3673 = vdwg.mxu0
    %3674 = vmatprep.subr.mxu0 0.0
    %3675 = vmatpush1.msra.mxu0 %v2365
    %3676 = vmatprep.subr.mxu0 0.0
    %3677 = vmatpush1.msra.mxu0 %v2362
    %3678 = vmatprep.subr.mxu0 0.0
    %3679 = vmatpush1.msra.mxu0 %v2359
    %3680 = vmatprep.subr.mxu0 0.0
    %3681 = vmatpush1.msra.mxu0 %v2356
    %3682 = vmatprep.subr.mxu0 0.0
    %3683 = vmatpush1.msra.mxu0 %v2353
    %3684 = vmatprep.subr.mxu0 0.0
    %3685 = vmatpush1.msra.mxu0 %v2350
    %3686 = vmatprep.subr.mxu0 0.0
    %3687 = vmatpush1.msra.mxu0 %v2347
    %3688 = vmatprep.subr.mxu0 0.0
    %3689 = vmatpush1.msra.mxu0 %v2344
    %3690 = vmatprep.subr.mxu0 0.0
    %3691 = vmatpush1.msra.mxu0 %v2341
    %3692 = vmatprep.subr.mxu0 0.0
    %3693 = vmatpush1.msra.mxu0 %v2338
    %3694 = vmatprep.subr.mxu0 0.0
    %3695 = vmatpush1.msra.mxu0 %v2335
    %3696 = vmatprep.subr.mxu0 0.0
    %3697 = vmatpush1.msra.mxu0 %v2332
    %3698 = vmatprep.subr.mxu0 0.0
    %3699 = vmatpush1.msra.mxu0 %v2329
    %3700 = vmatprep.subr.mxu0 0.0
    %3701 = vmatpush1.msra.mxu0 %v2326
    %3702 = vmatprep.subr.mxu0 0.0
    %3703 = vmatpush1.msra.mxu0 %v2323
    %3704 = vmatprep.subr.mxu0 0.0
    %3705 = vmatpush1.msra.mxu0 %v2320
    %3706 = vmatprep.subr.mxu0 0.0
    %3707 = vmatpush2.msra.mxu0 0.0
    %3708 = vmatprep.subr.mxu0 0.0
    %3709 = vmatpush2.msra.mxu0 0.0
    %3710 = vmatprep.subr.mxu0 0.0
    %3711 = vmatpush2.msra.mxu0 0.0
    %3712 = vmatprep.subr.mxu0 0.0
    %3713 = vmatpush2.msra.mxu0 0.0
    %3714 = vmatprep.subr.mxu0 0.0
    %3715 = vmatpush2.msra.mxu0 0.0
    %3716 = vmatprep.subr.mxu0 0.0
    %3717 = vmatpush2.msra.mxu0 0.0
    %3718 = vmatprep.subr.mxu0 0.0
    %3719 = vmatpush2.msra.mxu0 0.0
    %3720 = vmatprep.subr.mxu0 0.0
    %3721 = vmatpush2.msra.mxu0 0.0
    %3722 = vmatprep.subr.mxu0 0.0
    %3723 = vmatpush2.msra.mxu0 0.0
    %3724 = vmatprep.subr.mxu0 0.0
    %3725 = vmatpush2.msra.mxu0 0.0
    %3726 = vmatprep.subr.mxu0 0.0
    %3727 = vmatpush2.msra.mxu0 0.0
    %3728 = vmatprep.subr.mxu0 0.0
    %3729 = vmatpush2.msra.mxu0 0.0
    %3730 = vmatprep.subr.mxu0 0.0
    %3731 = vmatpush2.msra.mxu0 0.0
    %3732 = vmatprep.subr.mxu0 0.0
    %3733 = vmatpush2.msra.mxu0 0.0
    %3734 = vmatprep.subr.mxu0 0.0
    %3735 = vmatpush2.msra.mxu0 0.0
    %3736 = vmatprep.subr.mxu0 0.0
    %3737 = vmatpush2.msra.mxu0 0.0
    %3738 = vmatprep.mubr.f32.mxu0 0.0
    %3739 = vmatmul.mubr.f32.gmra.mxu0 %v3601
    %v3740 = vpop.f32.mrf.mxu0
    %v3741 = vadd.f32 0.0, %v3740
    %v3742 = vpop.f32.mrf.mxu0
    %3743 = vdwg.mxu0
    %v3745 = vrot.slane %v3670, 2
    %v3747 = vadd.f32 %v2239, %v3745
    %v3748 = vxor.u32 %v3747, 2147483648
    %v3749 = vmul.f32 %v3748, 1.442695
    %v3750 = vpow.pop %v3749
    %v3751 = vadd.f32 %v3750, 1.0
    %v3752 = vrcp.pop %v3751
    %v3753 = vmul.f32 1.0, %v3752
    %v3755 = vrot.slane %v3672, 2
    %v3757 = vadd.f32 %v2241, %v3755
    %v3758 = vxor.u32 %v3757, 2147483648
    %v3759 = vmul.f32 %v3758, 1.442695
    %v3760 = vpow.pop %v3759
    %v3761 = vadd.f32 %v3760, 1.0
    %v3762 = vrcp.pop %v3761
    %v3763 = vmul.f32 1.0, %v3762
    %v3764 = vadd.f32 %v3741, %v2526
    %v3766 = vrot.slane %v3764, 2
    %v3768 = vmul.f32 %v3753, %v3766
    %v3769 = vadd.f32 %v2315, %v3768
    %v3770 = vtanh.pop %v3769
    %v3772 = vrot.slane %v3770, 2
    %v3774 = vsub.f32 %v3599, %v3772
    %v3776 = vrot.slane %v3774, 6
    %v3778 = vmul.f32 %v3763, %v3776
    %v3779 = vadd.f32 %v3770, %v3778
    %v3780 = vld [vmem:[#allocation12] sm:$0xff]
    %v3781 = vld [vmem:[#allocation12 + $0x8] sm:$0xff]
    %v3782 = vld [vmem:[#allocation12 + $0x10] sm:$0xff]
    %v3783 = vld [vmem:[#allocation12 + $0x18] sm:$0xff]
    %v3784 = vld [vmem:[#allocation12 + $0x20] sm:$0xff]
    %v3785 = vld [vmem:[#allocation12 + $0x28] sm:$0xff]
    %v3786 = vld [vmem:[#allocation12 + $0x30] sm:$0xff]
    %v3787 = vld [vmem:[#allocation12 + $0x38] sm:$0xff]
    %v3788 = vld [vmem:[#allocation12 + $0x40] sm:$0xff]
    %v3789 = vld [vmem:[#allocation12 + $0x48] sm:$0xff]
    %v3790 = vld [vmem:[#allocation12 + $0x50] sm:$0xff]
    %v3791 = vld [vmem:[#allocation12 + $0x58] sm:$0xff]
    %v3792 = vld [vmem:[#allocation12 + $0x60] sm:$0xff]
    %v3793 = vld [vmem:[#allocation12 + $0x68] sm:$0xff]
    %v3794 = vld [vmem:[#allocation12 + $0x70] sm:$0xff]
    %v3795 = vld [vmem:[#allocation12 + $0x78] sm:$0xff]
    %v3796 = vld [vmem:[%s10] sm:$0x1]
    %v3798 = vlaneseq
    %v3799 = vshrl.u32 %v3798, 7
    %v3800 = vsub.s32 0, %v3799
    %v3801 = vrot.slane %v3796, %v3800
    %v3804 = vrot.slane %v3779, 6
    %3806 = vmatprep.subr.mxu0 0.0
    %3807 = vmatpush1.msra.mxu0 %v3795
    %3808 = vmatprep.subr.mxu0 0.0
    %3809 = vmatpush1.msra.mxu0 %v3794
    %3810 = vmatprep.subr.mxu0 0.0
    %3811 = vmatpush1.msra.mxu0 %v3793
    %3812 = vmatprep.subr.mxu0 0.0
    %3813 = vmatpush1.msra.mxu0 %v3792
    %3814 = vmatprep.subr.mxu0 0.0
    %3815 = vmatpush1.msra.mxu0 %v3791
    %3816 = vmatprep.subr.mxu0 0.0
    %3817 = vmatpush1.msra.mxu0 %v3790
    %3818 = vmatprep.subr.mxu0 0.0
    %3819 = vmatpush1.msra.mxu0 %v3789
    %3820 = vmatprep.subr.mxu0 0.0
    %3821 = vmatpush1.msra.mxu0 %v3788
    %3822 = vmatprep.subr.mxu0 0.0
    %3823 = vmatpush1.msra.mxu0 %v3787
    %3824 = vmatprep.subr.mxu0 0.0
    %3825 = vmatpush1.msra.mxu0 %v3786
    %3826 = vmatprep.subr.mxu0 0.0
    %3827 = vmatpush1.msra.mxu0 %v3785
    %3828 = vmatprep.subr.mxu0 0.0
    %3829 = vmatpush1.msra.mxu0 %v3784
    %3830 = vmatprep.subr.mxu0 0.0
    %3831 = vmatpush1.msra.mxu0 %v3783
    %3832 = vmatprep.subr.mxu0 0.0
    %3833 = vmatpush1.msra.mxu0 %v3782
    %3834 = vmatprep.subr.mxu0 0.0
    %3835 = vmatpush1.msra.mxu0 %v3781
    %3836 = vmatprep.subr.mxu0 0.0
    %3837 = vmatpush1.msra.mxu0 %v3780
    %3838 = vmatprep.subr.mxu0 0.0
    %3839 = vmatpush2.msra.mxu0 0.0
    %3840 = vmatprep.subr.mxu0 0.0
    %3841 = vmatpush2.msra.mxu0 0.0
    %3842 = vmatprep.subr.mxu0 0.0
    %3843 = vmatpush2.msra.mxu0 0.0
    %3844 = vmatprep.subr.mxu0 0.0
    %3845 = vmatpush2.msra.mxu0 0.0
    %3846 = vmatprep.subr.mxu0 0.0
    %3847 = vmatpush2.msra.mxu0 0.0
    %3848 = vmatprep.subr.mxu0 0.0
    %3849 = vmatpush2.msra.mxu0 0.0
    %3850 = vmatprep.subr.mxu0 0.0
    %3851 = vmatpush2.msra.mxu0 0.0
    %3852 = vmatprep.subr.mxu0 0.0
    %3853 = vmatpush2.msra.mxu0 0.0
    %3854 = vmatprep.subr.mxu0 0.0
    %3855 = vmatpush2.msra.mxu0 0.0
    %3856 = vmatprep.subr.mxu0 0.0
    %3857 = vmatpush2.msra.mxu0 0.0
    %3858 = vmatprep.subr.mxu0 0.0
    %3859 = vmatpush2.msra.mxu0 0.0
    %3860 = vmatprep.subr.mxu0 0.0
    %3861 = vmatpush2.msra.mxu0 0.0
    %3862 = vmatprep.subr.mxu0 0.0
    %3863 = vmatpush2.msra.mxu0 0.0
    %3864 = vmatprep.subr.mxu0 0.0
    %3865 = vmatpush2.msra.mxu0 0.0
    %3866 = vmatprep.subr.mxu0 0.0
    %3867 = vmatpush2.msra.mxu0 0.0
    %3868 = vmatprep.subr.mxu0 0.0
    %3869 = vmatpush2.msra.mxu0 0.0
    %3870 = vmatprep.mubr.f32.mxu0 0.0
    %3871 = vmatmul.mubr.f32.gmra.mxu0 %v3804
    %v3872 = vpop.f32.mrf.mxu0
    %v3873 = vadd.f32 %v3801, %v3872
    %v3874 = vpop.f32.mrf.mxu0
    %3875 = vdwg.mxu0
    %v3876 = vxor.u32 %v3873, 2147483648
    %v3877 = vmul.f32 %v3876, 1.442695
    %v3878 = vpow.pop %v3877
    %v3879 = vadd.f32 %v3878, 1.0
    %v3880 = vrcp.pop %v3879
    %v3881 = vmul.f32 1.0, %v3880
    %3882 = vst [vmem:[#allocation14] sm:$0x3] %v3881
    // Predicated region
    $region70: #{tpu_custom_call.1} parent=1 // pred_check
      _
    $region71: #{tpu_custom_call.1} parent=1 // pred_check_branch
      %3884 = sbr.rel (0) target = $region73
    $region72: #{tpu_custom_call.1} parent=1 // pred_region
      %s3886 = ssub.s32 32, 32
      %3887 = vsyncadd [#allocation5], %s3886
      %s3889 = sshll.u32 [#allocation14], 4
      %s3890 = int_to_ptr.vmem [resolvable:$true] %s3889
      %3892 = dma.vmem_to_hbm [thread:$0]  %s3890, 32, %s11, [#allocation5]
    $region73: #{tpu_custom_call.1} parent=1 // pred_fallthru
      _
    // Predicated region
    $region74: #{tpu_custom_call.1} parent=1 // pred_check
      _
    $region75: #{tpu_custom_call.1} parent=1 // pred_check_branch
      %3894 = sbr.rel (0) target = $region77
    $region76: #{tpu_custom_call.1} parent=1 // pred_region
      %3895 = dma.done [#allocation5], 32
    $region77: #{tpu_custom_call.1} parent=1 // pred_fallthru
      _
    %3896 = vsyncpa [#allocation4], 1
    %3897 = vsyncpa [#allocation7], 1
    %3898 = vsyncpa [#allocation10], 1
    %3899 = vsyncpa [#allocation13], 1
    %3900 = vsyncpa [#allocation5], 1

</llo_original>
